<compile_context>
chip_gen: v7x
topology: tpu7x:2x2x1
jax: 0.10.0
libtpu: 0.0.40
codegen_flags: <defaults>
</compile_context>

<pallas_src>
import functools

import jax
import jax.numpy as jnp
from jax.experimental import pallas as pl
from jax.experimental.pallas import tpu as pltpu

# ---------------------------------------------------------------------------
# Fixed CNNCifar geometry (CIFAR: 3x32x32 input).
# ---------------------------------------------------------------------------
H = W = 32
QIMG = H * W                 # 1024 flattened spatial positions, q = h*32 + w
QIN = QIMG + 256             # staged-input lanes   (max conv1 tap shift = 132)
QC1 = QIMG + 128             # conv1-output lanes   (max pool1 shift     = 33)
QP1 = QIMG + 384             # pool1-output lanes   (max conv2 tap shift = 264)
KROW = 8                     # sublane rows per conv tap (8-aligned, zero padded)
K1P = 25 * KROW              # 200: padded K for conv1 (3 real + 5 zero rows per tap)
K2P = 25 * KROW              # 200: padded K for conv2 (6 real + 2 zero rows per tap)
C1, C2 = 6, 16
NFLAT = 16 * 5 * 5           # 400
NH1, NH2 = 120, 84
GSEL_K = 5 * 32              # 160: lane width of the compact pooled-gather block
NCPAD = 128                  # classes padded to a full lane group for a lane-dense store
NEG = -1e30                  # "minus infinity" bias for padded classes


def _cnn_cifar_kernel(xq_ref, w1_ref, b1_ref, w2_ref, b2_ref,
                      gsel_ref, msel_ref,
                      fc1w_ref, fc1b_ref, fc2w_ref, fc2b_ref, fc3w_ref, fc3b_ref,
                      out_ref,
                      xin_ref, xsh1_ref, c1q_ref, p1q_ref, xsh2_ref, c2q_ref, pcw_ref):
    # ---- stage input: rows 0..2 = RGB channels in q-space, rows 3..7 and lane tail = 0 ----
    xin_ref[...] = jnp.zeros((KROW, QIN), jnp.float32)
    xin_ref[0:3, 0:QIMG] = xq_ref[...]

    # ---- conv1 im2col: 25 taps, each an unmasked 8-row store at an 8-aligned offset ----
    for kh in range(5):
        for kw in range(5):
            t = kh * 5 + kw
            shift = kh * W + kw
            xsh1_ref[KROW * t:KROW * (t + 1), :] = xin_ref[:, shift:shift + QIMG]
    out1 = jnp.dot(w1_ref[...], xsh1_ref[...], preferred_element_type=jnp.float32)
    out1 = jnp.maximum(out1 + b1_ref[...], 0.0)                       # (6, 1024)

    # conv1 output to a zero-tailed q-space scratch (pool1 reads shifted slices of it)
    c1q_ref[...] = jnp.zeros((KROW, QC1), jnp.float32)
    c1q_ref[0:C1, 0:QIMG] = out1

    # ---- pool1 (2x2 / stride 2): max of 4 shifted slices; valid at q = 64h' + 2w' ----
    p1 = jnp.maximum(
        jnp.maximum(c1q_ref[0:C1, 0:QIMG], c1q_ref[0:C1, 1:1 + QIMG]),
        jnp.maximum(c1q_ref[0:C1, W:W + QIMG], c1q_ref[0:C1, W + 1:W + 1 + QIMG]))
    p1q_ref[...] = jnp.zeros((KROW, QP1), jnp.float32)                # rows 6..7 / tail stay 0
    p1q_ref[0:C1, 0:QIMG] = p1

    # ---- conv2 im2col on the stride-2 sparse pooled map: shifts kh*64 + kw*2 ----
    for kh in range(5):
        for kw in range(5):
            t = kh * 5 + kw
            shift = kh * 2 * W + kw * 2
            xsh2_ref[KROW * t:KROW * (t + 1), :] = p1q_ref[:, shift:shift + QIMG]
    out2 = jnp.dot(w2_ref[...], xsh2_ref[...], preferred_element_type=jnp.float32)
    out2 = jnp.maximum(out2 + b2_ref[...], 0.0)                       # (16, 1024)
    c2q_ref[...] = out2

    # ---- pool2 fused with the 5x5 gather into a small lane-dense block ----
    # Conv2 row 2p lives at lanes 128p + 2j (row 2p+1 at +64).  A vertical then
    # horizontal max over contiguous windows puts pool2[c, p, r] at lane 4r of hh,
    # stored at lane 32p + 4r of the compact block; the stride-4 columns are then
    # selected by the constant gsel matmul (no strided loads, no full-map pool2).
    pcw_ref[...] = jnp.zeros((C2, GSEL_K), jnp.float32)
    for p in range(5):
        base = 128 * p
        v = jnp.maximum(c2q_ref[:, base:base + 20],
                        c2q_ref[:, base + 64:base + 84])              # (16, 20) vertical max
        hh = jnp.maximum(v[:, 0:18], v[:, 2:20])                      # (16, 18) horizontal max
        pcw_ref[:, 32 * p:32 * p + 18] = hh

    # ---- transpose-free flatten: R[c, f] = pcw[c, 32*p(f) + 4*r(f)] = pool2[c, p, r];
    #      flat[f] = R[c(f), f] via the 0/1 channel mask + sublane reduce.
    rmat = jnp.dot(pcw_ref[...], gsel_ref[...], preferred_element_type=jnp.float32)  # (16, 400)
    flat = jnp.sum(rmat * msel_ref[...], axis=0, keepdims=True)                       # (1, 400)

    # ---- lane-dense FC head (row vectors) + fused, numerically stable log_softmax ----
    h1 = jnp.maximum(
        jnp.dot(flat, fc1w_ref[...], preferred_element_type=jnp.float32) + fc1b_ref[...], 0.0)
    h2 = jnp.maximum(
        jnp.dot(h1, fc2w_ref[...], preferred_element_type=jnp.float32) + fc2b_ref[...], 0.0)
    logits = jnp.dot(h2, fc3w_ref[...], preferred_element_type=jnp.float32) + fc3b_ref[...]
    m = jnp.max(logits, axis=1, keepdims=True)          # padded classes carry a -1e30 bias
    s = logits - m
    lse = jnp.log(jnp.sum(jnp.exp(s), axis=1, keepdims=True))
    out_ref[...] = (s - lse).astype(out_ref.dtype)                    # (1, 128) lane-dense


# ---------------------------------------------------------------------------
# Parameters (PyTorch layout) and one-time kernel re-layout
# ---------------------------------------------------------------------------

def init_params(key, num_classes):
    """Parameters in the PyTorch CNNCifar layout (Conv2d OIHW, Linear (out, in))."""
    ks = jax.random.split(key, 10)

    def w(k, shape, scale=0.05):
        return (scale * jax.random.normal(k, shape)).astype(jnp.float32)

    return {
        "conv1_w": w(ks[0], (C1, 3, 5, 5)),      "conv1_b": w(ks[1], (C1,)),
        "conv2_w": w(ks[2], (C2, C1, 5, 5)),     "conv2_b": w(ks[3], (C2,)),
        "fc1_w":   w(ks[4], (NH1, NFLAT)),       "fc1_b":   w(ks[5], (NH1,)),
        "fc2_w":   w(ks[6], (NH2, NH1)),         "fc2_b":   w(ks[7], (NH2,)),
        "fc3_w":   w(ks[8], (num_classes, NH2)), "fc3_b":   w(ks[9], (num_classes,)),
    }


def prepare_params(params):
    """One-time re-layout of PyTorch-style weights into the fused-kernel layout."""
    num_classes = params["fc3_w"].shape[0]
    assert num_classes <= NCPAD

    # conv weights: OIHW -> (Cout, (kh, kw, cin padded to 8)), matching the 8-row im2col taps
    w1 = jnp.transpose(params["conv1_w"], (0, 2, 3, 1))                          # (6, 5, 5, 3)
    w1 = jnp.pad(w1, ((0, 0), (0, 0), (0, 0), (0, KROW - 3))).reshape(C1, K1P)   # (6, 200)
    w2 = jnp.transpose(params["conv2_w"], (0, 2, 3, 1))                          # (16, 5, 5, 6)
    w2 = jnp.pad(w2, ((0, 0), (0, 0), (0, 0), (0, KROW - C1))).reshape(C2, K2P)  # (16, 200)

    # constant 0/1 matrices turning the compact pooled block into the PyTorch-order
    # flattened feature row: feature f = 25c + 5p + r reads lane 32p + 4r, channel row c.
    f = jnp.arange(NFLAT)
    pr = f % 25
    src_lane = 32 * (pr // 5) + 4 * (pr % 5)
    gsel = (jnp.arange(GSEL_K)[:, None] == src_lane[None, :]).astype(jnp.float32)   # (160, 400)
    msel = (jnp.arange(C2)[:, None] == (f // 25)[None, :]).astype(jnp.float32)      # (16, 400)

    return {
        "w1": w1, "b1": params["conv1_b"].reshape(C1, 1),
        "w2": w2, "b2": params["conv2_b"].reshape(C2, 1),
        "gsel": gsel, "msel": msel,
        # fc weights transposed for the row-vector head; fc3 padded to 128 lane-dense
        # classes with a large negative bias so padded lanes vanish in log_softmax.
        "fc1_w": params["fc1_w"].T, "fc1_b": params["fc1_b"].reshape(1, NH1),
        "fc2_w": params["fc2_w"].T, "fc2_b": params["fc2_b"].reshape(1, NH2),
        "fc3_w": jnp.pad(params["fc3_w"].T, ((0, 0), (0, NCPAD - num_classes))),
        "fc3_b": jnp.pad(params["fc3_b"].reshape(1, num_classes),
                         ((0, 0), (0, NCPAD - num_classes)), constant_values=NEG),
    }


# ---------------------------------------------------------------------------
# Fused forward pass (single pallas_call, gridded over batch)
# ---------------------------------------------------------------------------

@functools.partial(jax.jit, static_argnames=("num_classes",))
def cnn_cifar_forward(kparams, x_nchw, *, num_classes):
    """x_nchw: (B, 3, 32, 32) float32 -> (B, num_classes) log-probabilities."""
    B = x_nchw.shape[0]
    # q-space layout xq[b, c, 32h + w]: a free reshape; no wrapper-side padding
    # (the in-kernel staging copy zero-pads the lane tail).
    xq = x_nchw.astype(jnp.float32).reshape(B, 3, QIMG)

    def wspec(shape):        # whole-array weight block, DMA'd once (constant index map)
        return pl.BlockSpec(shape, lambda b: (0, 0))

    out = pl.pallas_call(
        _cnn_cifar_kernel,
        out_shape=jax.ShapeDtypeStruct((B, 1, NCPAD), jnp.float32),
        grid_spec=pltpu.PrefetchScalarGridSpec(
            num_scalar_prefetch=0,
            grid=(B,),
            in_specs=[
                pl.BlockSpec((None, 3, QIMG), lambda b: (b, 0, 0)),   # per-image input row
                wspec((C1, K1P)), wspec((C1, 1)),
                wspec((C2, K2P)), wspec((C2, 1)),
                wspec((GSEL_K, NFLAT)), wspec((C2, NFLAT)),
                wspec((NFLAT, NH1)), wspec((1, NH1)),
                wspec((NH1, NH2)), wspec((1, NH2)),
                wspec((NH2, NCPAD)), wspec((1, NCPAD)),
            ],
            out_specs=pl.BlockSpec((None, 1, NCPAD), lambda b: (b, 0, 0)),
            scratch_shapes=[
                pltpu.VMEM((KROW, QIN), jnp.float32),     # staged, zero-padded input
                pltpu.VMEM((K1P, QIMG), jnp.float32),     # conv1 im2col (8-aligned taps)
                pltpu.VMEM((KROW, QC1), jnp.float32),     # conv1 output (padded q-space)
                pltpu.VMEM((KROW, QP1), jnp.float32),     # pool1 output (padded q-space)
                pltpu.VMEM((K2P, QIMG), jnp.float32),     # conv2 im2col (8-aligned taps)
                pltpu.VMEM((C2, QIMG), jnp.float32),      # conv2 output
                pltpu.VMEM((C2, GSEL_K), jnp.float32),    # pool2 / gather compact block
            ],
        ),
        compiler_params=pltpu.CompilerParams(
            dimension_semantics=("parallel",),            # batch shards across v7x's 2 TCs
            vmem_limit_bytes=32 * 1024 * 1024,
        ),
    )(xq, kparams["w1"], kparams["b1"], kparams["w2"], kparams["b2"],
      kparams["gsel"], kparams["msel"],
      kparams["fc1_w"], kparams["fc1_b"], kparams["fc2_w"], kparams["fc2_b"],
      kparams["fc3_w"], kparams["fc3_b"])

    return out.reshape(B, NCPAD)[:, :num_classes]


# ---------------------------------------------------------------------------
# Pure-JAX reference (matches the PyTorch module) for a correctness check
# ---------------------------------------------------------------------------

def _reference_forward(params, x):
    prec = jax.lax.Precision.HIGHEST

    def conv(x, w, b):
        y = jax.lax.conv_general_dilated(
            x, w, window_strides=(1, 1), padding="VALID",
            dimension_numbers=("NCHW", "OIHW", "NCHW"), precision=prec)
        return jax.nn.relu(y + b[None, :, None, None])

    def pool(x):
        return jax.lax.reduce_window(x, -jnp.inf, jax.lax.max,
                                     (1, 1, 2, 2), (1, 1, 2, 2), "VALID")

    x = pool(conv(x, params["conv1_w"], params["conv1_b"]))
    x = pool(conv(x, params["conv2_w"], params["conv2_b"]))
    x = x.reshape(x.shape[0], -1)
    x = jax.nn.relu(jnp.dot(x, params["fc1_w"].T, precision=prec) + params["fc1_b"])
    x = jax.nn.relu(jnp.dot(x, params["fc2_w"].T, precision=prec) + params["fc2_b"])
    x = jnp.dot(x, params["fc3_w"].T, precision=prec) + params["fc3_b"]
    return jax.nn.log_softmax(x, axis=-1)


if __name__ == "__main__":
    num_classes = 10
    key = jax.random.PRNGKey(0)
    k_param, k_x = jax.random.split(key)

    params = init_params(k_param, num_classes)
    kparams = prepare_params(params)                  # one-time weight re-layout
    # CIFAR-shaped input (32x32 spatial is required by the 16*5*5 flatten).
    x = jax.random.normal(k_x, (2, 3, 32, 32), dtype=jnp.float32)

    out = jax.block_until_ready(cnn_cifar_forward(kparams, x, num_classes=num_classes))

    assert out.shape == (2, num_classes)
    assert bool(jnp.all(jnp.isfinite(out)))

    ref = _reference_forward(params, x)
    max_err = float(jnp.max(jnp.abs(out - ref)))
    assert max_err < 2e-2, f"kernel/reference mismatch: max abs err = {max_err}"

    print("KERNEL_OK")
</pallas_src>

<mosaic_0001>
module attributes {stable_mosaic.version = 11 : i64} {
  func.func @_cnn_cifar_kernel(%arg0: i32, %arg1: memref<1x3x1024xf32, #tpu.memory_space<vmem>>, %arg2: memref<6x200xf32, #tpu.memory_space<vmem>>, %arg3: memref<6x1xf32, #tpu.memory_space<vmem>>, %arg4: memref<16x200xf32, #tpu.memory_space<vmem>>, %arg5: memref<16x1xf32, #tpu.memory_space<vmem>>, %arg6: memref<160x400xf32, #tpu.memory_space<vmem>>, %arg7: memref<16x400xf32, #tpu.memory_space<vmem>>, %arg8: memref<400x120xf32, #tpu.memory_space<vmem>>, %arg9: memref<1x120xf32, #tpu.memory_space<vmem>>, %arg10: memref<120x84xf32, #tpu.memory_space<vmem>>, %arg11: memref<1x84xf32, #tpu.memory_space<vmem>>, %arg12: memref<84x128xf32, #tpu.memory_space<vmem>>, %arg13: memref<1x128xf32, #tpu.memory_space<vmem>>, %arg14: memref<1x1x128xf32, #tpu.memory_space<vmem>>, %arg15: memref<8x1280xf32, #tpu.memory_space<vmem>>, %arg16: memref<200x1024xf32, #tpu.memory_space<vmem>>, %arg17: memref<8x1152xf32, #tpu.memory_space<vmem>>, %arg18: memref<8x1408xf32, #tpu.memory_space<vmem>>, %arg19: memref<200x1024xf32, #tpu.memory_space<vmem>>, %arg20: memref<16x1024xf32, #tpu.memory_space<vmem>>, %arg21: memref<16x160xf32, #tpu.memory_space<vmem>>) attributes {dimension_semantics = [#tpu.dimension_semantics<parallel>], iteration_bounds = array<i64: 2>, scalar_prefetch = 0 : i64, scratch_operands = 7 : i64, tpu.core_type = #tpu.core_type<tc>, window_params = [{transform_indices = @transform_0, window_bounds = array<i64: 1, 3, 1024>}, {pipeline_mode = #tpu.pipeline_mode<synchronous>, transform_indices = @transform_1, window_bounds = array<i64: 6, 200>}, {pipeline_mode = #tpu.pipeline_mode<synchronous>, transform_indices = @transform_2, window_bounds = array<i64: 6, 1>}, {pipeline_mode = #tpu.pipeline_mode<synchronous>, transform_indices = @transform_3, window_bounds = array<i64: 16, 200>}, {pipeline_mode = #tpu.pipeline_mode<synchronous>, transform_indices = @transform_4, window_bounds = array<i64: 16, 1>}, {pipeline_mode = #tpu.pipeline_mode<synchronous>, transform_indices = @transform_5, window_bounds = array<i64: 160, 400>}, {pipeline_mode = #tpu.pipeline_mode<synchronous>, transform_indices = @transform_6, window_bounds = array<i64: 16, 400>}, {pipeline_mode = #tpu.pipeline_mode<synchronous>, transform_indices = @transform_7, window_bounds = array<i64: 400, 120>}, {pipeline_mode = #tpu.pipeline_mode<synchronous>, transform_indices = @transform_8, window_bounds = array<i64: 1, 120>}, {pipeline_mode = #tpu.pipeline_mode<synchronous>, transform_indices = @transform_9, window_bounds = array<i64: 120, 84>}, {pipeline_mode = #tpu.pipeline_mode<synchronous>, transform_indices = @transform_10, window_bounds = array<i64: 1, 84>}, {pipeline_mode = #tpu.pipeline_mode<synchronous>, transform_indices = @transform_11, window_bounds = array<i64: 84, 128>}, {pipeline_mode = #tpu.pipeline_mode<synchronous>, transform_indices = @transform_12, window_bounds = array<i64: 1, 128>}, {transform_indices = @transform_13, window_bounds = array<i64: 1, 1, 128>}]} {
    %cst = arith.constant 0.000000e+00 : f32
    %0 = vector.broadcast %cst : f32 to vector<8x1280xf32>
    %c0 = arith.constant 0 : index
    %c0_0 = arith.constant 0 : index
    %1 = vector.load %arg15[%c0, %c0_0] : memref<8x1280xf32, #tpu.memory_space<vmem>>, vector<8x1280xf32>
    tpu.vector_store %arg15[%c0, %c0_0], %0 {strides = array<i32>} : memref<8x1280xf32, #tpu.memory_space<vmem>>, vector<8x1280xf32>,
    %c0_1 = arith.constant 0 : index
    %c0_2 = arith.constant 0 : index
    %c0_3 = arith.constant 0 : index
    %2 = vector.load %arg1[%c0_1, %c0_2, %c0_3] : memref<1x3x1024xf32, #tpu.memory_space<vmem>>, vector<1x3x1024xf32>
    %3 = vector.shape_cast %2 : vector<1x3x1024xf32> to vector<3x1024xf32>
    %c0_4 = arith.constant 0 : index
    %c0_5 = arith.constant 0 : index
    %4 = vector.load %arg15[%c0_4, %c0_5] : memref<8x1280xf32, #tpu.memory_space<vmem>>, vector<3x1024xf32>
    tpu.vector_store %arg15[%c0_4, %c0_5], %3 {strides = array<i32>} : memref<8x1280xf32, #tpu.memory_space<vmem>>, vector<3x1024xf32>,
    %c0_6 = arith.constant 0 : index
    %c0_7 = arith.constant 0 : index
    %5 = vector.load %arg15[%c0_6, %c0_7] : memref<8x1280xf32, #tpu.memory_space<vmem>>, vector<8x1024xf32>
    %c0_8 = arith.constant 0 : index
    %c0_9 = arith.constant 0 : index
    %6 = vector.load %arg16[%c0_8, %c0_9] : memref<200x1024xf32, #tpu.memory_space<vmem>>, vector<8x1024xf32>
    tpu.vector_store %arg16[%c0_8, %c0_9], %5 {strides = array<i32>} : memref<200x1024xf32, #tpu.memory_space<vmem>>, vector<8x1024xf32>,
    %c0_10 = arith.constant 0 : index
    %c1 = arith.constant 1 : index
    %7 = vector.load %arg15[%c0_10, %c1] : memref<8x1280xf32, #tpu.memory_space<vmem>>, vector<8x1024xf32>
    %c8 = arith.constant 8 : index
    %c0_11 = arith.constant 0 : index
    %8 = vector.load %arg16[%c8, %c0_11] : memref<200x1024xf32, #tpu.memory_space<vmem>>, vector<8x1024xf32>
    tpu.vector_store %arg16[%c8, %c0_11], %7 {strides = array<i32>} : memref<200x1024xf32, #tpu.memory_space<vmem>>, vector<8x1024xf32>,
    %c0_12 = arith.constant 0 : index
    %c2 = arith.constant 2 : index
    %9 = vector.load %arg15[%c0_12, %c2] : memref<8x1280xf32, #tpu.memory_space<vmem>>, vector<8x1024xf32>
    %c16 = arith.constant 16 : index
    %c0_13 = arith.constant 0 : index
    %10 = vector.load %arg16[%c16, %c0_13] : memref<200x1024xf32, #tpu.memory_space<vmem>>, vector<8x1024xf32>
    tpu.vector_store %arg16[%c16, %c0_13], %9 {strides = array<i32>} : memref<200x1024xf32, #tpu.memory_space<vmem>>, vector<8x1024xf32>,
    %c0_14 = arith.constant 0 : index
    %c3 = arith.constant 3 : index
    %11 = vector.load %arg15[%c0_14, %c3] : memref<8x1280xf32, #tpu.memory_space<vmem>>, vector<8x1024xf32>
    %c24 = arith.constant 24 : index
    %c0_15 = arith.constant 0 : index
    %12 = vector.load %arg16[%c24, %c0_15] : memref<200x1024xf32, #tpu.memory_space<vmem>>, vector<8x1024xf32>
    tpu.vector_store %arg16[%c24, %c0_15], %11 {strides = array<i32>} : memref<200x1024xf32, #tpu.memory_space<vmem>>, vector<8x1024xf32>,
    %c0_16 = arith.constant 0 : index
    %c4 = arith.constant 4 : index
    %13 = vector.load %arg15[%c0_16, %c4] : memref<8x1280xf32, #tpu.memory_space<vmem>>, vector<8x1024xf32>
    %c32 = arith.constant 32 : index
    %c0_17 = arith.constant 0 : index
    %14 = vector.load %arg16[%c32, %c0_17] : memref<200x1024xf32, #tpu.memory_space<vmem>>, vector<8x1024xf32>
    tpu.vector_store %arg16[%c32, %c0_17], %13 {strides = array<i32>} : memref<200x1024xf32, #tpu.memory_space<vmem>>, vector<8x1024xf32>,
    %c0_18 = arith.constant 0 : index
    %c32_19 = arith.constant 32 : index
    %15 = vector.load %arg15[%c0_18, %c32_19] : memref<8x1280xf32, #tpu.memory_space<vmem>>, vector<8x1024xf32>
    %c40 = arith.constant 40 : index
    %c0_20 = arith.constant 0 : index
    %16 = vector.load %arg16[%c40, %c0_20] : memref<200x1024xf32, #tpu.memory_space<vmem>>, vector<8x1024xf32>
    tpu.vector_store %arg16[%c40, %c0_20], %15 {strides = array<i32>} : memref<200x1024xf32, #tpu.memory_space<vmem>>, vector<8x1024xf32>,
    %c0_21 = arith.constant 0 : index
    %c33 = arith.constant 33 : index
    %17 = vector.load %arg15[%c0_21, %c33] : memref<8x1280xf32, #tpu.memory_space<vmem>>, vector<8x1024xf32>
    %c48 = arith.constant 48 : index
    %c0_22 = arith.constant 0 : index
    %18 = vector.load %arg16[%c48, %c0_22] : memref<200x1024xf32, #tpu.memory_space<vmem>>, vector<8x1024xf32>
    tpu.vector_store %arg16[%c48, %c0_22], %17 {strides = array<i32>} : memref<200x1024xf32, #tpu.memory_space<vmem>>, vector<8x1024xf32>,
    %c0_23 = arith.constant 0 : index
    %c34 = arith.constant 34 : index
    %19 = vector.load %arg15[%c0_23, %c34] : memref<8x1280xf32, #tpu.memory_space<vmem>>, vector<8x1024xf32>
    %c56 = arith.constant 56 : index
    %c0_24 = arith.constant 0 : index
    %20 = vector.load %arg16[%c56, %c0_24] : memref<200x1024xf32, #tpu.memory_space<vmem>>, vector<8x1024xf32>
    tpu.vector_store %arg16[%c56, %c0_24], %19 {strides = array<i32>} : memref<200x1024xf32, #tpu.memory_space<vmem>>, vector<8x1024xf32>,
    %c0_25 = arith.constant 0 : index
    %c35 = arith.constant 35 : index
    %21 = vector.load %arg15[%c0_25, %c35] : memref<8x1280xf32, #tpu.memory_space<vmem>>, vector<8x1024xf32>
    %c64 = arith.constant 64 : index
    %c0_26 = arith.constant 0 : index
    %22 = vector.load %arg16[%c64, %c0_26] : memref<200x1024xf32, #tpu.memory_space<vmem>>, vector<8x1024xf32>
    tpu.vector_store %arg16[%c64, %c0_26], %21 {strides = array<i32>} : memref<200x1024xf32, #tpu.memory_space<vmem>>, vector<8x1024xf32>,
    %c0_27 = arith.constant 0 : index
    %c36 = arith.constant 36 : index
    %23 = vector.load %arg15[%c0_27, %c36] : memref<8x1280xf32, #tpu.memory_space<vmem>>, vector<8x1024xf32>
    %c72 = arith.constant 72 : index
    %c0_28 = arith.constant 0 : index
    %24 = vector.load %arg16[%c72, %c0_28] : memref<200x1024xf32, #tpu.memory_space<vmem>>, vector<8x1024xf32>
    tpu.vector_store %arg16[%c72, %c0_28], %23 {strides = array<i32>} : memref<200x1024xf32, #tpu.memory_space<vmem>>, vector<8x1024xf32>,
    %c0_29 = arith.constant 0 : index
    %c64_30 = arith.constant 64 : index
    %25 = vector.load %arg15[%c0_29, %c64_30] : memref<8x1280xf32, #tpu.memory_space<vmem>>, vector<8x1024xf32>
    %c80 = arith.constant 80 : index
    %c0_31 = arith.constant 0 : index
    %26 = vector.load %arg16[%c80, %c0_31] : memref<200x1024xf32, #tpu.memory_space<vmem>>, vector<8x1024xf32>
    tpu.vector_store %arg16[%c80, %c0_31], %25 {strides = array<i32>} : memref<200x1024xf32, #tpu.memory_space<vmem>>, vector<8x1024xf32>,
    %c0_32 = arith.constant 0 : index
    %c65 = arith.constant 65 : index
    %27 = vector.load %arg15[%c0_32, %c65] : memref<8x1280xf32, #tpu.memory_space<vmem>>, vector<8x1024xf32>
    %c88 = arith.constant 88 : index
    %c0_33 = arith.constant 0 : index
    %28 = vector.load %arg16[%c88, %c0_33] : memref<200x1024xf32, #tpu.memory_space<vmem>>, vector<8x1024xf32>
    tpu.vector_store %arg16[%c88, %c0_33], %27 {strides = array<i32>} : memref<200x1024xf32, #tpu.memory_space<vmem>>, vector<8x1024xf32>,
    %c0_34 = arith.constant 0 : index
    %c66 = arith.constant 66 : index
    %29 = vector.load %arg15[%c0_34, %c66] : memref<8x1280xf32, #tpu.memory_space<vmem>>, vector<8x1024xf32>
    %c96 = arith.constant 96 : index
    %c0_35 = arith.constant 0 : index
    %30 = vector.load %arg16[%c96, %c0_35] : memref<200x1024xf32, #tpu.memory_space<vmem>>, vector<8x1024xf32>
    tpu.vector_store %arg16[%c96, %c0_35], %29 {strides = array<i32>} : memref<200x1024xf32, #tpu.memory_space<vmem>>, vector<8x1024xf32>,
    %c0_36 = arith.constant 0 : index
    %c67 = arith.constant 67 : index
    %31 = vector.load %arg15[%c0_36, %c67] : memref<8x1280xf32, #tpu.memory_space<vmem>>, vector<8x1024xf32>
    %c104 = arith.constant 104 : index
    %c0_37 = arith.constant 0 : index
    %32 = vector.load %arg16[%c104, %c0_37] : memref<200x1024xf32, #tpu.memory_space<vmem>>, vector<8x1024xf32>
    tpu.vector_store %arg16[%c104, %c0_37], %31 {strides = array<i32>} : memref<200x1024xf32, #tpu.memory_space<vmem>>, vector<8x1024xf32>,
    %c0_38 = arith.constant 0 : index
    %c68 = arith.constant 68 : index
    %33 = vector.load %arg15[%c0_38, %c68] : memref<8x1280xf32, #tpu.memory_space<vmem>>, vector<8x1024xf32>
    %c112 = arith.constant 112 : index
    %c0_39 = arith.constant 0 : index
    %34 = vector.load %arg16[%c112, %c0_39] : memref<200x1024xf32, #tpu.memory_space<vmem>>, vector<8x1024xf32>
    tpu.vector_store %arg16[%c112, %c0_39], %33 {strides = array<i32>} : memref<200x1024xf32, #tpu.memory_space<vmem>>, vector<8x1024xf32>,
    %c0_40 = arith.constant 0 : index
    %c96_41 = arith.constant 96 : index
    %35 = vector.load %arg15[%c0_40, %c96_41] : memref<8x1280xf32, #tpu.memory_space<vmem>>, vector<8x1024xf32>
    %c120 = arith.constant 120 : index
    %c0_42 = arith.constant 0 : index
    %36 = vector.load %arg16[%c120, %c0_42] : memref<200x1024xf32, #tpu.memory_space<vmem>>, vector<8x1024xf32>
    tpu.vector_store %arg16[%c120, %c0_42], %35 {strides = array<i32>} : memref<200x1024xf32, #tpu.memory_space<vmem>>, vector<8x1024xf32>,
    %c0_43 = arith.constant 0 : index
    %c97 = arith.constant 97 : index
    %37 = vector.load %arg15[%c0_43, %c97] : memref<8x1280xf32, #tpu.memory_space<vmem>>, vector<8x1024xf32>
    %c128 = arith.constant 128 : index
    %c0_44 = arith.constant 0 : index
    %38 = vector.load %arg16[%c128, %c0_44] : memref<200x1024xf32, #tpu.memory_space<vmem>>, vector<8x1024xf32>
    tpu.vector_store %arg16[%c128, %c0_44], %37 {strides = array<i32>} : memref<200x1024xf32, #tpu.memory_space<vmem>>, vector<8x1024xf32>,
    %c0_45 = arith.constant 0 : index
    %c98 = arith.constant 98 : index
    %39 = vector.load %arg15[%c0_45, %c98] : memref<8x1280xf32, #tpu.memory_space<vmem>>, vector<8x1024xf32>
    %c136 = arith.constant 136 : index
    %c0_46 = arith.constant 0 : index
    %40 = vector.load %arg16[%c136, %c0_46] : memref<200x1024xf32, #tpu.memory_space<vmem>>, vector<8x1024xf32>
    tpu.vector_store %arg16[%c136, %c0_46], %39 {strides = array<i32>} : memref<200x1024xf32, #tpu.memory_space<vmem>>, vector<8x1024xf32>,
    %c0_47 = arith.constant 0 : index
    %c99 = arith.constant 99 : index
    %41 = vector.load %arg15[%c0_47, %c99] : memref<8x1280xf32, #tpu.memory_space<vmem>>, vector<8x1024xf32>
    %c144 = arith.constant 144 : index
    %c0_48 = arith.constant 0 : index
    %42 = vector.load %arg16[%c144, %c0_48] : memref<200x1024xf32, #tpu.memory_space<vmem>>, vector<8x1024xf32>
    tpu.vector_store %arg16[%c144, %c0_48], %41 {strides = array<i32>} : memref<200x1024xf32, #tpu.memory_space<vmem>>, vector<8x1024xf32>,
    %c0_49 = arith.constant 0 : index
    %c100 = arith.constant 100 : index
    %43 = vector.load %arg15[%c0_49, %c100] : memref<8x1280xf32, #tpu.memory_space<vmem>>, vector<8x1024xf32>
    %c152 = arith.constant 152 : index
    %c0_50 = arith.constant 0 : index
    %44 = vector.load %arg16[%c152, %c0_50] : memref<200x1024xf32, #tpu.memory_space<vmem>>, vector<8x1024xf32>
    tpu.vector_store %arg16[%c152, %c0_50], %43 {strides = array<i32>} : memref<200x1024xf32, #tpu.memory_space<vmem>>, vector<8x1024xf32>,
    %c0_51 = arith.constant 0 : index
    %c128_52 = arith.constant 128 : index
    %45 = vector.load %arg15[%c0_51, %c128_52] : memref<8x1280xf32, #tpu.memory_space<vmem>>, vector<8x1024xf32>
    %c160 = arith.constant 160 : index
    %c0_53 = arith.constant 0 : index
    %46 = vector.load %arg16[%c160, %c0_53] : memref<200x1024xf32, #tpu.memory_space<vmem>>, vector<8x1024xf32>
    tpu.vector_store %arg16[%c160, %c0_53], %45 {strides = array<i32>} : memref<200x1024xf32, #tpu.memory_space<vmem>>, vector<8x1024xf32>,
    %c0_54 = arith.constant 0 : index
    %c129 = arith.constant 129 : index
    %47 = vector.load %arg15[%c0_54, %c129] : memref<8x1280xf32, #tpu.memory_space<vmem>>, vector<8x1024xf32>
    %c168 = arith.constant 168 : index
    %c0_55 = arith.constant 0 : index
    %48 = vector.load %arg16[%c168, %c0_55] : memref<200x1024xf32, #tpu.memory_space<vmem>>, vector<8x1024xf32>
    tpu.vector_store %arg16[%c168, %c0_55], %47 {strides = array<i32>} : memref<200x1024xf32, #tpu.memory_space<vmem>>, vector<8x1024xf32>,
    %c0_56 = arith.constant 0 : index
    %c130 = arith.constant 130 : index
    %49 = vector.load %arg15[%c0_56, %c130] : memref<8x1280xf32, #tpu.memory_space<vmem>>, vector<8x1024xf32>
    %c176 = arith.constant 176 : index
    %c0_57 = arith.constant 0 : index
    %50 = vector.load %arg16[%c176, %c0_57] : memref<200x1024xf32, #tpu.memory_space<vmem>>, vector<8x1024xf32>
    tpu.vector_store %arg16[%c176, %c0_57], %49 {strides = array<i32>} : memref<200x1024xf32, #tpu.memory_space<vmem>>, vector<8x1024xf32>,
    %c0_58 = arith.constant 0 : index
    %c131 = arith.constant 131 : index
    %51 = vector.load %arg15[%c0_58, %c131] : memref<8x1280xf32, #tpu.memory_space<vmem>>, vector<8x1024xf32>
    %c184 = arith.constant 184 : index
    %c0_59 = arith.constant 0 : index
    %52 = vector.load %arg16[%c184, %c0_59] : memref<200x1024xf32, #tpu.memory_space<vmem>>, vector<8x1024xf32>
    tpu.vector_store %arg16[%c184, %c0_59], %51 {strides = array<i32>} : memref<200x1024xf32, #tpu.memory_space<vmem>>, vector<8x1024xf32>,
    %c0_60 = arith.constant 0 : index
    %c132 = arith.constant 132 : index
    %53 = vector.load %arg15[%c0_60, %c132] : memref<8x1280xf32, #tpu.memory_space<vmem>>, vector<8x1024xf32>
    %c192 = arith.constant 192 : index
    %c0_61 = arith.constant 0 : index
    %54 = vector.load %arg16[%c192, %c0_61] : memref<200x1024xf32, #tpu.memory_space<vmem>>, vector<8x1024xf32>
    tpu.vector_store %arg16[%c192, %c0_61], %53 {strides = array<i32>} : memref<200x1024xf32, #tpu.memory_space<vmem>>, vector<8x1024xf32>,
    %c0_62 = arith.constant 0 : index
    %c0_63 = arith.constant 0 : index
    %55 = vector.load %arg2[%c0_62, %c0_63] : memref<6x200xf32, #tpu.memory_space<vmem>>, vector<6x200xf32>
    %c0_64 = arith.constant 0 : index
    %c0_65 = arith.constant 0 : index
    %56 = vector.load %arg16[%c0_64, %c0_65] : memref<200x1024xf32, #tpu.memory_space<vmem>>, vector<200x1024xf32>
    %cst_66 = arith.constant dense<0.000000e+00> : vector<6x1024xf32>
    %57 = tpu.matmul %55, %56, %cst_66 {dimension_numbers = #tpu.dot_dimension_numbers<[1], [0], [0], [1], [0, 0, 1, 1], [], []>} : vector<6x200xf32>, vector<200x1024xf32>, vector<6x1024xf32> -> vector<6x1024xf32>
    %c0_67 = arith.constant 0 : index
    %c0_68 = arith.constant 0 : index
    %58 = vector.load %arg3[%c0_67, %c0_68] : memref<6x1xf32, #tpu.memory_space<vmem>>, vector<6x1xf32>
    %59 = vector.broadcast %58 : vector<6x1xf32> to vector<6x1024xf32>
    %60 = arith.addf %57, %59 : vector<6x1024xf32>
    %cst_69 = arith.constant 0.000000e+00 : f32
    %61 = vector.broadcast %cst_69 : f32 to vector<6x1024xf32>
    %62 = arith.maximumf %60, %61 : vector<6x1024xf32>
    %cst_70 = arith.constant 0.000000e+00 : f32
    %63 = vector.broadcast %cst_70 : f32 to vector<8x1152xf32>
    %c0_71 = arith.constant 0 : index
    %c0_72 = arith.constant 0 : index
    %64 = vector.load %arg17[%c0_71, %c0_72] : memref<8x1152xf32, #tpu.memory_space<vmem>>, vector<8x1152xf32>
    tpu.vector_store %arg17[%c0_71, %c0_72], %63 {strides = array<i32>} : memref<8x1152xf32, #tpu.memory_space<vmem>>, vector<8x1152xf32>,
    %c0_73 = arith.constant 0 : index
    %c0_74 = arith.constant 0 : index
    %65 = vector.load %arg17[%c0_73, %c0_74] : memref<8x1152xf32, #tpu.memory_space<vmem>>, vector<6x1024xf32>
    tpu.vector_store %arg17[%c0_73, %c0_74], %62 {strides = array<i32>} : memref<8x1152xf32, #tpu.memory_space<vmem>>, vector<6x1024xf32>,
    %c0_75 = arith.constant 0 : index
    %c0_76 = arith.constant 0 : index
    %66 = vector.load %arg17[%c0_75, %c0_76] : memref<8x1152xf32, #tpu.memory_space<vmem>>, vector<6x1024xf32>
    %c0_77 = arith.constant 0 : index
    %c1_78 = arith.constant 1 : index
    %67 = vector.load %arg17[%c0_77, %c1_78] : memref<8x1152xf32, #tpu.memory_space<vmem>>, vector<6x1024xf32>
    %68 = arith.maximumf %66, %67 : vector<6x1024xf32>
    %c0_79 = arith.constant 0 : index
    %c32_80 = arith.constant 32 : index
    %69 = vector.load %arg17[%c0_79, %c32_80] : memref<8x1152xf32, #tpu.memory_space<vmem>>, vector<6x1024xf32>
    %c0_81 = arith.constant 0 : index
    %c33_82 = arith.constant 33 : index
    %70 = vector.load %arg17[%c0_81, %c33_82] : memref<8x1152xf32, #tpu.memory_space<vmem>>, vector<6x1024xf32>
    %71 = arith.maximumf %69, %70 : vector<6x1024xf32>
    %72 = arith.maximumf %68, %71 : vector<6x1024xf32>
    %cst_83 = arith.constant 0.000000e+00 : f32
    %73 = vector.broadcast %cst_83 : f32 to vector<8x1408xf32>
    %c0_84 = arith.constant 0 : index
    %c0_85 = arith.constant 0 : index
    %74 = vector.load %arg18[%c0_84, %c0_85] : memref<8x1408xf32, #tpu.memory_space<vmem>>, vector<8x1408xf32>
    tpu.vector_store %arg18[%c0_84, %c0_85], %73 {strides = array<i32>} : memref<8x1408xf32, #tpu.memory_space<vmem>>, vector<8x1408xf32>,
    %c0_86 = arith.constant 0 : index
    %c0_87 = arith.constant 0 : index
    %75 = vector.load %arg18[%c0_86, %c0_87] : memref<8x1408xf32, #tpu.memory_space<vmem>>, vector<6x1024xf32>
    tpu.vector_store %arg18[%c0_86, %c0_87], %72 {strides = array<i32>} : memref<8x1408xf32, #tpu.memory_space<vmem>>, vector<6x1024xf32>,
    %c0_88 = arith.constant 0 : index
    %c0_89 = arith.constant 0 : index
    %76 = vector.load %arg18[%c0_88, %c0_89] : memref<8x1408xf32, #tpu.memory_space<vmem>>, vector<8x1024xf32>
    %c0_90 = arith.constant 0 : index
    %c0_91 = arith.constant 0 : index
    %77 = vector.load %arg19[%c0_90, %c0_91] : memref<200x1024xf32, #tpu.memory_space<vmem>>, vector<8x1024xf32>
    tpu.vector_store %arg19[%c0_90, %c0_91], %76 {strides = array<i32>} : memref<200x1024xf32, #tpu.memory_space<vmem>>, vector<8x1024xf32>,
    %c0_92 = arith.constant 0 : index
    %c2_93 = arith.constant 2 : index
    %78 = vector.load %arg18[%c0_92, %c2_93] : memref<8x1408xf32, #tpu.memory_space<vmem>>, vector<8x1024xf32>
    %c8_94 = arith.constant 8 : index
    %c0_95 = arith.constant 0 : index
    %79 = vector.load %arg19[%c8_94, %c0_95] : memref<200x1024xf32, #tpu.memory_space<vmem>>, vector<8x1024xf32>
    tpu.vector_store %arg19[%c8_94, %c0_95], %78 {strides = array<i32>} : memref<200x1024xf32, #tpu.memory_space<vmem>>, vector<8x1024xf32>,
    %c0_96 = arith.constant 0 : index
    %c4_97 = arith.constant 4 : index
    %80 = vector.load %arg18[%c0_96, %c4_97] : memref<8x1408xf32, #tpu.memory_space<vmem>>, vector<8x1024xf32>
    %c16_98 = arith.constant 16 : index
    %c0_99 = arith.constant 0 : index
    %81 = vector.load %arg19[%c16_98, %c0_99] : memref<200x1024xf32, #tpu.memory_space<vmem>>, vector<8x1024xf32>
    tpu.vector_store %arg19[%c16_98, %c0_99], %80 {strides = array<i32>} : memref<200x1024xf32, #tpu.memory_space<vmem>>, vector<8x1024xf32>,
    %c0_100 = arith.constant 0 : index
    %c6 = arith.constant 6 : index
    %82 = vector.load %arg18[%c0_100, %c6] : memref<8x1408xf32, #tpu.memory_space<vmem>>, vector<8x1024xf32>
    %c24_101 = arith.constant 24 : index
    %c0_102 = arith.constant 0 : index
    %83 = vector.load %arg19[%c24_101, %c0_102] : memref<200x1024xf32, #tpu.memory_space<vmem>>, vector<8x1024xf32>
    tpu.vector_store %arg19[%c24_101, %c0_102], %82 {strides = array<i32>} : memref<200x1024xf32, #tpu.memory_space<vmem>>, vector<8x1024xf32>,
    %c0_103 = arith.constant 0 : index
    %c8_104 = arith.constant 8 : index
    %84 = vector.load %arg18[%c0_103, %c8_104] : memref<8x1408xf32, #tpu.memory_space<vmem>>, vector<8x1024xf32>
    %c32_105 = arith.constant 32 : index
    %c0_106 = arith.constant 0 : index
    %85 = vector.load %arg19[%c32_105, %c0_106] : memref<200x1024xf32, #tpu.memory_space<vmem>>, vector<8x1024xf32>
    tpu.vector_store %arg19[%c32_105, %c0_106], %84 {strides = array<i32>} : memref<200x1024xf32, #tpu.memory_space<vmem>>, vector<8x1024xf32>,
    %c0_107 = arith.constant 0 : index
    %c64_108 = arith.constant 64 : index
    %86 = vector.load %arg18[%c0_107, %c64_108] : memref<8x1408xf32, #tpu.memory_space<vmem>>, vector<8x1024xf32>
    %c40_109 = arith.constant 40 : index
    %c0_110 = arith.constant 0 : index
    %87 = vector.load %arg19[%c40_109, %c0_110] : memref<200x1024xf32, #tpu.memory_space<vmem>>, vector<8x1024xf32>
    tpu.vector_store %arg19[%c40_109, %c0_110], %86 {strides = array<i32>} : memref<200x1024xf32, #tpu.memory_space<vmem>>, vector<8x1024xf32>,
    %c0_111 = arith.constant 0 : index
    %c66_112 = arith.constant 66 : index
    %88 = vector.load %arg18[%c0_111, %c66_112] : memref<8x1408xf32, #tpu.memory_space<vmem>>, vector<8x1024xf32>
    %c48_113 = arith.constant 48 : index
    %c0_114 = arith.constant 0 : index
    %89 = vector.load %arg19[%c48_113, %c0_114] : memref<200x1024xf32, #tpu.memory_space<vmem>>, vector<8x1024xf32>
    tpu.vector_store %arg19[%c48_113, %c0_114], %88 {strides = array<i32>} : memref<200x1024xf32, #tpu.memory_space<vmem>>, vector<8x1024xf32>,
    %c0_115 = arith.constant 0 : index
    %c68_116 = arith.constant 68 : index
    %90 = vector.load %arg18[%c0_115, %c68_116] : memref<8x1408xf32, #tpu.memory_space<vmem>>, vector<8x1024xf32>
    %c56_117 = arith.constant 56 : index
    %c0_118 = arith.constant 0 : index
    %91 = vector.load %arg19[%c56_117, %c0_118] : memref<200x1024xf32, #tpu.memory_space<vmem>>, vector<8x1024xf32>
    tpu.vector_store %arg19[%c56_117, %c0_118], %90 {strides = array<i32>} : memref<200x1024xf32, #tpu.memory_space<vmem>>, vector<8x1024xf32>,
    %c0_119 = arith.constant 0 : index
    %c70 = arith.constant 70 : index
    %92 = vector.load %arg18[%c0_119, %c70] : memref<8x1408xf32, #tpu.memory_space<vmem>>, vector<8x1024xf32>
    %c64_120 = arith.constant 64 : index
    %c0_121 = arith.constant 0 : index
    %93 = vector.load %arg19[%c64_120, %c0_121] : memref<200x1024xf32, #tpu.memory_space<vmem>>, vector<8x1024xf32>
    tpu.vector_store %arg19[%c64_120, %c0_121], %92 {strides = array<i32>} : memref<200x1024xf32, #tpu.memory_space<vmem>>, vector<8x1024xf32>,
    %c0_122 = arith.constant 0 : index
    %c72_123 = arith.constant 72 : index
    %94 = vector.load %arg18[%c0_122, %c72_123] : memref<8x1408xf32, #tpu.memory_space<vmem>>, vector<8x1024xf32>
    %c72_124 = arith.constant 72 : index
    %c0_125 = arith.constant 0 : index
    %95 = vector.load %arg19[%c72_124, %c0_125] : memref<200x1024xf32, #tpu.memory_space<vmem>>, vector<8x1024xf32>
    tpu.vector_store %arg19[%c72_124, %c0_125], %94 {strides = array<i32>} : memref<200x1024xf32, #tpu.memory_space<vmem>>, vector<8x1024xf32>,
    %c0_126 = arith.constant 0 : index
    %c128_127 = arith.constant 128 : index
    %96 = vector.load %arg18[%c0_126, %c128_127] : memref<8x1408xf32, #tpu.memory_space<vmem>>, vector<8x1024xf32>
    %c80_128 = arith.constant 80 : index
    %c0_129 = arith.constant 0 : index
    %97 = vector.load %arg19[%c80_128, %c0_129] : memref<200x1024xf32, #tpu.memory_space<vmem>>, vector<8x1024xf32>
    tpu.vector_store %arg19[%c80_128, %c0_129], %96 {strides = array<i32>} : memref<200x1024xf32, #tpu.memory_space<vmem>>, vector<8x1024xf32>,
    %c0_130 = arith.constant 0 : index
    %c130_131 = arith.constant 130 : index
    %98 = vector.load %arg18[%c0_130, %c130_131] : memref<8x1408xf32, #tpu.memory_space<vmem>>, vector<8x1024xf32>
    %c88_132 = arith.constant 88 : index
    %c0_133 = arith.constant 0 : index
    %99 = vector.load %arg19[%c88_132, %c0_133] : memref<200x1024xf32, #tpu.memory_space<vmem>>, vector<8x1024xf32>
    tpu.vector_store %arg19[%c88_132, %c0_133], %98 {strides = array<i32>} : memref<200x1024xf32, #tpu.memory_space<vmem>>, vector<8x1024xf32>,
    %c0_134 = arith.constant 0 : index
    %c132_135 = arith.constant 132 : index
    %100 = vector.load %arg18[%c0_134, %c132_135] : memref<8x1408xf32, #tpu.memory_space<vmem>>, vector<8x1024xf32>
    %c96_136 = arith.constant 96 : index
    %c0_137 = arith.constant 0 : index
    %101 = vector.load %arg19[%c96_136, %c0_137] : memref<200x1024xf32, #tpu.memory_space<vmem>>, vector<8x1024xf32>
    tpu.vector_store %arg19[%c96_136, %c0_137], %100 {strides = array<i32>} : memref<200x1024xf32, #tpu.memory_space<vmem>>, vector<8x1024xf32>,
    %c0_138 = arith.constant 0 : index
    %c134 = arith.constant 134 : index
    %102 = vector.load %arg18[%c0_138, %c134] : memref<8x1408xf32, #tpu.memory_space<vmem>>, vector<8x1024xf32>
    %c104_139 = arith.constant 104 : index
    %c0_140 = arith.constant 0 : index
    %103 = vector.load %arg19[%c104_139, %c0_140] : memref<200x1024xf32, #tpu.memory_space<vmem>>, vector<8x1024xf32>
    tpu.vector_store %arg19[%c104_139, %c0_140], %102 {strides = array<i32>} : memref<200x1024xf32, #tpu.memory_space<vmem>>, vector<8x1024xf32>,
    %c0_141 = arith.constant 0 : index
    %c136_142 = arith.constant 136 : index
    %104 = vector.load %arg18[%c0_141, %c136_142] : memref<8x1408xf32, #tpu.memory_space<vmem>>, vector<8x1024xf32>
    %c112_143 = arith.constant 112 : index
    %c0_144 = arith.constant 0 : index
    %105 = vector.load %arg19[%c112_143, %c0_144] : memref<200x1024xf32, #tpu.memory_space<vmem>>, vector<8x1024xf32>
    tpu.vector_store %arg19[%c112_143, %c0_144], %104 {strides = array<i32>} : memref<200x1024xf32, #tpu.memory_space<vmem>>, vector<8x1024xf32>,
    %c0_145 = arith.constant 0 : index
    %c192_146 = arith.constant 192 : index
    %106 = vector.load %arg18[%c0_145, %c192_146] : memref<8x1408xf32, #tpu.memory_space<vmem>>, vector<8x1024xf32>
    %c120_147 = arith.constant 120 : index
    %c0_148 = arith.constant 0 : index
    %107 = vector.load %arg19[%c120_147, %c0_148] : memref<200x1024xf32, #tpu.memory_space<vmem>>, vector<8x1024xf32>
    tpu.vector_store %arg19[%c120_147, %c0_148], %106 {strides = array<i32>} : memref<200x1024xf32, #tpu.memory_space<vmem>>, vector<8x1024xf32>,
    %c0_149 = arith.constant 0 : index
    %c194 = arith.constant 194 : index
    %108 = vector.load %arg18[%c0_149, %c194] : memref<8x1408xf32, #tpu.memory_space<vmem>>, vector<8x1024xf32>
    %c128_150 = arith.constant 128 : index
    %c0_151 = arith.constant 0 : index
    %109 = vector.load %arg19[%c128_150, %c0_151] : memref<200x1024xf32, #tpu.memory_space<vmem>>, vector<8x1024xf32>
    tpu.vector_store %arg19[%c128_150, %c0_151], %108 {strides = array<i32>} : memref<200x1024xf32, #tpu.memory_space<vmem>>, vector<8x1024xf32>,
    %c0_152 = arith.constant 0 : index
    %c196 = arith.constant 196 : index
    %110 = vector.load %arg18[%c0_152, %c196] : memref<8x1408xf32, #tpu.memory_space<vmem>>, vector<8x1024xf32>
    %c136_153 = arith.constant 136 : index
    %c0_154 = arith.constant 0 : index
    %111 = vector.load %arg19[%c136_153, %c0_154] : memref<200x1024xf32, #tpu.memory_space<vmem>>, vector<8x1024xf32>
    tpu.vector_store %arg19[%c136_153, %c0_154], %110 {strides = array<i32>} : memref<200x1024xf32, #tpu.memory_space<vmem>>, vector<8x1024xf32>,
    %c0_155 = arith.constant 0 : index
    %c198 = arith.constant 198 : index
    %112 = vector.load %arg18[%c0_155, %c198] : memref<8x1408xf32, #tpu.memory_space<vmem>>, vector<8x1024xf32>
    %c144_156 = arith.constant 144 : index
    %c0_157 = arith.constant 0 : index
    %113 = vector.load %arg19[%c144_156, %c0_157] : memref<200x1024xf32, #tpu.memory_space<vmem>>, vector<8x1024xf32>
    tpu.vector_store %arg19[%c144_156, %c0_157], %112 {strides = array<i32>} : memref<200x1024xf32, #tpu.memory_space<vmem>>, vector<8x1024xf32>,
    %c0_158 = arith.constant 0 : index
    %c200 = arith.constant 200 : index
    %114 = vector.load %arg18[%c0_158, %c200] : memref<8x1408xf32, #tpu.memory_space<vmem>>, vector<8x1024xf32>
    %c152_159 = arith.constant 152 : index
    %c0_160 = arith.constant 0 : index
    %115 = vector.load %arg19[%c152_159, %c0_160] : memref<200x1024xf32, #tpu.memory_space<vmem>>, vector<8x1024xf32>
    tpu.vector_store %arg19[%c152_159, %c0_160], %114 {strides = array<i32>} : memref<200x1024xf32, #tpu.memory_space<vmem>>, vector<8x1024xf32>,
    %c0_161 = arith.constant 0 : index
    %c256 = arith.constant 256 : index
    %116 = vector.load %arg18[%c0_161, %c256] : memref<8x1408xf32, #tpu.memory_space<vmem>>, vector<8x1024xf32>
    %c160_162 = arith.constant 160 : index
    %c0_163 = arith.constant 0 : index
    %117 = vector.load %arg19[%c160_162, %c0_163] : memref<200x1024xf32, #tpu.memory_space<vmem>>, vector<8x1024xf32>
    tpu.vector_store %arg19[%c160_162, %c0_163], %116 {strides = array<i32>} : memref<200x1024xf32, #tpu.memory_space<vmem>>, vector<8x1024xf32>,
    %c0_164 = arith.constant 0 : index
    %c258 = arith.constant 258 : index
    %118 = vector.load %arg18[%c0_164, %c258] : memref<8x1408xf32, #tpu.memory_space<vmem>>, vector<8x1024xf32>
    %c168_165 = arith.constant 168 : index
    %c0_166 = arith.constant 0 : index
    %119 = vector.load %arg19[%c168_165, %c0_166] : memref<200x1024xf32, #tpu.memory_space<vmem>>, vector<8x1024xf32>
    tpu.vector_store %arg19[%c168_165, %c0_166], %118 {strides = array<i32>} : memref<200x1024xf32, #tpu.memory_space<vmem>>, vector<8x1024xf32>,
    %c0_167 = arith.constant 0 : index
    %c260 = arith.constant 260 : index
    %120 = vector.load %arg18[%c0_167, %c260] : memref<8x1408xf32, #tpu.memory_space<vmem>>, vector<8x1024xf32>
    %c176_168 = arith.constant 176 : index
    %c0_169 = arith.constant 0 : index
    %121 = vector.load %arg19[%c176_168, %c0_169] : memref<200x1024xf32, #tpu.memory_space<vmem>>, vector<8x1024xf32>
    tpu.vector_store %arg19[%c176_168, %c0_169], %120 {strides = array<i32>} : memref<200x1024xf32, #tpu.memory_space<vmem>>, vector<8x1024xf32>,
    %c0_170 = arith.constant 0 : index
    %c262 = arith.constant 262 : index
    %122 = vector.load %arg18[%c0_170, %c262] : memref<8x1408xf32, #tpu.memory_space<vmem>>, vector<8x1024xf32>
    %c184_171 = arith.constant 184 : index
    %c0_172 = arith.constant 0 : index
    %123 = vector.load %arg19[%c184_171, %c0_172] : memref<200x1024xf32, #tpu.memory_space<vmem>>, vector<8x1024xf32>
    tpu.vector_store %arg19[%c184_171, %c0_172], %122 {strides = array<i32>} : memref<200x1024xf32, #tpu.memory_space<vmem>>, vector<8x1024xf32>,
    %c0_173 = arith.constant 0 : index
    %c264 = arith.constant 264 : index
    %124 = vector.load %arg18[%c0_173, %c264] : memref<8x1408xf32, #tpu.memory_space<vmem>>, vector<8x1024xf32>
    %c192_174 = arith.constant 192 : index
    %c0_175 = arith.constant 0 : index
    %125 = vector.load %arg19[%c192_174, %c0_175] : memref<200x1024xf32, #tpu.memory_space<vmem>>, vector<8x1024xf32>
    tpu.vector_store %arg19[%c192_174, %c0_175], %124 {strides = array<i32>} : memref<200x1024xf32, #tpu.memory_space<vmem>>, vector<8x1024xf32>,
    %c0_176 = arith.constant 0 : index
    %c0_177 = arith.constant 0 : index
    %126 = vector.load %arg4[%c0_176, %c0_177] : memref<16x200xf32, #tpu.memory_space<vmem>>, vector<16x200xf32>
    %c0_178 = arith.constant 0 : index
    %c0_179 = arith.constant 0 : index
    %127 = vector.load %arg19[%c0_178, %c0_179] : memref<200x1024xf32, #tpu.memory_space<vmem>>, vector<200x1024xf32>
    %cst_180 = arith.constant dense<0.000000e+00> : vector<16x1024xf32>
    %128 = tpu.matmul %126, %127, %cst_180 {dimension_numbers = #tpu.dot_dimension_numbers<[1], [0], [0], [1], [0, 0, 1, 1], [], []>} : vector<16x200xf32>, vector<200x1024xf32>, vector<16x1024xf32> -> vector<16x1024xf32>
    %c0_181 = arith.constant 0 : index
    %c0_182 = arith.constant 0 : index
    %129 = vector.load %arg5[%c0_181, %c0_182] : memref<16x1xf32, #tpu.memory_space<vmem>>, vector<16x1xf32>
    %130 = vector.broadcast %129 : vector<16x1xf32> to vector<16x1024xf32>
    %131 = arith.addf %128, %130 : vector<16x1024xf32>
    %cst_183 = arith.constant 0.000000e+00 : f32
    %132 = vector.broadcast %cst_183 : f32 to vector<16x1024xf32>
    %133 = arith.maximumf %131, %132 : vector<16x1024xf32>
    %c0_184 = arith.constant 0 : index
    %c0_185 = arith.constant 0 : index
    %134 = vector.load %arg20[%c0_184, %c0_185] : memref<16x1024xf32, #tpu.memory_space<vmem>>, vector<16x1024xf32>
    tpu.vector_store %arg20[%c0_184, %c0_185], %133 {strides = array<i32>} : memref<16x1024xf32, #tpu.memory_space<vmem>>, vector<16x1024xf32>,
    %cst_186 = arith.constant 0.000000e+00 : f32
    %135 = vector.broadcast %cst_186 : f32 to vector<16x160xf32>
    %c0_187 = arith.constant 0 : index
    %c0_188 = arith.constant 0 : index
    %136 = vector.load %arg21[%c0_187, %c0_188] : memref<16x160xf32, #tpu.memory_space<vmem>>, vector<16x160xf32>
    tpu.vector_store %arg21[%c0_187, %c0_188], %135 {strides = array<i32>} : memref<16x160xf32, #tpu.memory_space<vmem>>, vector<16x160xf32>,
    %c0_189 = arith.constant 0 : index
    %c0_190 = arith.constant 0 : index
    %137 = vector.load %arg20[%c0_189, %c0_190] : memref<16x1024xf32, #tpu.memory_space<vmem>>, vector<16x20xf32>
    %c0_191 = arith.constant 0 : index
    %c64_192 = arith.constant 64 : index
    %138 = vector.load %arg20[%c0_191, %c64_192] : memref<16x1024xf32, #tpu.memory_space<vmem>>, vector<16x20xf32>
    %139 = arith.maximumf %137, %138 : vector<16x20xf32>
    %140 = vector.extract_strided_slice %139 {offsets = [0, 0], sizes = [16, 18], strides = [1, 1]} : vector<16x20xf32> to vector<16x18xf32>
    %141 = vector.extract_strided_slice %139 {offsets = [0, 2], sizes = [16, 18], strides = [1, 1]} : vector<16x20xf32> to vector<16x18xf32>
    %142 = arith.maximumf %140, %141 : vector<16x18xf32>
    %c0_193 = arith.constant 0 : index
    %c0_194 = arith.constant 0 : index
    %143 = vector.load %arg21[%c0_193, %c0_194] : memref<16x160xf32, #tpu.memory_space<vmem>>, vector<16x18xf32>
    tpu.vector_store %arg21[%c0_193, %c0_194], %142 {strides = array<i32>} : memref<16x160xf32, #tpu.memory_space<vmem>>, vector<16x18xf32>,
    %c0_195 = arith.constant 0 : index
    %c128_196 = arith.constant 128 : index
    %144 = vector.load %arg20[%c0_195, %c128_196] : memref<16x1024xf32, #tpu.memory_space<vmem>>, vector<16x20xf32>
    %c0_197 = arith.constant 0 : index
    %c192_198 = arith.constant 192 : index
    %145 = vector.load %arg20[%c0_197, %c192_198] : memref<16x1024xf32, #tpu.memory_space<vmem>>, vector<16x20xf32>
    %146 = arith.maximumf %144, %145 : vector<16x20xf32>
    %147 = vector.extract_strided_slice %146 {offsets = [0, 0], sizes = [16, 18], strides = [1, 1]} : vector<16x20xf32> to vector<16x18xf32>
    %148 = vector.extract_strided_slice %146 {offsets = [0, 2], sizes = [16, 18], strides = [1, 1]} : vector<16x20xf32> to vector<16x18xf32>
    %149 = arith.maximumf %147, %148 : vector<16x18xf32>
    %c0_199 = arith.constant 0 : index
    %c32_200 = arith.constant 32 : index
    %150 = vector.load %arg21[%c0_199, %c32_200] : memref<16x160xf32, #tpu.memory_space<vmem>>, vector<16x18xf32>
    tpu.vector_store %arg21[%c0_199, %c32_200], %149 {strides = array<i32>} : memref<16x160xf32, #tpu.memory_space<vmem>>, vector<16x18xf32>,
    %c0_201 = arith.constant 0 : index
    %c256_202 = arith.constant 256 : index
    %151 = vector.load %arg20[%c0_201, %c256_202] : memref<16x1024xf32, #tpu.memory_space<vmem>>, vector<16x20xf32>
    %c0_203 = arith.constant 0 : index
    %c320 = arith.constant 320 : index
    %152 = vector.load %arg20[%c0_203, %c320] : memref<16x1024xf32, #tpu.memory_space<vmem>>, vector<16x20xf32>
    %153 = arith.maximumf %151, %152 : vector<16x20xf32>
    %154 = vector.extract_strided_slice %153 {offsets = [0, 0], sizes = [16, 18], strides = [1, 1]} : vector<16x20xf32> to vector<16x18xf32>
    %155 = vector.extract_strided_slice %153 {offsets = [0, 2], sizes = [16, 18], strides = [1, 1]} : vector<16x20xf32> to vector<16x18xf32>
    %156 = arith.maximumf %154, %155 : vector<16x18xf32>
    %c0_204 = arith.constant 0 : index
    %c64_205 = arith.constant 64 : index
    %157 = vector.load %arg21[%c0_204, %c64_205] : memref<16x160xf32, #tpu.memory_space<vmem>>, vector<16x18xf32>
    tpu.vector_store %arg21[%c0_204, %c64_205], %156 {strides = array<i32>} : memref<16x160xf32, #tpu.memory_space<vmem>>, vector<16x18xf32>,
    %c0_206 = arith.constant 0 : index
    %c384 = arith.constant 384 : index
    %158 = vector.load %arg20[%c0_206, %c384] : memref<16x1024xf32, #tpu.memory_space<vmem>>, vector<16x20xf32>
    %c0_207 = arith.constant 0 : index
    %c448 = arith.constant 448 : index
    %159 = vector.load %arg20[%c0_207, %c448] : memref<16x1024xf32, #tpu.memory_space<vmem>>, vector<16x20xf32>
    %160 = arith.maximumf %158, %159 : vector<16x20xf32>
    %161 = vector.extract_strided_slice %160 {offsets = [0, 0], sizes = [16, 18], strides = [1, 1]} : vector<16x20xf32> to vector<16x18xf32>
    %162 = vector.extract_strided_slice %160 {offsets = [0, 2], sizes = [16, 18], strides = [1, 1]} : vector<16x20xf32> to vector<16x18xf32>
    %163 = arith.maximumf %161, %162 : vector<16x18xf32>
    %c0_208 = arith.constant 0 : index
    %c96_209 = arith.constant 96 : index
    %164 = vector.load %arg21[%c0_208, %c96_209] : memref<16x160xf32, #tpu.memory_space<vmem>>, vector<16x18xf32>
    tpu.vector_store %arg21[%c0_208, %c96_209], %163 {strides = array<i32>} : memref<16x160xf32, #tpu.memory_space<vmem>>, vector<16x18xf32>,
    %c0_210 = arith.constant 0 : index
    %c512 = arith.constant 512 : index
    %165 = vector.load %arg20[%c0_210, %c512] : memref<16x1024xf32, #tpu.memory_space<vmem>>, vector<16x20xf32>
    %c0_211 = arith.constant 0 : index
    %c576 = arith.constant 576 : index
    %166 = vector.load %arg20[%c0_211, %c576] : memref<16x1024xf32, #tpu.memory_space<vmem>>, vector<16x20xf32>
    %167 = arith.maximumf %165, %166 : vector<16x20xf32>
    %168 = vector.extract_strided_slice %167 {offsets = [0, 0], sizes = [16, 18], strides = [1, 1]} : vector<16x20xf32> to vector<16x18xf32>
    %169 = vector.extract_strided_slice %167 {offsets = [0, 2], sizes = [16, 18], strides = [1, 1]} : vector<16x20xf32> to vector<16x18xf32>
    %170 = arith.maximumf %168, %169 : vector<16x18xf32>
    %c0_212 = arith.constant 0 : index
    %c128_213 = arith.constant 128 : index
    %171 = vector.load %arg21[%c0_212, %c128_213] : memref<16x160xf32, #tpu.memory_space<vmem>>, vector<16x18xf32>
    tpu.vector_store %arg21[%c0_212, %c128_213], %170 {strides = array<i32>} : memref<16x160xf32, #tpu.memory_space<vmem>>, vector<16x18xf32>,
    %c0_214 = arith.constant 0 : index
    %c0_215 = arith.constant 0 : index
    %172 = vector.load %arg21[%c0_214, %c0_215] : memref<16x160xf32, #tpu.memory_space<vmem>>, vector<16x160xf32>
    %c0_216 = arith.constant 0 : index
    %c0_217 = arith.constant 0 : index
    %173 = vector.load %arg6[%c0_216, %c0_217] : memref<160x400xf32, #tpu.memory_space<vmem>>, vector<160x400xf32>
    %cst_218 = arith.constant dense<0.000000e+00> : vector<16x400xf32>
    %174 = tpu.matmul %172, %173, %cst_218 {dimension_numbers = #tpu.dot_dimension_numbers<[1], [0], [0], [1], [0, 0, 1, 1], [], []>} : vector<16x160xf32>, vector<160x400xf32>, vector<16x400xf32> -> vector<16x400xf32>
    %c0_219 = arith.constant 0 : index
    %c0_220 = arith.constant 0 : index
    %175 = vector.load %arg7[%c0_219, %c0_220] : memref<16x400xf32, #tpu.memory_space<vmem>>, vector<16x400xf32>
    %176 = arith.mulf %174, %175 : vector<16x400xf32>
    %cst_221 = arith.constant dense<0.000000e+00> : vector<400xf32>
    %177 = vector.multi_reduction <add>, %176, %cst_221 [0] : vector<16x400xf32> to vector<400xf32>
    %178 = vector.shape_cast %177 : vector<400xf32> to vector<1x400xf32>
    %c0_222 = arith.constant 0 : index
    %c0_223 = arith.constant 0 : index
    %179 = vector.load %arg8[%c0_222, %c0_223] : memref<400x120xf32, #tpu.memory_space<vmem>>, vector<400x120xf32>
    %cst_224 = arith.constant dense<0.000000e+00> : vector<1x120xf32>
    %180 = tpu.matmul %178, %179, %cst_224 {dimension_numbers = #tpu.dot_dimension_numbers<[1], [0], [0], [1], [0, 0, 1, 1], [], []>} : vector<1x400xf32>, vector<400x120xf32>, vector<1x120xf32> -> vector<1x120xf32>
    %c0_225 = arith.constant 0 : index
    %c0_226 = arith.constant 0 : index
    %181 = vector.load %arg9[%c0_225, %c0_226] : memref<1x120xf32, #tpu.memory_space<vmem>>, vector<1x120xf32>
    %182 = arith.addf %180, %181 : vector<1x120xf32>
    %cst_227 = arith.constant 0.000000e+00 : f32
    %183 = vector.broadcast %cst_227 : f32 to vector<1x120xf32>
    %184 = arith.maximumf %182, %183 : vector<1x120xf32>
    %c0_228 = arith.constant 0 : index
    %c0_229 = arith.constant 0 : index
    %185 = vector.load %arg10[%c0_228, %c0_229] : memref<120x84xf32, #tpu.memory_space<vmem>>, vector<120x84xf32>
    %cst_230 = arith.constant dense<0.000000e+00> : vector<1x84xf32>
    %186 = tpu.matmul %184, %185, %cst_230 {dimension_numbers = #tpu.dot_dimension_numbers<[1], [0], [0], [1], [0, 0, 1, 1], [], []>} : vector<1x120xf32>, vector<120x84xf32>, vector<1x84xf32> -> vector<1x84xf32>
    %c0_231 = arith.constant 0 : index
    %c0_232 = arith.constant 0 : index
    %187 = vector.load %arg11[%c0_231, %c0_232] : memref<1x84xf32, #tpu.memory_space<vmem>>, vector<1x84xf32>
    %188 = arith.addf %186, %187 : vector<1x84xf32>
    %cst_233 = arith.constant 0.000000e+00 : f32
    %189 = vector.broadcast %cst_233 : f32 to vector<1x84xf32>
    %190 = arith.maximumf %188, %189 : vector<1x84xf32>
    %c0_234 = arith.constant 0 : index
    %c0_235 = arith.constant 0 : index
    %191 = vector.load %arg12[%c0_234, %c0_235] : memref<84x128xf32, #tpu.memory_space<vmem>>, vector<84x128xf32>
    %cst_236 = arith.constant dense<0.000000e+00> : vector<1x128xf32>
    %192 = tpu.matmul %190, %191, %cst_236 {dimension_numbers = #tpu.dot_dimension_numbers<[1], [0], [0], [1], [0, 0, 1, 1], [], []>} : vector<1x84xf32>, vector<84x128xf32>, vector<1x128xf32> -> vector<1x128xf32>
    %c0_237 = arith.constant 0 : index
    %c0_238 = arith.constant 0 : index
    %193 = vector.load %arg13[%c0_237, %c0_238] : memref<1x128xf32, #tpu.memory_space<vmem>>, vector<1x128xf32>
    %194 = arith.addf %192, %193 : vector<1x128xf32>
    %cst_239 = arith.constant dense<0xFF800000> : vector<1xf32>
    %195 = vector.multi_reduction <maximumf>, %194, %cst_239 [1] : vector<1x128xf32> to vector<1xf32>
    %196 = vector.shape_cast %195 : vector<1xf32> to vector<1x1xf32>
    %197 = vector.broadcast %196 : vector<1x1xf32> to vector<1x128xf32>
    %198 = arith.subf %194, %197 : vector<1x128xf32>
    %199 = math.exp %198 : vector<1x128xf32>
    %cst_240 = arith.constant dense<0.000000e+00> : vector<1xf32>
    %200 = vector.multi_reduction <add>, %199, %cst_240 [1] : vector<1x128xf32> to vector<1xf32>
    %201 = vector.shape_cast %200 : vector<1xf32> to vector<1x1xf32>
    %202 = math.log %201 : vector<1x1xf32>
    %203 = vector.broadcast %202 : vector<1x1xf32> to vector<1x128xf32>
    %204 = arith.subf %198, %203 : vector<1x128xf32>
    %c0_241 = arith.constant 0 : index
    %c0_242 = arith.constant 0 : index
    %c0_243 = arith.constant 0 : index
    %205 = vector.load %arg14[%c0_241, %c0_242, %c0_243] : memref<1x1x128xf32, #tpu.memory_space<vmem>>, vector<1x1x128xf32>
    %206 = vector.shape_cast %205 : vector<1x1x128xf32> to vector<1x128xf32>
    %207 = vector.shape_cast %204 : vector<1x128xf32> to vector<1x1x128xf32>
    tpu.vector_store %arg14[%c0_241, %c0_242, %c0_243], %207 {strides = array<i32>} : memref<1x1x128xf32, #tpu.memory_space<vmem>>, vector<1x1x128xf32>,
    return
  }
  func.func @transform_0(%arg0: i32) -> (i32, i32, i32) {
    %c0_i32 = arith.constant 0 : i32
    %c0_i32_0 = arith.constant 0 : i32
    %c0_i32_1 = arith.constant 0 : i32
    return %arg0, %c0_i32, %c0_i32_0 : i32, i32, i32
  }
  func.func @transform_1(%arg0: i32) -> (i32, i32) {
    %c0_i32 = arith.constant 0 : i32
    %c0_i32_0 = arith.constant 0 : i32
    %c0_i32_1 = arith.constant 0 : i32
    return %c0_i32, %c0_i32_0 : i32, i32
  }
  func.func @transform_2(%arg0: i32) -> (i32, i32) {
    %c0_i32 = arith.constant 0 : i32
    %c0_i32_0 = arith.constant 0 : i32
    %c0_i32_1 = arith.constant 0 : i32
    return %c0_i32, %c0_i32_0 : i32, i32
  }
  func.func @transform_3(%arg0: i32) -> (i32, i32) {
    %c0_i32 = arith.constant 0 : i32
    %c0_i32_0 = arith.constant 0 : i32
    %c0_i32_1 = arith.constant 0 : i32
    return %c0_i32, %c0_i32_0 : i32, i32
  }
  func.func @transform_4(%arg0: i32) -> (i32, i32) {
    %c0_i32 = arith.constant 0 : i32
    %c0_i32_0 = arith.constant 0 : i32
    %c0_i32_1 = arith.constant 0 : i32
    return %c0_i32, %c0_i32_0 : i32, i32
  }
  func.func @transform_5(%arg0: i32) -> (i32, i32) {
    %c0_i32 = arith.constant 0 : i32
    %c0_i32_0 = arith.constant 0 : i32
    %c0_i32_1 = arith.constant 0 : i32
    return %c0_i32, %c0_i32_0 : i32, i32
  }
  func.func @transform_6(%arg0: i32) -> (i32, i32) {
    %c0_i32 = arith.constant 0 : i32
    %c0_i32_0 = arith.constant 0 : i32
    %c0_i32_1 = arith.constant 0 : i32
    return %c0_i32, %c0_i32_0 : i32, i32
  }
  func.func @transform_7(%arg0: i32) -> (i32, i32) {
    %c0_i32 = arith.constant 0 : i32
    %c0_i32_0 = arith.constant 0 : i32
    %c0_i32_1 = arith.constant 0 : i32
    return %c0_i32, %c0_i32_0 : i32, i32
  }
  func.func @transform_8(%arg0: i32) -> (i32, i32) {
    %c0_i32 = arith.constant 0 : i32
    %c0_i32_0 = arith.constant 0 : i32
    %c0_i32_1 = arith.constant 0 : i32
    return %c0_i32, %c0_i32_0 : i32, i32
  }
  func.func @transform_9(%arg0: i32) -> (i32, i32) {
    %c0_i32 = arith.constant 0 : i32
    %c0_i32_0 = arith.constant 0 : i32
    %c0_i32_1 = arith.constant 0 : i32
    return %c0_i32, %c0_i32_0 : i32, i32
  }
  func.func @transform_10(%arg0: i32) -> (i32, i32) {
    %c0_i32 = arith.constant 0 : i32
    %c0_i32_0 = arith.constant 0 : i32
    %c0_i32_1 = arith.constant 0 : i32
    return %c0_i32, %c0_i32_0 : i32, i32
  }
  func.func @transform_11(%arg0: i32) -> (i32, i32) {
    %c0_i32 = arith.constant 0 : i32
    %c0_i32_0 = arith.constant 0 : i32
    %c0_i32_1 = arith.constant 0 : i32
    return %c0_i32, %c0_i32_0 : i32, i32
  }
  func.func @transform_12(%arg0: i32) -> (i32, i32) {
    %c0_i32 = arith.constant 0 : i32
    %c0_i32_0 = arith.constant 0 : i32
    %c0_i32_1 = arith.constant 0 : i32
    return %c0_i32, %c0_i32_0 : i32, i32
  }
  func.func @transform_13(%arg0: i32) -> (i32, i32, i32) {
    %c0_i32 = arith.constant 0 : i32
    %c0_i32_0 = arith.constant 0 : i32
    %c0_i32_1 = arith.constant 0 : i32
    return %arg0, %c0_i32, %c0_i32_0 : i32, i32, i32
  }
}

</mosaic_0001>

<llo_original>
// kernel: cnn_cifar_forward.1
$region0: #{cnn_cifar_forward.1}
  #allocation0 [shape = 'u32[]', space=smem, size = 0x4, offset = 0x4, fixed_abs, tag = 'smem constant byte address 0x4 - core index']
  #allocation1 [shape = 'u32[144,128]{1,0:T(1,128)}', space=vmem, size = 0x12000, scoped, tag = 'internal scratch']
  #allocation2 [shape = 'f32[8,1280]{1,0:T(8,128)}', space=vmem, size = 0xa000, scoped, tag = 'scratch operand']
  #allocation3 [shape = 'f32[200,1024]{1,0:T(8,128)}', space=vmem, size = 0xc8000, scoped, tag = 'scratch operand']
  #allocation4 [shape = 'f32[8,1152]{1,0:T(8,128)}', space=vmem, size = 0x9000, scoped, tag = 'scratch operand']
  #allocation5 [shape = 'f32[8,1408]{1,0:T(8,128)}', space=vmem, size = 0xb000, scoped, tag = 'scratch operand']
  #allocation6 [shape = 'f32[200,1024]{1,0:T(8,128)}', space=vmem, size = 0xc8000, scoped, tag = 'scratch operand']
  #allocation7 [shape = 'f32[16,1024]{1,0:T(8,128)}', space=vmem, size = 0x10000, scoped, tag = 'scratch operand']
  #allocation8 [shape = 'f32[16,160]{1,0:T(8,128)}', space=vmem, size = 0x4000, scoped, tag = 'scratch operand']
  %s0 = inlined_call_operand.vmem [shape: f32[2,3,1024], index: 0, kind: input, shape index: {}]
  %s1 = inlined_call_operand.hbm [shape: f32[6,200], index: 1, kind: input, shape index: {}]
  %s2 = inlined_call_operand.vmem [shape: f32[6,1], index: 2, kind: input, shape index: {}]
  %s3 = inlined_call_operand.vmem [shape: f32[16,200], index: 3, kind: input, shape index: {}]
  %s4 = inlined_call_operand.vmem [shape: f32[16,1], index: 4, kind: input, shape index: {}]
  %s5 = inlined_call_operand.hbm [shape: f32[160,400], index: 5, kind: input, shape index: {}]
  %s6 = inlined_call_operand.hbm [shape: f32[16,400], index: 6, kind: input, shape index: {}]
  %s7 = inlined_call_operand.vmem [shape: f32[400,120], index: 7, kind: input, shape index: {}]
  %s8 = inlined_call_operand.hbm [shape: f32[1,120], index: 8, kind: input, shape index: {}]
  %s9 = inlined_call_operand.vmem [shape: f32[120,84], index: 9, kind: input, shape index: {}]
  %s10 = inlined_call_operand.hbm [shape: f32[1,84], index: 10, kind: input, shape index: {}]
  %s11 = inlined_call_operand.hbm [shape: f32[84,128], index: 11, kind: input, shape index: {}]
  %s12 = inlined_call_operand.hbm [shape: f32[1,128], index: 12, kind: input, shape index: {}]
  %s13 = inlined_call_operand.hbm [shape: f32[2,1,128], index: 13, kind: output, shape index: {}]
  %s14 = sld [smem:[#allocation0]]
  $region113: #{cnn_cifar_forward.1} parent=0
    _
  %s16 = ssub.s32 1, %s14
  %s17 = scalar_select 0, %s16, %s14
  $region1: #{cnn_cifar_forward.1} parent=0
    #allocation9 [shape = 'u8[8192]{0}', space=vmem, size = 0x2000, scoped, tag = 'input window, operand 1, single buffered']
    #allocation10 [shape = 's32[2]{0}', space=sflag, size = 0x8, scoped, tag = 'scoped memory for cnn_cifar_forward.1']
    #allocation11 [shape = 's32[2]{0}', space=sflag, size = 0x8, scoped, tag = 'scoped memory for cnn_cifar_forward.1']
    #allocation12 [shape = 'u8[327680]{0}', space=vmem, size = 0x50000, scoped, tag = 'input window, operand 5, single buffered']
    #allocation13 [shape = 's32[1]{0}', space=sflag, size = 0x4, scoped, tag = 'scoped memory for cnn_cifar_forward.1']
    #allocation14 [shape = 'u8[32768]{0}', space=vmem, size = 0x8000, scoped, tag = 'input window, operand 6, single buffered']
    #allocation15 [shape = 'u8[512]{0}', space=vmem, size = 0x400, scoped, tag = 'input window, operand 8, single buffered']
    #allocation16 [shape = 's32[1]{0}', space=sflag, size = 0x4, scoped, tag = 'scoped memory for cnn_cifar_forward.1']
    #allocation17 [shape = 'u8[512]{0}', space=vmem, size = 0x400, scoped, tag = 'input window, operand 10, single buffered']
    #allocation18 [shape = 'u8[45056]{0}', space=vmem, size = 0xb000, scoped, tag = 'input window, operand 11, single buffered']
    #allocation19 [shape = 's32[1]{0}', space=sflag, size = 0x4, scoped, tag = 'scoped memory for cnn_cifar_forward.1']
    #allocation20 [shape = 'u8[512]{0}', space=vmem, size = 0x400, scoped, tag = 'input window, operand 12, single buffered']
    #allocation21 [shape = 'u8[1024]{0}', space=vmem, size = 0x400, scoped, tag = 'output window, operand 0']
    %18 = vsyncpa [#allocation10], 0
    %19 = vsyncpa [#allocation13], 0
    %20 = vsyncpa [#allocation16], 0
    %21 = vsyncpa [#allocation19], 0
    %22 = vsyncpa [#allocation11], 0
    %s23 = scalar_lea.sflag [#allocation11], 1
    %24 = vsyncpa %s23, 0
    loop: start=0, step=1, limit=4
    $region2: #{cnn_cifar_forward.1} parent=1 // loop_pre_header
      _
    $region3: #{cnn_cifar_forward.1} parent=1 // loop_header
      %s26 = sphi 0, %s30
      %p27 = scmp.ge.s32.totalorder %s26, 4
      %s36 = sphi 0, %s38
      %s39 = sphi 0, %s36
      %s40 = sphi 0, %s39
      %s56 = sphi 0, %s40
      %s60 = sphi 0, %s60
      %s62 = sphi 0, %s60
      %s63 = sphi 0, %s62
      %s77 = sphi 0, %s63
      %s81 = sphi 0, %s81
      %s83 = sphi 0, %s81
      %s84 = sphi 0, %s83
      %s98 = sphi 0, %s84
      %s102 = sphi 0, %s102
      %s104 = sphi 0, %s102
      %s105 = sphi 0, %s104
      %s119 = sphi 0, %s105
      %s123 = sphi 0, %s123
      %s125 = sphi 0, %s123
      %s126 = sphi 0, %s125
      %s140 = sphi 0, %s126
      %s144 = sphi 0, %s144
      %s146 = sphi 0, %s144
      %s147 = sphi 0, %s146
      %s161 = sphi 0, %s147
      %s165 = sphi 0, %s165
      %s167 = sphi 0, %s165
      %s168 = sphi 0, %s167
      %s182 = sphi 0, %s168
      %s186 = sphi 0, %s186
      %s188 = sphi 0, %s186
      %s189 = sphi 0, %s188
      %s203 = sphi 0, %s189
      %s207 = sphi 0, %s207
      %s209 = sphi 0, %s207
      %s210 = sphi 0, %s209
      %s224 = sphi 0, %s210
      %s228 = sphi 0, %s228
      %s230 = sphi 0, %s228
      %s231 = sphi 0, %s230
      %s245 = sphi 0, %s231
      %s249 = sphi 0, %s249
      %s251 = sphi 0, %s249
      %s252 = sphi 0, %s251
      %s266 = sphi 0, %s252
      %s270 = sphi 0, %s270
      %s272 = sphi 0, %s270
      %s273 = sphi 0, %s272
      %s287 = sphi 0, %s273
      %s291 = sphi 0, %s291
      %s293 = sphi 0, %s291
      %s294 = sphi 0, %s293
      %s308 = sphi 0, %s294
      %s314 = sphi 0, %s316
      %s317 = sphi 0, %s314
      %s318 = sphi 0, %s317
      %s334 = sphi 0, %s318
    $region4: #{cnn_cifar_forward.1} parent=1 // loop_header_branch
      %29 = sbr.rel (%p27) target = $region8
    $region5: #{cnn_cifar_forward.1} parent=1 // loop_body
      %s31 = ssub.s32 %s26, 1
      %s32 = ssub.s32 %s26, 2
      %s33 = sadd.s32 %s26, 1
      %s34 = ssub.s32 %s26, %s33
      %p35 = scmp.eq.s32.totalorder %s34, 0
      %s37 = sadd.s32 %s36, 1
      %s38 = scalar_select %p35, %s36, %s37
      %p41 = pneg %p35
      %p42 = scmp.eq.s32.totalorder %s26, 1
      %p43 = por %p41, %p42
      %p44 = scmp.ne.s32.totalorder %s36, %s39
      %p45 = scmp.eq.s32.totalorder %s26, 0
      %p46 = por %p44, %p45
      %p47 = scmp.ne.s32.totalorder %s36, %s39
      %p48 = scmp.eq.s32.totalorder %s31, 1
      %p49 = por %p47, %p48
      %p50 = scmp.ne.s32.totalorder %s39, %s40
      %p51 = scmp.eq.s32.totalorder %s31, 0
      %p52 = por %p50, %p51
      %p53 = scmp.ne.s32.totalorder %s39, %s40
      %p54 = scmp.eq.s32.totalorder %s32, 1
      %p55 = por %p53, %p54
      %p57 = scmp.ne.s32.totalorder %s40, %s56
      %p58 = scmp.eq.s32.totalorder %s32, 0
      %p59 = por %p57, %p58
      %s61 = sadd.s32 %s60, 1
      %p64 = scmp.eq.s32.totalorder %s26, 1
      %p65 = scmp.ne.s32.totalorder %s60, %s62
      %p66 = scmp.eq.s32.totalorder %s26, 0
      %p67 = por %p65, %p66
      %p68 = scmp.ne.s32.totalorder %s60, %s62
      %p69 = scmp.eq.s32.totalorder %s31, 1
      %p70 = por %p68, %p69
      %p71 = scmp.ne.s32.totalorder %s62, %s63
      %p72 = scmp.eq.s32.totalorder %s31, 0
      %p73 = por %p71, %p72
      %p74 = scmp.ne.s32.totalorder %s62, %s63
      %p75 = scmp.eq.s32.totalorder %s32, 1
      %p76 = por %p74, %p75
      %p78 = scmp.ne.s32.totalorder %s63, %s77
      %p79 = scmp.eq.s32.totalorder %s32, 0
      %p80 = por %p78, %p79
      %s82 = sadd.s32 %s81, 1
      %p85 = scmp.eq.s32.totalorder %s26, 1
      %p86 = scmp.ne.s32.totalorder %s81, %s83
      %p87 = scmp.eq.s32.totalorder %s26, 0
      %p88 = por %p86, %p87
      %p89 = scmp.ne.s32.totalorder %s81, %s83
      %p90 = scmp.eq.s32.totalorder %s31, 1
      %p91 = por %p89, %p90
      %p92 = scmp.ne.s32.totalorder %s83, %s84
      %p93 = scmp.eq.s32.totalorder %s31, 0
      %p94 = por %p92, %p93
      %p95 = scmp.ne.s32.totalorder %s83, %s84
      %p96 = scmp.eq.s32.totalorder %s32, 1
      %p97 = por %p95, %p96
      %p99 = scmp.ne.s32.totalorder %s84, %s98
      %p100 = scmp.eq.s32.totalorder %s32, 0
      %p101 = por %p99, %p100
      %s103 = sadd.s32 %s102, 1
      %p106 = scmp.eq.s32.totalorder %s26, 1
      %p107 = scmp.ne.s32.totalorder %s102, %s104
      %p108 = scmp.eq.s32.totalorder %s26, 0
      %p109 = por %p107, %p108
      %p110 = scmp.ne.s32.totalorder %s102, %s104
      %p111 = scmp.eq.s32.totalorder %s31, 1
      %p112 = por %p110, %p111
      %p113 = scmp.ne.s32.totalorder %s104, %s105
      %p114 = scmp.eq.s32.totalorder %s31, 0
      %p115 = por %p113, %p114
      %p116 = scmp.ne.s32.totalorder %s104, %s105
      %p117 = scmp.eq.s32.totalorder %s32, 1
      %p118 = por %p116, %p117
      %p120 = scmp.ne.s32.totalorder %s105, %s119
      %p121 = scmp.eq.s32.totalorder %s32, 0
      %p122 = por %p120, %p121
      %s124 = sadd.s32 %s123, 1
      %p127 = scmp.eq.s32.totalorder %s26, 1
      %p128 = scmp.ne.s32.totalorder %s123, %s125
      %p129 = scmp.eq.s32.totalorder %s26, 0
      %p130 = por %p128, %p129
      %p131 = scmp.ne.s32.totalorder %s123, %s125
      %p132 = scmp.eq.s32.totalorder %s31, 1
      %p133 = por %p131, %p132
      %p134 = scmp.ne.s32.totalorder %s125, %s126
      %p135 = scmp.eq.s32.totalorder %s31, 0
      %p136 = por %p134, %p135
      %p137 = scmp.ne.s32.totalorder %s125, %s126
      %p138 = scmp.eq.s32.totalorder %s32, 1
      %p139 = por %p137, %p138
      %p141 = scmp.ne.s32.totalorder %s126, %s140
      %p142 = scmp.eq.s32.totalorder %s32, 0
      %p143 = por %p141, %p142
      %s145 = sadd.s32 %s144, 1
      %p148 = scmp.eq.s32.totalorder %s26, 1
      %p149 = scmp.ne.s32.totalorder %s144, %s146
      %p150 = scmp.eq.s32.totalorder %s26, 0
      %p151 = por %p149, %p150
      %p152 = scmp.ne.s32.totalorder %s144, %s146
      %p153 = scmp.eq.s32.totalorder %s31, 1
      %p154 = por %p152, %p153
      %p155 = scmp.ne.s32.totalorder %s146, %s147
      %p156 = scmp.eq.s32.totalorder %s31, 0
      %p157 = por %p155, %p156
      %p158 = scmp.ne.s32.totalorder %s146, %s147
      %p159 = scmp.eq.s32.totalorder %s32, 1
      %p160 = por %p158, %p159
      %p162 = scmp.ne.s32.totalorder %s147, %s161
      %p163 = scmp.eq.s32.totalorder %s32, 0
      %p164 = por %p162, %p163
      %s166 = sadd.s32 %s165, 1
      %p169 = scmp.eq.s32.totalorder %s26, 1
      %p170 = scmp.ne.s32.totalorder %s165, %s167
      %p171 = scmp.eq.s32.totalorder %s26, 0
      %p172 = por %p170, %p171
      %p173 = scmp.ne.s32.totalorder %s165, %s167
      %p174 = scmp.eq.s32.totalorder %s31, 1
      %p175 = por %p173, %p174
      %p176 = scmp.ne.s32.totalorder %s167, %s168
      %p177 = scmp.eq.s32.totalorder %s31, 0
      %p178 = por %p176, %p177
      %p179 = scmp.ne.s32.totalorder %s167, %s168
      %p180 = scmp.eq.s32.totalorder %s32, 1
      %p181 = por %p179, %p180
      %p183 = scmp.ne.s32.totalorder %s168, %s182
      %p184 = scmp.eq.s32.totalorder %s32, 0
      %p185 = por %p183, %p184
      %s187 = sadd.s32 %s186, 1
      %p190 = scmp.eq.s32.totalorder %s26, 1
      %p191 = scmp.ne.s32.totalorder %s186, %s188
      %p192 = scmp.eq.s32.totalorder %s26, 0
      %p193 = por %p191, %p192
      %p194 = scmp.ne.s32.totalorder %s186, %s188
      %p195 = scmp.eq.s32.totalorder %s31, 1
      %p196 = por %p194, %p195
      %p197 = scmp.ne.s32.totalorder %s188, %s189
      %p198 = scmp.eq.s32.totalorder %s31, 0
      %p199 = por %p197, %p198
      %p200 = scmp.ne.s32.totalorder %s188, %s189
      %p201 = scmp.eq.s32.totalorder %s32, 1
      %p202 = por %p200, %p201
      %p204 = scmp.ne.s32.totalorder %s189, %s203
      %p205 = scmp.eq.s32.totalorder %s32, 0
      %p206 = por %p204, %p205
      %s208 = sadd.s32 %s207, 1
      %p211 = scmp.eq.s32.totalorder %s26, 1
      %p212 = scmp.ne.s32.totalorder %s207, %s209
      %p213 = scmp.eq.s32.totalorder %s26, 0
      %p214 = por %p212, %p213
      %p215 = scmp.ne.s32.totalorder %s207, %s209
      %p216 = scmp.eq.s32.totalorder %s31, 1
      %p217 = por %p215, %p216
      %p218 = scmp.ne.s32.totalorder %s209, %s210
      %p219 = scmp.eq.s32.totalorder %s31, 0
      %p220 = por %p218, %p219
      %p221 = scmp.ne.s32.totalorder %s209, %s210
      %p222 = scmp.eq.s32.totalorder %s32, 1
      %p223 = por %p221, %p222
      %p225 = scmp.ne.s32.totalorder %s210, %s224
      %p226 = scmp.eq.s32.totalorder %s32, 0
      %p227 = por %p225, %p226
      %s229 = sadd.s32 %s228, 1
      %p232 = scmp.eq.s32.totalorder %s26, 1
      %p233 = scmp.ne.s32.totalorder %s228, %s230
      %p234 = scmp.eq.s32.totalorder %s26, 0
      %p235 = por %p233, %p234
      %p236 = scmp.ne.s32.totalorder %s228, %s230
      %p237 = scmp.eq.s32.totalorder %s31, 1
      %p238 = por %p236, %p237
      %p239 = scmp.ne.s32.totalorder %s230, %s231
      %p240 = scmp.eq.s32.totalorder %s31, 0
      %p241 = por %p239, %p240
      %p242 = scmp.ne.s32.totalorder %s230, %s231
      %p243 = scmp.eq.s32.totalorder %s32, 1
      %p244 = por %p242, %p243
      %p246 = scmp.ne.s32.totalorder %s231, %s245
      %p247 = scmp.eq.s32.totalorder %s32, 0
      %p248 = por %p246, %p247
      %s250 = sadd.s32 %s249, 1
      %p253 = scmp.eq.s32.totalorder %s26, 1
      %p254 = scmp.ne.s32.totalorder %s249, %s251
      %p255 = scmp.eq.s32.totalorder %s26, 0
      %p256 = por %p254, %p255
      %p257 = scmp.ne.s32.totalorder %s249, %s251
      %p258 = scmp.eq.s32.totalorder %s31, 1
      %p259 = por %p257, %p258
      %p260 = scmp.ne.s32.totalorder %s251, %s252
      %p261 = scmp.eq.s32.totalorder %s31, 0
      %p262 = por %p260, %p261
      %p263 = scmp.ne.s32.totalorder %s251, %s252
      %p264 = scmp.eq.s32.totalorder %s32, 1
      %p265 = por %p263, %p264
      %p267 = scmp.ne.s32.totalorder %s252, %s266
      %p268 = scmp.eq.s32.totalorder %s32, 0
      %p269 = por %p267, %p268
      %s271 = sadd.s32 %s270, 1
      %p274 = scmp.eq.s32.totalorder %s26, 1
      %p275 = scmp.ne.s32.totalorder %s270, %s272
      %p276 = scmp.eq.s32.totalorder %s26, 0
      %p277 = por %p275, %p276
      %p278 = scmp.ne.s32.totalorder %s270, %s272
      %p279 = scmp.eq.s32.totalorder %s31, 1
      %p280 = por %p278, %p279
      %p281 = scmp.ne.s32.totalorder %s272, %s273
      %p282 = scmp.eq.s32.totalorder %s31, 0
      %p283 = por %p281, %p282
      %p284 = scmp.ne.s32.totalorder %s272, %s273
      %p285 = scmp.eq.s32.totalorder %s32, 1
      %p286 = por %p284, %p285
      %p288 = scmp.ne.s32.totalorder %s273, %s287
      %p289 = scmp.eq.s32.totalorder %s32, 0
      %p290 = por %p288, %p289
      %s292 = sadd.s32 %s291, 1
      %p295 = scmp.eq.s32.totalorder %s26, 1
      %p296 = scmp.ne.s32.totalorder %s291, %s293
      %p297 = scmp.eq.s32.totalorder %s26, 0
      %p298 = por %p296, %p297
      %p299 = scmp.ne.s32.totalorder %s291, %s293
      %p300 = scmp.eq.s32.totalorder %s31, 1
      %p301 = por %p299, %p300
      %p302 = scmp.ne.s32.totalorder %s293, %s294
      %p303 = scmp.eq.s32.totalorder %s31, 0
      %p304 = por %p302, %p303
      %p305 = scmp.ne.s32.totalorder %s293, %s294
      %p306 = scmp.eq.s32.totalorder %s32, 1
      %p307 = por %p305, %p306
      %p309 = scmp.ne.s32.totalorder %s294, %s308
      %p310 = scmp.eq.s32.totalorder %s32, 0
      %p311 = por %p309, %p310
      %s312 = ssub.s32 %s26, %s33
      %p313 = scmp.eq.s32.totalorder %s312, 0
      %s315 = sadd.s32 %s314, 1
      %s316 = scalar_select %p313, %s314, %s315
      %p319 = pneg %p313
      %p320 = scmp.eq.s32.totalorder %s26, 1
      %p321 = por %p319, %p320
      %p322 = scmp.ne.s32.totalorder %s314, %s317
      %p323 = scmp.eq.s32.totalorder %s26, 0
      %p324 = por %p322, %p323
      %p325 = scmp.ne.s32.totalorder %s314, %s317
      %p326 = scmp.eq.s32.totalorder %s31, 1
      %p327 = por %p325, %p326
      %p328 = scmp.ne.s32.totalorder %s317, %s318
      %p329 = scmp.eq.s32.totalorder %s31, 0
      %p330 = por %p328, %p329
      %p331 = scmp.ne.s32.totalorder %s317, %s318
      %p332 = scmp.eq.s32.totalorder %s32, 1
      %p333 = por %p331, %p332
      %p335 = scmp.ne.s32.totalorder %s318, %s334
      %p336 = scmp.eq.s32.totalorder %s32, 0
      %p337 = por %p335, %p336
      %p338 = scmp.le.s32.totalorder 1, %s26
      %p339 = scmp.lt.s32.totalorder %s26, 3
      %p340 = pnand %p338, %p339
      %p341 = pneg %p340
      // Predicated region
      $region9: #{cnn_cifar_forward.1} parent=5 // pred_check
        _
      $region10: #{cnn_cifar_forward.1} parent=5 // pred_check_branch
        %343 = sbr.rel (%p340) target = $region12
      $region11: #{cnn_cifar_forward.1} parent=5 // pred_region
        %s344 = ssub.s32 %s26, 1
        // Predicated region
        $region13: #{cnn_cifar_forward.1} parent=11 // pred_check
          %p345 = pneg %p73
        $region14: #{cnn_cifar_forward.1} parent=11 // pred_check_branch
          %347 = sbr.rel (%p345) target = $region16
        $region15: #{cnn_cifar_forward.1} parent=11 // pred_region
          %s349 = ssub.s32 256, 256
          %350 = vsyncadd [#allocation10], %s349
          %s352 = sshll.u32 [#allocation9], 4
          %s353 = int_to_ptr.vmem [resolvable:$true] %s352
          %355 = dma.hbm_to_vmem [thread:$0]  %s1, 256, %s353, [#allocation10]
        $region16: #{cnn_cifar_forward.1} parent=11 // pred_fallthru
          _
        // Predicated region
        $region17: #{cnn_cifar_forward.1} parent=11 // pred_check
          %p356 = pneg %p94
        $region18: #{cnn_cifar_forward.1} parent=11 // pred_check_branch
          %358 = sbr.rel (%p356) target = $region20
        $region19: #{cnn_cifar_forward.1} parent=11 // pred_region
          _
        $region20: #{cnn_cifar_forward.1} parent=11 // pred_fallthru
          _
        // Predicated region
        $region21: #{cnn_cifar_forward.1} parent=11 // pred_check
          %p359 = pneg %p115
        $region22: #{cnn_cifar_forward.1} parent=11 // pred_check_branch
          %361 = sbr.rel (%p359) target = $region24
        $region23: #{cnn_cifar_forward.1} parent=11 // pred_region
          _
        $region24: #{cnn_cifar_forward.1} parent=11 // pred_fallthru
          _
        // Predicated region
        $region25: #{cnn_cifar_forward.1} parent=11 // pred_check
          %p362 = pneg %p136
        $region26: #{cnn_cifar_forward.1} parent=11 // pred_check_branch
          %364 = sbr.rel (%p362) target = $region28
        $region27: #{cnn_cifar_forward.1} parent=11 // pred_region
          _
        $region28: #{cnn_cifar_forward.1} parent=11 // pred_fallthru
          _
        // Predicated region
        $region29: #{cnn_cifar_forward.1} parent=11 // pred_check
          %p365 = pneg %p157
        $region30: #{cnn_cifar_forward.1} parent=11 // pred_check_branch
          %367 = sbr.rel (%p365) target = $region32
        $region31: #{cnn_cifar_forward.1} parent=11 // pred_region
          %s369 = ssub.s32 10240, 10240
          %370 = vsyncadd [#allocation13], %s369
          %s371 = sshll.u32 [#allocation12], 4
          %s372 = int_to_ptr.vmem [resolvable:$true] %s371
          %377 = dma.hbm_to_vmem [thread:$0]  %s5, 10240, %s372, [#allocation13], 512, 512, 32
        $region32: #{cnn_cifar_forward.1} parent=11 // pred_fallthru
          _
        // Predicated region
        $region33: #{cnn_cifar_forward.1} parent=11 // pred_check
          %p378 = pneg %p178
        $region34: #{cnn_cifar_forward.1} parent=11 // pred_check_branch
          %380 = sbr.rel (%p378) target = $region36
        $region35: #{cnn_cifar_forward.1} parent=11 // pred_region
          %s382 = ssub.s32 1024, 1024
          %383 = vsyncadd [#allocation13], %s382
          %s384 = sshll.u32 [#allocation14], 4
          %s385 = int_to_ptr.vmem [resolvable:$true] %s384
          %390 = dma.hbm_to_vmem [thread:$0]  %s6, 1024, %s385, [#allocation13], 512, 512, 32
        $region36: #{cnn_cifar_forward.1} parent=11 // pred_fallthru
          _
        // Predicated region
        $region37: #{cnn_cifar_forward.1} parent=11 // pred_check
          %p391 = pneg %p199
        $region38: #{cnn_cifar_forward.1} parent=11 // pred_check_branch
          %393 = sbr.rel (%p391) target = $region40
        $region39: #{cnn_cifar_forward.1} parent=11 // pred_region
          _
        $region40: #{cnn_cifar_forward.1} parent=11 // pred_fallthru
          _
        // Predicated region
        $region41: #{cnn_cifar_forward.1} parent=11 // pred_check
          %p394 = pneg %p220
        $region42: #{cnn_cifar_forward.1} parent=11 // pred_check_branch
          %396 = sbr.rel (%p394) target = $region44
        $region43: #{cnn_cifar_forward.1} parent=11 // pred_region
          %s398 = ssub.s32 16, 16
          %399 = vsyncadd [#allocation16], %s398
          %s401 = sshll.u32 [#allocation15], 4
          %s402 = int_to_ptr.vmem [resolvable:$true] %s401
          %404 = dma.hbm_to_vmem [thread:$0]  %s8, 16, %s402, [#allocation16]
        $region44: #{cnn_cifar_forward.1} parent=11 // pred_fallthru
          _
        // Predicated region
        $region45: #{cnn_cifar_forward.1} parent=11 // pred_check
          %p405 = pneg %p241
        $region46: #{cnn_cifar_forward.1} parent=11 // pred_check_branch
          %407 = sbr.rel (%p405) target = $region48
        $region47: #{cnn_cifar_forward.1} parent=11 // pred_region
          _
        $region48: #{cnn_cifar_forward.1} parent=11 // pred_fallthru
          _
        // Predicated region
        $region49: #{cnn_cifar_forward.1} parent=11 // pred_check
          %p408 = pneg %p262
        $region50: #{cnn_cifar_forward.1} parent=11 // pred_check_branch
          %410 = sbr.rel (%p408) target = $region52
        $region51: #{cnn_cifar_forward.1} parent=11 // pred_region
          %s412 = ssub.s32 16, 16
          %413 = vsyncadd [#allocation16], %s412
          %s415 = sshll.u32 [#allocation17], 4
          %s416 = int_to_ptr.vmem [resolvable:$true] %s415
          %418 = dma.hbm_to_vmem [thread:$0]  %s10, 16, %s416, [#allocation16]
        $region52: #{cnn_cifar_forward.1} parent=11 // pred_fallthru
          _
        // Predicated region
        $region53: #{cnn_cifar_forward.1} parent=11 // pred_check
          %p419 = pneg %p283
        $region54: #{cnn_cifar_forward.1} parent=11 // pred_check_branch
          %421 = sbr.rel (%p419) target = $region56
        $region55: #{cnn_cifar_forward.1} parent=11 // pred_region
          %s423 = ssub.s32 1408, 1408
          %424 = vsyncadd [#allocation19], %s423
          %s425 = sshll.u32 [#allocation18], 4
          %s426 = int_to_ptr.vmem [resolvable:$true] %s425
          %431 = dma.hbm_to_vmem [thread:$0]  %s11, 1408, %s426, [#allocation19], 128, 128, 8
        $region56: #{cnn_cifar_forward.1} parent=11 // pred_fallthru
          _
        // Predicated region
        $region57: #{cnn_cifar_forward.1} parent=11 // pred_check
          %p432 = pneg %p304
        $region58: #{cnn_cifar_forward.1} parent=11 // pred_check_branch
          %434 = sbr.rel (%p432) target = $region60
        $region59: #{cnn_cifar_forward.1} parent=11 // pred_region
          %s436 = ssub.s32 16, 16
          %437 = vsyncadd [#allocation19], %s436
          %s439 = sshll.u32 [#allocation20], 4
          %s440 = int_to_ptr.vmem [resolvable:$true] %s439
          %442 = dma.hbm_to_vmem [thread:$0]  %s12, 16, %s440, [#allocation19]
        $region60: #{cnn_cifar_forward.1} parent=11 // pred_fallthru
          _
      $region12: #{cnn_cifar_forward.1} parent=5 // pred_fallthru
        _
      %p443 = scmp.lt.s32.totalorder %s26, 2
      // Predicated region
      $region61: #{cnn_cifar_forward.1} parent=5 // pred_check
        %p444 = pneg %p443
      $region62: #{cnn_cifar_forward.1} parent=5 // pred_check_branch
        %446 = sbr.rel (%p444) target = $region64
      $region63: #{cnn_cifar_forward.1} parent=5 // pred_region
        // Predicated region
        $region65: #{cnn_cifar_forward.1} parent=63 // pred_check
          %p447 = pneg %p46
        $region66: #{cnn_cifar_forward.1} parent=63 // pred_check_branch
          %449 = sbr.rel (%p447) target = $region68
        $region67: #{cnn_cifar_forward.1} parent=63 // pred_region
          %p450 = scmp.lt.s32.totalorder %s26, 1
          %s451 = scalar_select %p450, %s26, 1
          %s452 = smul.addr %s451, 8
          %s453 = smul.addr %s452, 4
          %s454 = scalar_lea.vmem %s0, %s453
        $region68: #{cnn_cifar_forward.1} parent=63 // pred_fallthru
          _
      $region64: #{cnn_cifar_forward.1} parent=5 // pred_fallthru
        _
      %p455 = scmp.le.s32.totalorder 1, %s26
      %p456 = scmp.lt.s32.totalorder %s26, 3
      %p457 = pnand %p455, %p456
      %p458 = pneg %p457
      // Predicated region
      $region69: #{cnn_cifar_forward.1} parent=5 // pred_check
        _
      $region70: #{cnn_cifar_forward.1} parent=5 // pred_check_branch
        %460 = sbr.rel (%p457) target = $region72
      $region71: #{cnn_cifar_forward.1} parent=5 // pred_region
        %s461 = ssub.s32 %s26, 1
        // Predicated region
        $region73: #{cnn_cifar_forward.1} parent=71 // pred_check
          %p462 = pneg %p73
        $region74: #{cnn_cifar_forward.1} parent=71 // pred_check_branch
          %464 = sbr.rel (%p462) target = $region76
        $region75: #{cnn_cifar_forward.1} parent=71 // pred_region
          %465 = dma.done [#allocation10], 256
        $region76: #{cnn_cifar_forward.1} parent=71 // pred_fallthru
          _
        // Predicated region
        $region77: #{cnn_cifar_forward.1} parent=71 // pred_check
          %p466 = pneg %p157
        $region78: #{cnn_cifar_forward.1} parent=71 // pred_check_branch
          %468 = sbr.rel (%p466) target = $region80
        $region79: #{cnn_cifar_forward.1} parent=71 // pred_region
          %469 = dma.done [#allocation13], 10240
        $region80: #{cnn_cifar_forward.1} parent=71 // pred_fallthru
          _
        // Predicated region
        $region81: #{cnn_cifar_forward.1} parent=71 // pred_check
          %p470 = pneg %p178
        $region82: #{cnn_cifar_forward.1} parent=71 // pred_check_branch
          %472 = sbr.rel (%p470) target = $region84
        $region83: #{cnn_cifar_forward.1} parent=71 // pred_region
          %473 = dma.done [#allocation13], 1024
        $region84: #{cnn_cifar_forward.1} parent=71 // pred_fallthru
          _
        // Predicated region
        $region85: #{cnn_cifar_forward.1} parent=71 // pred_check
          %p474 = pneg %p220
        $region86: #{cnn_cifar_forward.1} parent=71 // pred_check_branch
          %476 = sbr.rel (%p474) target = $region88
        $region87: #{cnn_cifar_forward.1} parent=71 // pred_region
          %477 = dma.done [#allocation16], 16
        $region88: #{cnn_cifar_forward.1} parent=71 // pred_fallthru
          _
        // Predicated region
        $region89: #{cnn_cifar_forward.1} parent=71 // pred_check
          %p478 = pneg %p262
        $region90: #{cnn_cifar_forward.1} parent=71 // pred_check_branch
          %480 = sbr.rel (%p478) target = $region92
        $region91: #{cnn_cifar_forward.1} parent=71 // pred_region
          %481 = dma.done [#allocation16], 16
        $region92: #{cnn_cifar_forward.1} parent=71 // pred_fallthru
          _
        // Predicated region
        $region93: #{cnn_cifar_forward.1} parent=71 // pred_check
          %p482 = pneg %p283
        $region94: #{cnn_cifar_forward.1} parent=71 // pred_check_branch
          %484 = sbr.rel (%p482) target = $region96
        $region95: #{cnn_cifar_forward.1} parent=71 // pred_region
          %485 = dma.done [#allocation19], 1408
        $region96: #{cnn_cifar_forward.1} parent=71 // pred_fallthru
          _
        // Predicated region
        $region97: #{cnn_cifar_forward.1} parent=71 // pred_check
          %p486 = pneg %p304
        $region98: #{cnn_cifar_forward.1} parent=71 // pred_check_branch
          %488 = sbr.rel (%p486) target = $region100
        $region99: #{cnn_cifar_forward.1} parent=71 // pred_region
          %489 = dma.done [#allocation19], 16
        $region100: #{cnn_cifar_forward.1} parent=71 // pred_fallthru
          _
        %p490 = scmp.lt.s32.totalorder %s31, 1
        %s491 = scalar_select %p490, %s31, 1
        %s492 = smul.addr %s491, 8
        %s493 = smul.addr %s492, 4
        %s494 = scalar_lea.vmem %s0, %s493
        %p495 = pneg %p52
        %p496 = pneg %p49
        %p497 = pneg %p73
        %p498 = pneg %p70
        %p499 = pneg %p94
        %p500 = pneg %p91
        %p501 = pneg %p115
        %p502 = pneg %p112
        %p503 = pneg %p136
        %p504 = pneg %p133
        %p505 = pneg %p157
        %p506 = pneg %p154
        %p507 = pneg %p178
        %p508 = pneg %p175
        %p509 = pneg %p199
        %p510 = pneg %p196
        %p511 = pneg %p220
        %p512 = pneg %p217
        %p513 = pneg %p241
        %p514 = pneg %p238
        %p515 = pneg %p262
        %p516 = pneg %p259
        %p517 = pneg %p283
        %p518 = pneg %p280
        %p519 = pneg %p304
        %p520 = pneg %p301
        %p521 = pneg %p330
        %p522 = pneg %p327
        %s523 = sand.u32 %s317, 1
        %s524 = scalar_lea.sflag [#allocation11], %s523
        %s525 = sand.u32 %s317, 1
        %s526 = scalar_lea.vmem [#allocation21], %s525
        %p527 = scmp.lt.s32.totalorder %s31, 1
        %s528 = scalar_select %p527, %s31, 1
        %s529 = smul.addr %s528, 8
        %s530 = smul.addr %s529, 4
        %s531 = scalar_lea.vmem %s0, %s530
        %532 = vst [vmem:[#allocation2] sm:$0xff] 0.0
        %533 = vst [vmem:[#allocation2 + $0x8] sm:$0xff] 0.0
        %534 = vst [vmem:[#allocation2 + $0x10] sm:$0xff] 0.0
        %535 = vst [vmem:[#allocation2 + $0x18] sm:$0xff] 0.0
        %536 = vst [vmem:[#allocation2 + $0x20] sm:$0xff] 0.0
        %537 = vst [vmem:[#allocation2 + $0x28] sm:$0xff] 0.0
        %538 = vst [vmem:[#allocation2 + $0x30] sm:$0xff] 0.0
        %539 = vst [vmem:[#allocation2 + $0x38] sm:$0xff] 0.0
        %540 = vst [vmem:[#allocation2 + $0x40] sm:$0xff] 0.0
        %541 = vst [vmem:[#allocation2 + $0x48] sm:$0xff] 0.0
        %v542 = vld [vmem:[%s531] sm:$0x77]
        %v543 = vld [vmem:[%s531 + $0x8] sm:$0x77]
        %v544 = vld [vmem:[%s531 + $0x10] sm:$0x77]
        %v545 = vld [vmem:[%s531 + $0x18] sm:$0x77]
        %v550 = vcombine.high %v542, %v542
        %v551 = vcombine.high %v543, %v543
        %v552 = vcombine.high %v544, %v544
        %v553 = vcombine.high %v545, %v545
        %558 = vst [vmem:[#allocation2] sm:$0x7] %v542
        %559 = vst [vmem:[#allocation2 + $0x8] sm:$0x7] %v550
        %560 = vst [vmem:[#allocation2 + $0x10] sm:$0x7] %v543
        %561 = vst [vmem:[#allocation2 + $0x18] sm:$0x7] %v551
        %562 = vst [vmem:[#allocation2 + $0x20] sm:$0x7] %v544
        %563 = vst [vmem:[#allocation2 + $0x28] sm:$0x7] %v552
        %564 = vst [vmem:[#allocation2 + $0x30] sm:$0x7] %v545
        %565 = vst [vmem:[#allocation2 + $0x38] sm:$0x7] %v553
        %v566 = vld [vmem:[#allocation2] sm:$0xff]
        %v567 = vld [vmem:[#allocation2 + $0x8] sm:$0xff]
        %v568 = vld [vmem:[#allocation2 + $0x10] sm:$0xff]
        %v569 = vld [vmem:[#allocation2 + $0x18] sm:$0xff]
        %v570 = vld [vmem:[#allocation2 + $0x20] sm:$0xff]
        %v571 = vld [vmem:[#allocation2 + $0x28] sm:$0xff]
        %v572 = vld [vmem:[#allocation2 + $0x30] sm:$0xff]
        %v573 = vld [vmem:[#allocation2 + $0x38] sm:$0xff]
        %574 = vst [vmem:[#allocation3] sm:$0xff] %v566
        %575 = vst [vmem:[#allocation3 + $0x8] sm:$0xff] %v567
        %576 = vst [vmem:[#allocation3 + $0x10] sm:$0xff] %v568
        %577 = vst [vmem:[#allocation3 + $0x18] sm:$0xff] %v569
        %578 = vst [vmem:[#allocation3 + $0x20] sm:$0xff] %v570
        %579 = vst [vmem:[#allocation3 + $0x28] sm:$0xff] %v571
        %580 = vst [vmem:[#allocation3 + $0x30] sm:$0xff] %v572
        %581 = vst [vmem:[#allocation3 + $0x38] sm:$0xff] %v573
        %v582 = vld [vmem:[#allocation2] sm:$0xff]
        %v583 = vld [vmem:[#allocation2 + $0x8] sm:$0xff]
        %v584 = vld [vmem:[#allocation2 + $0x10] sm:$0xff]
        %v585 = vld [vmem:[#allocation2 + $0x18] sm:$0xff]
        %v586 = vld [vmem:[#allocation2 + $0x20] sm:$0xff]
        %v587 = vld [vmem:[#allocation2 + $0x28] sm:$0xff]
        %v588 = vld [vmem:[#allocation2 + $0x30] sm:$0xff]
        %v589 = vld [vmem:[#allocation2 + $0x38] sm:$0xff]
        %v590 = vld [vmem:[#allocation2 + $0x40] sm:$0xff]
        %600 = vrot.lane.b32.xlu0 %v582, 127
        %v601 = vpop.permute.xlu0 %600
        %602 = vrot.lane.b32.xlu0 %v583, 127
        %v603 = vpop.permute.xlu0 %602
        %604 = vrot.lane.b32.xlu0 %v584, 127
        %v605 = vpop.permute.xlu0 %604
        %606 = vrot.lane.b32.xlu0 %v585, 127
        %v607 = vpop.permute.xlu0 %606
        %608 = vrot.lane.b32.xlu0 %v586, 127
        %v609 = vpop.permute.xlu0 %608
        %610 = vrot.lane.b32.xlu0 %v587, 127
        %v611 = vpop.permute.xlu0 %610
        %612 = vrot.lane.b32.xlu0 %v588, 127
        %v613 = vpop.permute.xlu0 %612
        %614 = vrot.lane.b32.xlu0 %v589, 127
        %v615 = vpop.permute.xlu0 %614
        %616 = vrot.lane.b32.xlu0 %v590, 127
        %v617 = vpop.permute.xlu0 %616
        %vm618 = vcmask 1039360
        %v619 = vsel %vm618, %v601, %v603
        %v620 = vsel %vm618, %v603, %v605
        %v621 = vsel %vm618, %v605, %v607
        %v622 = vsel %vm618, %v607, %v609
        %v623 = vsel %vm618, %v609, %v611
        %v624 = vsel %vm618, %v611, %v613
        %v625 = vsel %vm618, %v613, %v615
        %v626 = vsel %vm618, %v615, %v617
        %635 = vst [vmem:[#allocation3 + $0x40] sm:$0xff] %v619
        %636 = vst [vmem:[#allocation3 + $0x48] sm:$0xff] %v620
        %637 = vst [vmem:[#allocation3 + $0x50] sm:$0xff] %v621
        %638 = vst [vmem:[#allocation3 + $0x58] sm:$0xff] %v622
        %639 = vst [vmem:[#allocation3 + $0x60] sm:$0xff] %v623
        %640 = vst [vmem:[#allocation3 + $0x68] sm:$0xff] %v624
        %641 = vst [vmem:[#allocation3 + $0x70] sm:$0xff] %v625
        %642 = vst [vmem:[#allocation3 + $0x78] sm:$0xff] %v626
        %v643 = vld [vmem:[#allocation2] sm:$0xff]
        %v644 = vld [vmem:[#allocation2 + $0x8] sm:$0xff]
        %v645 = vld [vmem:[#allocation2 + $0x10] sm:$0xff]
        %v646 = vld [vmem:[#allocation2 + $0x18] sm:$0xff]
        %v647 = vld [vmem:[#allocation2 + $0x20] sm:$0xff]
        %v648 = vld [vmem:[#allocation2 + $0x28] sm:$0xff]
        %v649 = vld [vmem:[#allocation2 + $0x30] sm:$0xff]
        %v650 = vld [vmem:[#allocation2 + $0x38] sm:$0xff]
        %v651 = vld [vmem:[#allocation2 + $0x40] sm:$0xff]
        %661 = vrot.lane.b32.xlu0 %v643, 126
        %v662 = vpop.permute.xlu0 %661
        %663 = vrot.lane.b32.xlu0 %v644, 126
        %v664 = vpop.permute.xlu0 %663
        %665 = vrot.lane.b32.xlu0 %v645, 126
        %v666 = vpop.permute.xlu0 %665
        %667 = vrot.lane.b32.xlu0 %v646, 126
        %v668 = vpop.permute.xlu0 %667
        %669 = vrot.lane.b32.xlu0 %v647, 126
        %v670 = vpop.permute.xlu0 %669
        %671 = vrot.lane.b32.xlu0 %v648, 126
        %v672 = vpop.permute.xlu0 %671
        %673 = vrot.lane.b32.xlu0 %v649, 126
        %v674 = vpop.permute.xlu0 %673
        %675 = vrot.lane.b32.xlu0 %v650, 126
        %v676 = vpop.permute.xlu0 %675
        %677 = vrot.lane.b32.xlu0 %v651, 126
        %v678 = vpop.permute.xlu0 %677
        %vm679 = vcmask 1031168
        %v680 = vsel %vm679, %v662, %v664
        %v681 = vsel %vm679, %v664, %v666
        %v682 = vsel %vm679, %v666, %v668
        %v683 = vsel %vm679, %v668, %v670
        %v684 = vsel %vm679, %v670, %v672
        %v685 = vsel %vm679, %v672, %v674
        %v686 = vsel %vm679, %v674, %v676
        %v687 = vsel %vm679, %v676, %v678
        %696 = vst [vmem:[#allocation3 + $0x80] sm:$0xff] %v680
        %697 = vst [vmem:[#allocation3 + $0x88] sm:$0xff] %v681
        %698 = vst [vmem:[#allocation3 + $0x90] sm:$0xff] %v682
        %699 = vst [vmem:[#allocation3 + $0x98] sm:$0xff] %v683
        %700 = vst [vmem:[#allocation3 + $0xa0] sm:$0xff] %v684
        %701 = vst [vmem:[#allocation3 + $0xa8] sm:$0xff] %v685
        %702 = vst [vmem:[#allocation3 + $0xb0] sm:$0xff] %v686
        %703 = vst [vmem:[#allocation3 + $0xb8] sm:$0xff] %v687
        %v704 = vld [vmem:[#allocation2] sm:$0xff]
        %v705 = vld [vmem:[#allocation2 + $0x8] sm:$0xff]
        %v706 = vld [vmem:[#allocation2 + $0x10] sm:$0xff]
        %v707 = vld [vmem:[#allocation2 + $0x18] sm:$0xff]
        %v708 = vld [vmem:[#allocation2 + $0x20] sm:$0xff]
        %v709 = vld [vmem:[#allocation2 + $0x28] sm:$0xff]
        %v710 = vld [vmem:[#allocation2 + $0x30] sm:$0xff]
        %v711 = vld [vmem:[#allocation2 + $0x38] sm:$0xff]
        %v712 = vld [vmem:[#allocation2 + $0x40] sm:$0xff]
        %722 = vrot.lane.b32.xlu0 %v704, 125
        %v723 = vpop.permute.xlu0 %722
        %724 = vrot.lane.b32.xlu0 %v705, 125
        %v725 = vpop.permute.xlu0 %724
        %726 = vrot.lane.b32.xlu0 %v706, 125
        %v727 = vpop.permute.xlu0 %726
        %728 = vrot.lane.b32.xlu0 %v707, 125
        %v729 = vpop.permute.xlu0 %728
        %730 = vrot.lane.b32.xlu0 %v708, 125
        %v731 = vpop.permute.xlu0 %730
        %732 = vrot.lane.b32.xlu0 %v709, 125
        %v733 = vpop.permute.xlu0 %732
        %734 = vrot.lane.b32.xlu0 %v710, 125
        %v735 = vpop.permute.xlu0 %734
        %736 = vrot.lane.b32.xlu0 %v711, 125
        %v737 = vpop.permute.xlu0 %736
        %738 = vrot.lane.b32.xlu0 %v712, 125
        %v739 = vpop.permute.xlu0 %738
        %vm740 = vcmask 1022976
        %v741 = vsel %vm740, %v723, %v725
        %v742 = vsel %vm740, %v725, %v727
        %v743 = vsel %vm740, %v727, %v729
        %v744 = vsel %vm740, %v729, %v731
        %v745 = vsel %vm740, %v731, %v733
        %v746 = vsel %vm740, %v733, %v735
        %v747 = vsel %vm740, %v735, %v737
        %v748 = vsel %vm740, %v737, %v739
        %757 = vst [vmem:[#allocation3 + $0xc0] sm:$0xff] %v741
        %758 = vst [vmem:[#allocation3 + $0xc8] sm:$0xff] %v742
        %759 = vst [vmem:[#allocation3 + $0xd0] sm:$0xff] %v743
        %760 = vst [vmem:[#allocation3 + $0xd8] sm:$0xff] %v744
        %761 = vst [vmem:[#allocation3 + $0xe0] sm:$0xff] %v745
        %762 = vst [vmem:[#allocation3 + $0xe8] sm:$0xff] %v746
        %763 = vst [vmem:[#allocation3 + $0xf0] sm:$0xff] %v747
        %764 = vst [vmem:[#allocation3 + $0xf8] sm:$0xff] %v748
        %v765 = vld [vmem:[#allocation2] sm:$0xff]
        %v766 = vld [vmem:[#allocation2 + $0x8] sm:$0xff]
        %v767 = vld [vmem:[#allocation2 + $0x10] sm:$0xff]
        %v768 = vld [vmem:[#allocation2 + $0x18] sm:$0xff]
        %v769 = vld [vmem:[#allocation2 + $0x20] sm:$0xff]
        %v770 = vld [vmem:[#allocation2 + $0x28] sm:$0xff]
        %v771 = vld [vmem:[#allocation2 + $0x30] sm:$0xff]
        %v772 = vld [vmem:[#allocation2 + $0x38] sm:$0xff]
        %v773 = vld [vmem:[#allocation2 + $0x40] sm:$0xff]
        %783 = vrot.lane.b32.xlu0 %v765, 124
        %v784 = vpop.permute.xlu0 %783
        %785 = vrot.lane.b32.xlu0 %v766, 124
        %v786 = vpop.permute.xlu0 %785
        %787 = vrot.lane.b32.xlu0 %v767, 124
        %v788 = vpop.permute.xlu0 %787
        %789 = vrot.lane.b32.xlu0 %v768, 124
        %v790 = vpop.permute.xlu0 %789
        %791 = vrot.lane.b32.xlu0 %v769, 124
        %v792 = vpop.permute.xlu0 %791
        %793 = vrot.lane.b32.xlu0 %v770, 124
        %v794 = vpop.permute.xlu0 %793
        %795 = vrot.lane.b32.xlu0 %v771, 124
        %v796 = vpop.permute.xlu0 %795
        %797 = vrot.lane.b32.xlu0 %v772, 124
        %v798 = vpop.permute.xlu0 %797
        %799 = vrot.lane.b32.xlu0 %v773, 124
        %v800 = vpop.permute.xlu0 %799
        %vm801 = vcmask 1014784
        %v802 = vsel %vm801, %v784, %v786
        %v803 = vsel %vm801, %v786, %v788
        %v804 = vsel %vm801, %v788, %v790
        %v805 = vsel %vm801, %v790, %v792
        %v806 = vsel %vm801, %v792, %v794
        %v807 = vsel %vm801, %v794, %v796
        %v808 = vsel %vm801, %v796, %v798
        %v809 = vsel %vm801, %v798, %v800
        %818 = vst [vmem:[#allocation3 + $0x100] sm:$0xff] %v802
        %819 = vst [vmem:[#allocation3 + $0x108] sm:$0xff] %v803
        %820 = vst [vmem:[#allocation3 + $0x110] sm:$0xff] %v804
        %821 = vst [vmem:[#allocation3 + $0x118] sm:$0xff] %v805
        %822 = vst [vmem:[#allocation3 + $0x120] sm:$0xff] %v806
        %823 = vst [vmem:[#allocation3 + $0x128] sm:$0xff] %v807
        %824 = vst [vmem:[#allocation3 + $0x130] sm:$0xff] %v808
        %825 = vst [vmem:[#allocation3 + $0x138] sm:$0xff] %v809
        %v826 = vld [vmem:[#allocation2] sm:$0xff]
        %v827 = vld [vmem:[#allocation2 + $0x8] sm:$0xff]
        %v828 = vld [vmem:[#allocation2 + $0x10] sm:$0xff]
        %v829 = vld [vmem:[#allocation2 + $0x18] sm:$0xff]
        %v830 = vld [vmem:[#allocation2 + $0x20] sm:$0xff]
        %v831 = vld [vmem:[#allocation2 + $0x28] sm:$0xff]
        %v832 = vld [vmem:[#allocation2 + $0x30] sm:$0xff]
        %v833 = vld [vmem:[#allocation2 + $0x38] sm:$0xff]
        %v834 = vld [vmem:[#allocation2 + $0x40] sm:$0xff]
        %844 = vrot.lane.b32.xlu0 %v826, 96
        %v845 = vpop.permute.xlu0 %844
        %846 = vrot.lane.b32.xlu0 %v827, 96
        %v847 = vpop.permute.xlu0 %846
        %848 = vrot.lane.b32.xlu0 %v828, 96
        %v849 = vpop.permute.xlu0 %848
        %850 = vrot.lane.b32.xlu0 %v829, 96
        %v851 = vpop.permute.xlu0 %850
        %852 = vrot.lane.b32.xlu0 %v830, 96
        %v853 = vpop.permute.xlu0 %852
        %854 = vrot.lane.b32.xlu0 %v831, 96
        %v855 = vpop.permute.xlu0 %854
        %856 = vrot.lane.b32.xlu0 %v832, 96
        %v857 = vpop.permute.xlu0 %856
        %858 = vrot.lane.b32.xlu0 %v833, 96
        %v859 = vpop.permute.xlu0 %858
        %860 = vrot.lane.b32.xlu0 %v834, 96
        %v861 = vpop.permute.xlu0 %860
        %vm862 = vcmask 785408
        %v863 = vsel %vm862, %v845, %v847
        %v864 = vsel %vm862, %v847, %v849
        %v865 = vsel %vm862, %v849, %v851
        %v866 = vsel %vm862, %v851, %v853
        %v867 = vsel %vm862, %v853, %v855
        %v868 = vsel %vm862, %v855, %v857
        %v869 = vsel %vm862, %v857, %v859
        %v870 = vsel %vm862, %v859, %v861
        %879 = vst [vmem:[#allocation3 + $0x140] sm:$0xff] %v863
        %880 = vst [vmem:[#allocation3 + $0x148] sm:$0xff] %v864
        %881 = vst [vmem:[#allocation3 + $0x150] sm:$0xff] %v865
        %882 = vst [vmem:[#allocation3 + $0x158] sm:$0xff] %v866
        %883 = vst [vmem:[#allocation3 + $0x160] sm:$0xff] %v867
        %884 = vst [vmem:[#allocation3 + $0x168] sm:$0xff] %v868
        %885 = vst [vmem:[#allocation3 + $0x170] sm:$0xff] %v869
        %886 = vst [vmem:[#allocation3 + $0x178] sm:$0xff] %v870
        %v887 = vld [vmem:[#allocation2] sm:$0xff]
        %v888 = vld [vmem:[#allocation2 + $0x8] sm:$0xff]
        %v889 = vld [vmem:[#allocation2 + $0x10] sm:$0xff]
        %v890 = vld [vmem:[#allocation2 + $0x18] sm:$0xff]
        %v891 = vld [vmem:[#allocation2 + $0x20] sm:$0xff]
        %v892 = vld [vmem:[#allocation2 + $0x28] sm:$0xff]
        %v893 = vld [vmem:[#allocation2 + $0x30] sm:$0xff]
        %v894 = vld [vmem:[#allocation2 + $0x38] sm:$0xff]
        %v895 = vld [vmem:[#allocation2 + $0x40] sm:$0xff]
        %905 = vrot.lane.b32.xlu0 %v887, 95
        %v906 = vpop.permute.xlu0 %905
        %907 = vrot.lane.b32.xlu0 %v888, 95
        %v908 = vpop.permute.xlu0 %907
        %909 = vrot.lane.b32.xlu0 %v889, 95
        %v910 = vpop.permute.xlu0 %909
        %911 = vrot.lane.b32.xlu0 %v890, 95
        %v912 = vpop.permute.xlu0 %911
        %913 = vrot.lane.b32.xlu0 %v891, 95
        %v914 = vpop.permute.xlu0 %913
        %915 = vrot.lane.b32.xlu0 %v892, 95
        %v916 = vpop.permute.xlu0 %915
        %917 = vrot.lane.b32.xlu0 %v893, 95
        %v918 = vpop.permute.xlu0 %917
        %919 = vrot.lane.b32.xlu0 %v894, 95
        %v920 = vpop.permute.xlu0 %919
        %921 = vrot.lane.b32.xlu0 %v895, 95
        %v922 = vpop.permute.xlu0 %921
        %vm923 = vcmask 777216
        %v924 = vsel %vm923, %v906, %v908
        %v925 = vsel %vm923, %v908, %v910
        %v926 = vsel %vm923, %v910, %v912
        %v927 = vsel %vm923, %v912, %v914
        %v928 = vsel %vm923, %v914, %v916
        %v929 = vsel %vm923, %v916, %v918
        %v930 = vsel %vm923, %v918, %v920
        %v931 = vsel %vm923, %v920, %v922
        %940 = vst [vmem:[#allocation3 + $0x180] sm:$0xff] %v924
        %941 = vst [vmem:[#allocation3 + $0x188] sm:$0xff] %v925
        %942 = vst [vmem:[#allocation3 + $0x190] sm:$0xff] %v926
        %943 = vst [vmem:[#allocation3 + $0x198] sm:$0xff] %v927
        %944 = vst [vmem:[#allocation3 + $0x1a0] sm:$0xff] %v928
        %945 = vst [vmem:[#allocation3 + $0x1a8] sm:$0xff] %v929
        %946 = vst [vmem:[#allocation3 + $0x1b0] sm:$0xff] %v930
        %947 = vst [vmem:[#allocation3 + $0x1b8] sm:$0xff] %v931
        %v948 = vld [vmem:[#allocation2] sm:$0xff]
        %v949 = vld [vmem:[#allocation2 + $0x8] sm:$0xff]
        %v950 = vld [vmem:[#allocation2 + $0x10] sm:$0xff]
        %v951 = vld [vmem:[#allocation2 + $0x18] sm:$0xff]
        %v952 = vld [vmem:[#allocation2 + $0x20] sm:$0xff]
        %v953 = vld [vmem:[#allocation2 + $0x28] sm:$0xff]
        %v954 = vld [vmem:[#allocation2 + $0x30] sm:$0xff]
        %v955 = vld [vmem:[#allocation2 + $0x38] sm:$0xff]
        %v956 = vld [vmem:[#allocation2 + $0x40] sm:$0xff]
        %966 = vrot.lane.b32.xlu0 %v948, 94
        %v967 = vpop.permute.xlu0 %966
        %968 = vrot.lane.b32.xlu0 %v949, 94
        %v969 = vpop.permute.xlu0 %968
        %970 = vrot.lane.b32.xlu0 %v950, 94
        %v971 = vpop.permute.xlu0 %970
        %972 = vrot.lane.b32.xlu0 %v951, 94
        %v973 = vpop.permute.xlu0 %972
        %974 = vrot.lane.b32.xlu0 %v952, 94
        %v975 = vpop.permute.xlu0 %974
        %976 = vrot.lane.b32.xlu0 %v953, 94
        %v977 = vpop.permute.xlu0 %976
        %978 = vrot.lane.b32.xlu0 %v954, 94
        %v979 = vpop.permute.xlu0 %978
        %980 = vrot.lane.b32.xlu0 %v955, 94
        %v981 = vpop.permute.xlu0 %980
        %982 = vrot.lane.b32.xlu0 %v956, 94
        %v983 = vpop.permute.xlu0 %982
        %vm984 = vcmask 769024
        %v985 = vsel %vm984, %v967, %v969
        %v986 = vsel %vm984, %v969, %v971
        %v987 = vsel %vm984, %v971, %v973
        %v988 = vsel %vm984, %v973, %v975
        %v989 = vsel %vm984, %v975, %v977
        %v990 = vsel %vm984, %v977, %v979
        %v991 = vsel %vm984, %v979, %v981
        %v992 = vsel %vm984, %v981, %v983
        %1001 = vst [vmem:[#allocation3 + $0x1c0] sm:$0xff] %v985
        %1002 = vst [vmem:[#allocation3 + $0x1c8] sm:$0xff] %v986
        %1003 = vst [vmem:[#allocation3 + $0x1d0] sm:$0xff] %v987
        %1004 = vst [vmem:[#allocation3 + $0x1d8] sm:$0xff] %v988
        %1005 = vst [vmem:[#allocation3 + $0x1e0] sm:$0xff] %v989
        %1006 = vst [vmem:[#allocation3 + $0x1e8] sm:$0xff] %v990
        %1007 = vst [vmem:[#allocation3 + $0x1f0] sm:$0xff] %v991
        %1008 = vst [vmem:[#allocation3 + $0x1f8] sm:$0xff] %v992
        %v1009 = vld [vmem:[#allocation2] sm:$0xff]
        %v1010 = vld [vmem:[#allocation2 + $0x8] sm:$0xff]
        %v1011 = vld [vmem:[#allocation2 + $0x10] sm:$0xff]
        %v1012 = vld [vmem:[#allocation2 + $0x18] sm:$0xff]
        %v1013 = vld [vmem:[#allocation2 + $0x20] sm:$0xff]
        %v1014 = vld [vmem:[#allocation2 + $0x28] sm:$0xff]
        %v1015 = vld [vmem:[#allocation2 + $0x30] sm:$0xff]
        %v1016 = vld [vmem:[#allocation2 + $0x38] sm:$0xff]
        %v1017 = vld [vmem:[#allocation2 + $0x40] sm:$0xff]
        %1027 = vrot.lane.b32.xlu0 %v1009, 93
        %v1028 = vpop.permute.xlu0 %1027
        %1029 = vrot.lane.b32.xlu0 %v1010, 93
        %v1030 = vpop.permute.xlu0 %1029
        %1031 = vrot.lane.b32.xlu0 %v1011, 93
        %v1032 = vpop.permute.xlu0 %1031
        %1033 = vrot.lane.b32.xlu0 %v1012, 93
        %v1034 = vpop.permute.xlu0 %1033
        %1035 = vrot.lane.b32.xlu0 %v1013, 93
        %v1036 = vpop.permute.xlu0 %1035
        %1037 = vrot.lane.b32.xlu0 %v1014, 93
        %v1038 = vpop.permute.xlu0 %1037
        %1039 = vrot.lane.b32.xlu0 %v1015, 93
        %v1040 = vpop.permute.xlu0 %1039
        %1041 = vrot.lane.b32.xlu0 %v1016, 93
        %v1042 = vpop.permute.xlu0 %1041
        %1043 = vrot.lane.b32.xlu0 %v1017, 93
        %v1044 = vpop.permute.xlu0 %1043
        %vm1045 = vcmask 760832
        %v1046 = vsel %vm1045, %v1028, %v1030
        %v1047 = vsel %vm1045, %v1030, %v1032
        %v1048 = vsel %vm1045, %v1032, %v1034
        %v1049 = vsel %vm1045, %v1034, %v1036
        %v1050 = vsel %vm1045, %v1036, %v1038
        %v1051 = vsel %vm1045, %v1038, %v1040
        %v1052 = vsel %vm1045, %v1040, %v1042
        %v1053 = vsel %vm1045, %v1042, %v1044
        %1062 = vst [vmem:[#allocation3 + $0x200] sm:$0xff] %v1046
        %1063 = vst [vmem:[#allocation3 + $0x208] sm:$0xff] %v1047
        %1064 = vst [vmem:[#allocation3 + $0x210] sm:$0xff] %v1048
        %1065 = vst [vmem:[#allocation3 + $0x218] sm:$0xff] %v1049
        %1066 = vst [vmem:[#allocation3 + $0x220] sm:$0xff] %v1050
        %1067 = vst [vmem:[#allocation3 + $0x228] sm:$0xff] %v1051
        %1068 = vst [vmem:[#allocation3 + $0x230] sm:$0xff] %v1052
        %1069 = vst [vmem:[#allocation3 + $0x238] sm:$0xff] %v1053
        %v1070 = vld [vmem:[#allocation2] sm:$0xff]
        %v1071 = vld [vmem:[#allocation2 + $0x8] sm:$0xff]
        %v1072 = vld [vmem:[#allocation2 + $0x10] sm:$0xff]
        %v1073 = vld [vmem:[#allocation2 + $0x18] sm:$0xff]
        %v1074 = vld [vmem:[#allocation2 + $0x20] sm:$0xff]
        %v1075 = vld [vmem:[#allocation2 + $0x28] sm:$0xff]
        %v1076 = vld [vmem:[#allocation2 + $0x30] sm:$0xff]
        %v1077 = vld [vmem:[#allocation2 + $0x38] sm:$0xff]
        %v1078 = vld [vmem:[#allocation2 + $0x40] sm:$0xff]
        %1088 = vrot.lane.b32.xlu0 %v1070, 92
        %v1089 = vpop.permute.xlu0 %1088
        %1090 = vrot.lane.b32.xlu0 %v1071, 92
        %v1091 = vpop.permute.xlu0 %1090
        %1092 = vrot.lane.b32.xlu0 %v1072, 92
        %v1093 = vpop.permute.xlu0 %1092
        %1094 = vrot.lane.b32.xlu0 %v1073, 92
        %v1095 = vpop.permute.xlu0 %1094
        %1096 = vrot.lane.b32.xlu0 %v1074, 92
        %v1097 = vpop.permute.xlu0 %1096
        %1098 = vrot.lane.b32.xlu0 %v1075, 92
        %v1099 = vpop.permute.xlu0 %1098
        %1100 = vrot.lane.b32.xlu0 %v1076, 92
        %v1101 = vpop.permute.xlu0 %1100
        %1102 = vrot.lane.b32.xlu0 %v1077, 92
        %v1103 = vpop.permute.xlu0 %1102
        %1104 = vrot.lane.b32.xlu0 %v1078, 92
        %v1105 = vpop.permute.xlu0 %1104
        %vm1106 = vcmask 752640
        %v1107 = vsel %vm1106, %v1089, %v1091
        %v1108 = vsel %vm1106, %v1091, %v1093
        %v1109 = vsel %vm1106, %v1093, %v1095
        %v1110 = vsel %vm1106, %v1095, %v1097
        %v1111 = vsel %vm1106, %v1097, %v1099
        %v1112 = vsel %vm1106, %v1099, %v1101
        %v1113 = vsel %vm1106, %v1101, %v1103
        %v1114 = vsel %vm1106, %v1103, %v1105
        %1123 = vst [vmem:[#allocation3 + $0x240] sm:$0xff] %v1107
        %1124 = vst [vmem:[#allocation3 + $0x248] sm:$0xff] %v1108
        %1125 = vst [vmem:[#allocation3 + $0x250] sm:$0xff] %v1109
        %1126 = vst [vmem:[#allocation3 + $0x258] sm:$0xff] %v1110
        %1127 = vst [vmem:[#allocation3 + $0x260] sm:$0xff] %v1111
        %1128 = vst [vmem:[#allocation3 + $0x268] sm:$0xff] %v1112
        %1129 = vst [vmem:[#allocation3 + $0x270] sm:$0xff] %v1113
        %1130 = vst [vmem:[#allocation3 + $0x278] sm:$0xff] %v1114
        %v1131 = vld [vmem:[#allocation2] sm:$0xff]
        %v1132 = vld [vmem:[#allocation2 + $0x8] sm:$0xff]
        %v1133 = vld [vmem:[#allocation2 + $0x10] sm:$0xff]
        %v1134 = vld [vmem:[#allocation2 + $0x18] sm:$0xff]
        %v1135 = vld [vmem:[#allocation2 + $0x20] sm:$0xff]
        %v1136 = vld [vmem:[#allocation2 + $0x28] sm:$0xff]
        %v1137 = vld [vmem:[#allocation2 + $0x30] sm:$0xff]
        %v1138 = vld [vmem:[#allocation2 + $0x38] sm:$0xff]
        %v1139 = vld [vmem:[#allocation2 + $0x40] sm:$0xff]
        %1149 = vrot.lane.b32.xlu0 %v1131, 64
        %v1150 = vpop.permute.xlu0 %1149
        %1151 = vrot.lane.b32.xlu0 %v1132, 64
        %v1152 = vpop.permute.xlu0 %1151
        %1153 = vrot.lane.b32.xlu0 %v1133, 64
        %v1154 = vpop.permute.xlu0 %1153
        %1155 = vrot.lane.b32.xlu0 %v1134, 64
        %v1156 = vpop.permute.xlu0 %1155
        %1157 = vrot.lane.b32.xlu0 %v1135, 64
        %v1158 = vpop.permute.xlu0 %1157
        %1159 = vrot.lane.b32.xlu0 %v1136, 64
        %v1160 = vpop.permute.xlu0 %1159
        %1161 = vrot.lane.b32.xlu0 %v1137, 64
        %v1162 = vpop.permute.xlu0 %1161
        %1163 = vrot.lane.b32.xlu0 %v1138, 64
        %v1164 = vpop.permute.xlu0 %1163
        %1165 = vrot.lane.b32.xlu0 %v1139, 64
        %v1166 = vpop.permute.xlu0 %1165
        %vm1167 = vcmask 523264
        %v1168 = vsel %vm1167, %v1150, %v1152
        %v1169 = vsel %vm1167, %v1152, %v1154
        %v1170 = vsel %vm1167, %v1154, %v1156
        %v1171 = vsel %vm1167, %v1156, %v1158
        %v1172 = vsel %vm1167, %v1158, %v1160
        %v1173 = vsel %vm1167, %v1160, %v1162
        %v1174 = vsel %vm1167, %v1162, %v1164
        %v1175 = vsel %vm1167, %v1164, %v1166
        %1184 = vst [vmem:[#allocation3 + $0x280] sm:$0xff] %v1168
        %1185 = vst [vmem:[#allocation3 + $0x288] sm:$0xff] %v1169
        %1186 = vst [vmem:[#allocation3 + $0x290] sm:$0xff] %v1170
        %1187 = vst [vmem:[#allocation3 + $0x298] sm:$0xff] %v1171
        %1188 = vst [vmem:[#allocation3 + $0x2a0] sm:$0xff] %v1172
        %1189 = vst [vmem:[#allocation3 + $0x2a8] sm:$0xff] %v1173
        %1190 = vst [vmem:[#allocation3 + $0x2b0] sm:$0xff] %v1174
        %1191 = vst [vmem:[#allocation3 + $0x2b8] sm:$0xff] %v1175
        %v1192 = vld [vmem:[#allocation2] sm:$0xff]
        %v1193 = vld [vmem:[#allocation2 + $0x8] sm:$0xff]
        %v1194 = vld [vmem:[#allocation2 + $0x10] sm:$0xff]
        %v1195 = vld [vmem:[#allocation2 + $0x18] sm:$0xff]
        %v1196 = vld [vmem:[#allocation2 + $0x20] sm:$0xff]
        %v1197 = vld [vmem:[#allocation2 + $0x28] sm:$0xff]
        %v1198 = vld [vmem:[#allocation2 + $0x30] sm:$0xff]
        %v1199 = vld [vmem:[#allocation2 + $0x38] sm:$0xff]
        %v1200 = vld [vmem:[#allocation2 + $0x40] sm:$0xff]
        %1210 = vrot.lane.b32.xlu0 %v1192, 63
        %v1211 = vpop.permute.xlu0 %1210
        %1212 = vrot.lane.b32.xlu0 %v1193, 63
        %v1213 = vpop.permute.xlu0 %1212
        %1214 = vrot.lane.b32.xlu0 %v1194, 63
        %v1215 = vpop.permute.xlu0 %1214
        %1216 = vrot.lane.b32.xlu0 %v1195, 63
        %v1217 = vpop.permute.xlu0 %1216
        %1218 = vrot.lane.b32.xlu0 %v1196, 63
        %v1219 = vpop.permute.xlu0 %1218
        %1220 = vrot.lane.b32.xlu0 %v1197, 63
        %v1221 = vpop.permute.xlu0 %1220
        %1222 = vrot.lane.b32.xlu0 %v1198, 63
        %v1223 = vpop.permute.xlu0 %1222
        %1224 = vrot.lane.b32.xlu0 %v1199, 63
        %v1225 = vpop.permute.xlu0 %1224
        %1226 = vrot.lane.b32.xlu0 %v1200, 63
        %v1227 = vpop.permute.xlu0 %1226
        %vm1228 = vcmask 515072
        %v1229 = vsel %vm1228, %v1211, %v1213
        %v1230 = vsel %vm1228, %v1213, %v1215
        %v1231 = vsel %vm1228, %v1215, %v1217
        %v1232 = vsel %vm1228, %v1217, %v1219
        %v1233 = vsel %vm1228, %v1219, %v1221
        %v1234 = vsel %vm1228, %v1221, %v1223
        %v1235 = vsel %vm1228, %v1223, %v1225
        %v1236 = vsel %vm1228, %v1225, %v1227
        %1245 = vst [vmem:[#allocation3 + $0x2c0] sm:$0xff] %v1229
        %1246 = vst [vmem:[#allocation3 + $0x2c8] sm:$0xff] %v1230
        %1247 = vst [vmem:[#allocation3 + $0x2d0] sm:$0xff] %v1231
        %1248 = vst [vmem:[#allocation3 + $0x2d8] sm:$0xff] %v1232
        %1249 = vst [vmem:[#allocation3 + $0x2e0] sm:$0xff] %v1233
        %1250 = vst [vmem:[#allocation3 + $0x2e8] sm:$0xff] %v1234
        %1251 = vst [vmem:[#allocation3 + $0x2f0] sm:$0xff] %v1235
        %1252 = vst [vmem:[#allocation3 + $0x2f8] sm:$0xff] %v1236
        %v1253 = vld [vmem:[#allocation2] sm:$0xff]
        %v1254 = vld [vmem:[#allocation2 + $0x8] sm:$0xff]
        %v1255 = vld [vmem:[#allocation2 + $0x10] sm:$0xff]
        %v1256 = vld [vmem:[#allocation2 + $0x18] sm:$0xff]
        %v1257 = vld [vmem:[#allocation2 + $0x20] sm:$0xff]
        %v1258 = vld [vmem:[#allocation2 + $0x28] sm:$0xff]
        %v1259 = vld [vmem:[#allocation2 + $0x30] sm:$0xff]
        %v1260 = vld [vmem:[#allocation2 + $0x38] sm:$0xff]
        %v1261 = vld [vmem:[#allocation2 + $0x40] sm:$0xff]
        %1271 = vrot.lane.b32.xlu0 %v1253, 62
        %v1272 = vpop.permute.xlu0 %1271
        %1273 = vrot.lane.b32.xlu0 %v1254, 62
        %v1274 = vpop.permute.xlu0 %1273
        %1275 = vrot.lane.b32.xlu0 %v1255, 62
        %v1276 = vpop.permute.xlu0 %1275
        %1277 = vrot.lane.b32.xlu0 %v1256, 62
        %v1278 = vpop.permute.xlu0 %1277
        %1279 = vrot.lane.b32.xlu0 %v1257, 62
        %v1280 = vpop.permute.xlu0 %1279
        %1281 = vrot.lane.b32.xlu0 %v1258, 62
        %v1282 = vpop.permute.xlu0 %1281
        %1283 = vrot.lane.b32.xlu0 %v1259, 62
        %v1284 = vpop.permute.xlu0 %1283
        %1285 = vrot.lane.b32.xlu0 %v1260, 62
        %v1286 = vpop.permute.xlu0 %1285
        %1287 = vrot.lane.b32.xlu0 %v1261, 62
        %v1288 = vpop.permute.xlu0 %1287
        %vm1289 = vcmask 506880
        %v1290 = vsel %vm1289, %v1272, %v1274
        %v1291 = vsel %vm1289, %v1274, %v1276
        %v1292 = vsel %vm1289, %v1276, %v1278
        %v1293 = vsel %vm1289, %v1278, %v1280
        %v1294 = vsel %vm1289, %v1280, %v1282
        %v1295 = vsel %vm1289, %v1282, %v1284
        %v1296 = vsel %vm1289, %v1284, %v1286
        %v1297 = vsel %vm1289, %v1286, %v1288
        %1306 = vst [vmem:[#allocation3 + $0x300] sm:$0xff] %v1290
        %1307 = vst [vmem:[#allocation3 + $0x308] sm:$0xff] %v1291
        %1308 = vst [vmem:[#allocation3 + $0x310] sm:$0xff] %v1292
        %1309 = vst [vmem:[#allocation3 + $0x318] sm:$0xff] %v1293
        %1310 = vst [vmem:[#allocation3 + $0x320] sm:$0xff] %v1294
        %1311 = vst [vmem:[#allocation3 + $0x328] sm:$0xff] %v1295
        %1312 = vst [vmem:[#allocation3 + $0x330] sm:$0xff] %v1296
        %1313 = vst [vmem:[#allocation3 + $0x338] sm:$0xff] %v1297
        %v1314 = vld [vmem:[#allocation2] sm:$0xff]
        %v1315 = vld [vmem:[#allocation2 + $0x8] sm:$0xff]
        %v1316 = vld [vmem:[#allocation2 + $0x10] sm:$0xff]
        %v1317 = vld [vmem:[#allocation2 + $0x18] sm:$0xff]
        %v1318 = vld [vmem:[#allocation2 + $0x20] sm:$0xff]
        %v1319 = vld [vmem:[#allocation2 + $0x28] sm:$0xff]
        %v1320 = vld [vmem:[#allocation2 + $0x30] sm:$0xff]
        %v1321 = vld [vmem:[#allocation2 + $0x38] sm:$0xff]
        %v1322 = vld [vmem:[#allocation2 + $0x40] sm:$0xff]
        %1332 = vrot.lane.b32.xlu0 %v1314, 61
        %v1333 = vpop.permute.xlu0 %1332
        %1334 = vrot.lane.b32.xlu0 %v1315, 61
        %v1335 = vpop.permute.xlu0 %1334
        %1336 = vrot.lane.b32.xlu0 %v1316, 61
        %v1337 = vpop.permute.xlu0 %1336
        %1338 = vrot.lane.b32.xlu0 %v1317, 61
        %v1339 = vpop.permute.xlu0 %1338
        %1340 = vrot.lane.b32.xlu0 %v1318, 61
        %v1341 = vpop.permute.xlu0 %1340
        %1342 = vrot.lane.b32.xlu0 %v1319, 61
        %v1343 = vpop.permute.xlu0 %1342
        %1344 = vrot.lane.b32.xlu0 %v1320, 61
        %v1345 = vpop.permute.xlu0 %1344
        %1346 = vrot.lane.b32.xlu0 %v1321, 61
        %v1347 = vpop.permute.xlu0 %1346
        %1348 = vrot.lane.b32.xlu0 %v1322, 61
        %v1349 = vpop.permute.xlu0 %1348
        %vm1350 = vcmask 498688
        %v1351 = vsel %vm1350, %v1333, %v1335
        %v1352 = vsel %vm1350, %v1335, %v1337
        %v1353 = vsel %vm1350, %v1337, %v1339
        %v1354 = vsel %vm1350, %v1339, %v1341
        %v1355 = vsel %vm1350, %v1341, %v1343
        %v1356 = vsel %vm1350, %v1343, %v1345
        %v1357 = vsel %vm1350, %v1345, %v1347
        %v1358 = vsel %vm1350, %v1347, %v1349
        %1367 = vst [vmem:[#allocation3 + $0x340] sm:$0xff] %v1351
        %1368 = vst [vmem:[#allocation3 + $0x348] sm:$0xff] %v1352
        %1369 = vst [vmem:[#allocation3 + $0x350] sm:$0xff] %v1353
        %1370 = vst [vmem:[#allocation3 + $0x358] sm:$0xff] %v1354
        %1371 = vst [vmem:[#allocation3 + $0x360] sm:$0xff] %v1355
        %1372 = vst [vmem:[#allocation3 + $0x368] sm:$0xff] %v1356
        %1373 = vst [vmem:[#allocation3 + $0x370] sm:$0xff] %v1357
        %1374 = vst [vmem:[#allocation3 + $0x378] sm:$0xff] %v1358
        %v1375 = vld [vmem:[#allocation2] sm:$0xff]
        %v1376 = vld [vmem:[#allocation2 + $0x8] sm:$0xff]
        %v1377 = vld [vmem:[#allocation2 + $0x10] sm:$0xff]
        %v1378 = vld [vmem:[#allocation2 + $0x18] sm:$0xff]
        %v1379 = vld [vmem:[#allocation2 + $0x20] sm:$0xff]
        %v1380 = vld [vmem:[#allocation2 + $0x28] sm:$0xff]
        %v1381 = vld [vmem:[#allocation2 + $0x30] sm:$0xff]
        %v1382 = vld [vmem:[#allocation2 + $0x38] sm:$0xff]
        %v1383 = vld [vmem:[#allocation2 + $0x40] sm:$0xff]
        %1393 = vrot.lane.b32.xlu0 %v1375, 60
        %v1394 = vpop.permute.xlu0 %1393
        %1395 = vrot.lane.b32.xlu0 %v1376, 60
        %v1396 = vpop.permute.xlu0 %1395
        %1397 = vrot.lane.b32.xlu0 %v1377, 60
        %v1398 = vpop.permute.xlu0 %1397
        %1399 = vrot.lane.b32.xlu0 %v1378, 60
        %v1400 = vpop.permute.xlu0 %1399
        %1401 = vrot.lane.b32.xlu0 %v1379, 60
        %v1402 = vpop.permute.xlu0 %1401
        %1403 = vrot.lane.b32.xlu0 %v1380, 60
        %v1404 = vpop.permute.xlu0 %1403
        %1405 = vrot.lane.b32.xlu0 %v1381, 60
        %v1406 = vpop.permute.xlu0 %1405
        %1407 = vrot.lane.b32.xlu0 %v1382, 60
        %v1408 = vpop.permute.xlu0 %1407
        %1409 = vrot.lane.b32.xlu0 %v1383, 60
        %v1410 = vpop.permute.xlu0 %1409
        %vm1411 = vcmask 490496
        %v1412 = vsel %vm1411, %v1394, %v1396
        %v1413 = vsel %vm1411, %v1396, %v1398
        %v1414 = vsel %vm1411, %v1398, %v1400
        %v1415 = vsel %vm1411, %v1400, %v1402
        %v1416 = vsel %vm1411, %v1402, %v1404
        %v1417 = vsel %vm1411, %v1404, %v1406
        %v1418 = vsel %vm1411, %v1406, %v1408
        %v1419 = vsel %vm1411, %v1408, %v1410
        %1428 = vst [vmem:[#allocation3 + $0x380] sm:$0xff] %v1412
        %1429 = vst [vmem:[#allocation3 + $0x388] sm:$0xff] %v1413
        %1430 = vst [vmem:[#allocation3 + $0x390] sm:$0xff] %v1414
        %1431 = vst [vmem:[#allocation3 + $0x398] sm:$0xff] %v1415
        %1432 = vst [vmem:[#allocation3 + $0x3a0] sm:$0xff] %v1416
        %1433 = vst [vmem:[#allocation3 + $0x3a8] sm:$0xff] %v1417
        %1434 = vst [vmem:[#allocation3 + $0x3b0] sm:$0xff] %v1418
        %1435 = vst [vmem:[#allocation3 + $0x3b8] sm:$0xff] %v1419
        %v1436 = vld [vmem:[#allocation2] sm:$0xff]
        %v1437 = vld [vmem:[#allocation2 + $0x8] sm:$0xff]
        %v1438 = vld [vmem:[#allocation2 + $0x10] sm:$0xff]
        %v1439 = vld [vmem:[#allocation2 + $0x18] sm:$0xff]
        %v1440 = vld [vmem:[#allocation2 + $0x20] sm:$0xff]
        %v1441 = vld [vmem:[#allocation2 + $0x28] sm:$0xff]
        %v1442 = vld [vmem:[#allocation2 + $0x30] sm:$0xff]
        %v1443 = vld [vmem:[#allocation2 + $0x38] sm:$0xff]
        %v1444 = vld [vmem:[#allocation2 + $0x40] sm:$0xff]
        %1454 = vrot.lane.b32.xlu0 %v1436, 32
        %v1455 = vpop.permute.xlu0 %1454
        %1456 = vrot.lane.b32.xlu0 %v1437, 32
        %v1457 = vpop.permute.xlu0 %1456
        %1458 = vrot.lane.b32.xlu0 %v1438, 32
        %v1459 = vpop.permute.xlu0 %1458
        %1460 = vrot.lane.b32.xlu0 %v1439, 32
        %v1461 = vpop.permute.xlu0 %1460
        %1462 = vrot.lane.b32.xlu0 %v1440, 32
        %v1463 = vpop.permute.xlu0 %1462
        %1464 = vrot.lane.b32.xlu0 %v1441, 32
        %v1465 = vpop.permute.xlu0 %1464
        %1466 = vrot.lane.b32.xlu0 %v1442, 32
        %v1467 = vpop.permute.xlu0 %1466
        %1468 = vrot.lane.b32.xlu0 %v1443, 32
        %v1469 = vpop.permute.xlu0 %1468
        %1470 = vrot.lane.b32.xlu0 %v1444, 32
        %v1471 = vpop.permute.xlu0 %1470
        %vm1472 = vcmask 261120
        %v1473 = vsel %vm1472, %v1455, %v1457
        %v1474 = vsel %vm1472, %v1457, %v1459
        %v1475 = vsel %vm1472, %v1459, %v1461
        %v1476 = vsel %vm1472, %v1461, %v1463
        %v1477 = vsel %vm1472, %v1463, %v1465
        %v1478 = vsel %vm1472, %v1465, %v1467
        %v1479 = vsel %vm1472, %v1467, %v1469
        %v1480 = vsel %vm1472, %v1469, %v1471
        %1489 = vst [vmem:[#allocation3 + $0x3c0] sm:$0xff] %v1473
        %1490 = vst [vmem:[#allocation3 + $0x3c8] sm:$0xff] %v1474
        %1491 = vst [vmem:[#allocation3 + $0x3d0] sm:$0xff] %v1475
        %1492 = vst [vmem:[#allocation3 + $0x3d8] sm:$0xff] %v1476
        %1493 = vst [vmem:[#allocation3 + $0x3e0] sm:$0xff] %v1477
        %1494 = vst [vmem:[#allocation3 + $0x3e8] sm:$0xff] %v1478
        %1495 = vst [vmem:[#allocation3 + $0x3f0] sm:$0xff] %v1479
        %1496 = vst [vmem:[#allocation3 + $0x3f8] sm:$0xff] %v1480
        %v1497 = vld [vmem:[#allocation2] sm:$0xff]
        %v1498 = vld [vmem:[#allocation2 + $0x8] sm:$0xff]
        %v1499 = vld [vmem:[#allocation2 + $0x10] sm:$0xff]
        %v1500 = vld [vmem:[#allocation2 + $0x18] sm:$0xff]
        %v1501 = vld [vmem:[#allocation2 + $0x20] sm:$0xff]
        %v1502 = vld [vmem:[#allocation2 + $0x28] sm:$0xff]
        %v1503 = vld [vmem:[#allocation2 + $0x30] sm:$0xff]
        %v1504 = vld [vmem:[#allocation2 + $0x38] sm:$0xff]
        %v1505 = vld [vmem:[#allocation2 + $0x40] sm:$0xff]
        %1515 = vrot.lane.b32.xlu0 %v1497, 31
        %v1516 = vpop.permute.xlu0 %1515
        %1517 = vrot.lane.b32.xlu0 %v1498, 31
        %v1518 = vpop.permute.xlu0 %1517
        %1519 = vrot.lane.b32.xlu0 %v1499, 31
        %v1520 = vpop.permute.xlu0 %1519
        %1521 = vrot.lane.b32.xlu0 %v1500, 31
        %v1522 = vpop.permute.xlu0 %1521
        %1523 = vrot.lane.b32.xlu0 %v1501, 31
        %v1524 = vpop.permute.xlu0 %1523
        %1525 = vrot.lane.b32.xlu0 %v1502, 31
        %v1526 = vpop.permute.xlu0 %1525
        %1527 = vrot.lane.b32.xlu0 %v1503, 31
        %v1528 = vpop.permute.xlu0 %1527
        %1529 = vrot.lane.b32.xlu0 %v1504, 31
        %v1530 = vpop.permute.xlu0 %1529
        %1531 = vrot.lane.b32.xlu0 %v1505, 31
        %v1532 = vpop.permute.xlu0 %1531
        %vm1533 = vcmask 252928
        %v1534 = vsel %vm1533, %v1516, %v1518
        %v1535 = vsel %vm1533, %v1518, %v1520
        %v1536 = vsel %vm1533, %v1520, %v1522
        %v1537 = vsel %vm1533, %v1522, %v1524
        %v1538 = vsel %vm1533, %v1524, %v1526
        %v1539 = vsel %vm1533, %v1526, %v1528
        %v1540 = vsel %vm1533, %v1528, %v1530
        %v1541 = vsel %vm1533, %v1530, %v1532
        %1550 = vst [vmem:[#allocation3 + $0x400] sm:$0xff] %v1534
        %1551 = vst [vmem:[#allocation3 + $0x408] sm:$0xff] %v1535
        %1552 = vst [vmem:[#allocation3 + $0x410] sm:$0xff] %v1536
        %1553 = vst [vmem:[#allocation3 + $0x418] sm:$0xff] %v1537
        %1554 = vst [vmem:[#allocation3 + $0x420] sm:$0xff] %v1538
        %1555 = vst [vmem:[#allocation3 + $0x428] sm:$0xff] %v1539
        %1556 = vst [vmem:[#allocation3 + $0x430] sm:$0xff] %v1540
        %1557 = vst [vmem:[#allocation3 + $0x438] sm:$0xff] %v1541
        %v1558 = vld [vmem:[#allocation2] sm:$0xff]
        %v1559 = vld [vmem:[#allocation2 + $0x8] sm:$0xff]
        %v1560 = vld [vmem:[#allocation2 + $0x10] sm:$0xff]
        %v1561 = vld [vmem:[#allocation2 + $0x18] sm:$0xff]
        %v1562 = vld [vmem:[#allocation2 + $0x20] sm:$0xff]
        %v1563 = vld [vmem:[#allocation2 + $0x28] sm:$0xff]
        %v1564 = vld [vmem:[#allocation2 + $0x30] sm:$0xff]
        %v1565 = vld [vmem:[#allocation2 + $0x38] sm:$0xff]
        %v1566 = vld [vmem:[#allocation2 + $0x40] sm:$0xff]
        %1576 = vrot.lane.b32.xlu0 %v1558, 30
        %v1577 = vpop.permute.xlu0 %1576
        %1578 = vrot.lane.b32.xlu0 %v1559, 30
        %v1579 = vpop.permute.xlu0 %1578
        %1580 = vrot.lane.b32.xlu0 %v1560, 30
        %v1581 = vpop.permute.xlu0 %1580
        %1582 = vrot.lane.b32.xlu0 %v1561, 30
        %v1583 = vpop.permute.xlu0 %1582
        %1584 = vrot.lane.b32.xlu0 %v1562, 30
        %v1585 = vpop.permute.xlu0 %1584
        %1586 = vrot.lane.b32.xlu0 %v1563, 30
        %v1587 = vpop.permute.xlu0 %1586
        %1588 = vrot.lane.b32.xlu0 %v1564, 30
        %v1589 = vpop.permute.xlu0 %1588
        %1590 = vrot.lane.b32.xlu0 %v1565, 30
        %v1591 = vpop.permute.xlu0 %1590
        %1592 = vrot.lane.b32.xlu0 %v1566, 30
        %v1593 = vpop.permute.xlu0 %1592
        %vm1594 = vcmask 244736
        %v1595 = vsel %vm1594, %v1577, %v1579
        %v1596 = vsel %vm1594, %v1579, %v1581
        %v1597 = vsel %vm1594, %v1581, %v1583
        %v1598 = vsel %vm1594, %v1583, %v1585
        %v1599 = vsel %vm1594, %v1585, %v1587
        %v1600 = vsel %vm1594, %v1587, %v1589
        %v1601 = vsel %vm1594, %v1589, %v1591
        %v1602 = vsel %vm1594, %v1591, %v1593
        %1611 = vst [vmem:[#allocation3 + $0x440] sm:$0xff] %v1595
        %1612 = vst [vmem:[#allocation3 + $0x448] sm:$0xff] %v1596
        %1613 = vst [vmem:[#allocation3 + $0x450] sm:$0xff] %v1597
        %1614 = vst [vmem:[#allocation3 + $0x458] sm:$0xff] %v1598
        %1615 = vst [vmem:[#allocation3 + $0x460] sm:$0xff] %v1599
        %1616 = vst [vmem:[#allocation3 + $0x468] sm:$0xff] %v1600
        %1617 = vst [vmem:[#allocation3 + $0x470] sm:$0xff] %v1601
        %1618 = vst [vmem:[#allocation3 + $0x478] sm:$0xff] %v1602
        %v1619 = vld [vmem:[#allocation2] sm:$0xff]
        %v1620 = vld [vmem:[#allocation2 + $0x8] sm:$0xff]
        %v1621 = vld [vmem:[#allocation2 + $0x10] sm:$0xff]
        %v1622 = vld [vmem:[#allocation2 + $0x18] sm:$0xff]
        %v1623 = vld [vmem:[#allocation2 + $0x20] sm:$0xff]
        %v1624 = vld [vmem:[#allocation2 + $0x28] sm:$0xff]
        %v1625 = vld [vmem:[#allocation2 + $0x30] sm:$0xff]
        %v1626 = vld [vmem:[#allocation2 + $0x38] sm:$0xff]
        %v1627 = vld [vmem:[#allocation2 + $0x40] sm:$0xff]
        %1637 = vrot.lane.b32.xlu0 %v1619, 29
        %v1638 = vpop.permute.xlu0 %1637
        %1639 = vrot.lane.b32.xlu0 %v1620, 29
        %v1640 = vpop.permute.xlu0 %1639
        %1641 = vrot.lane.b32.xlu0 %v1621, 29
        %v1642 = vpop.permute.xlu0 %1641
        %1643 = vrot.lane.b32.xlu0 %v1622, 29
        %v1644 = vpop.permute.xlu0 %1643
        %1645 = vrot.lane.b32.xlu0 %v1623, 29
        %v1646 = vpop.permute.xlu0 %1645
        %1647 = vrot.lane.b32.xlu0 %v1624, 29
        %v1648 = vpop.permute.xlu0 %1647
        %1649 = vrot.lane.b32.xlu0 %v1625, 29
        %v1650 = vpop.permute.xlu0 %1649
        %1651 = vrot.lane.b32.xlu0 %v1626, 29
        %v1652 = vpop.permute.xlu0 %1651
        %1653 = vrot.lane.b32.xlu0 %v1627, 29
        %v1654 = vpop.permute.xlu0 %1653
        %vm1655 = vcmask 236544
        %v1656 = vsel %vm1655, %v1638, %v1640
        %v1657 = vsel %vm1655, %v1640, %v1642
        %v1658 = vsel %vm1655, %v1642, %v1644
        %v1659 = vsel %vm1655, %v1644, %v1646
        %v1660 = vsel %vm1655, %v1646, %v1648
        %v1661 = vsel %vm1655, %v1648, %v1650
        %v1662 = vsel %vm1655, %v1650, %v1652
        %v1663 = vsel %vm1655, %v1652, %v1654
        %1672 = vst [vmem:[#allocation3 + $0x480] sm:$0xff] %v1656
        %1673 = vst [vmem:[#allocation3 + $0x488] sm:$0xff] %v1657
        %1674 = vst [vmem:[#allocation3 + $0x490] sm:$0xff] %v1658
        %1675 = vst [vmem:[#allocation3 + $0x498] sm:$0xff] %v1659
        %1676 = vst [vmem:[#allocation3 + $0x4a0] sm:$0xff] %v1660
        %1677 = vst [vmem:[#allocation3 + $0x4a8] sm:$0xff] %v1661
        %1678 = vst [vmem:[#allocation3 + $0x4b0] sm:$0xff] %v1662
        %1679 = vst [vmem:[#allocation3 + $0x4b8] sm:$0xff] %v1663
        %v1680 = vld [vmem:[#allocation2] sm:$0xff]
        %v1681 = vld [vmem:[#allocation2 + $0x8] sm:$0xff]
        %v1682 = vld [vmem:[#allocation2 + $0x10] sm:$0xff]
        %v1683 = vld [vmem:[#allocation2 + $0x18] sm:$0xff]
        %v1684 = vld [vmem:[#allocation2 + $0x20] sm:$0xff]
        %v1685 = vld [vmem:[#allocation2 + $0x28] sm:$0xff]
        %v1686 = vld [vmem:[#allocation2 + $0x30] sm:$0xff]
        %v1687 = vld [vmem:[#allocation2 + $0x38] sm:$0xff]
        %v1688 = vld [vmem:[#allocation2 + $0x40] sm:$0xff]
        %1698 = vrot.lane.b32.xlu0 %v1680, 28
        %v1699 = vpop.permute.xlu0 %1698
        %1700 = vrot.lane.b32.xlu0 %v1681, 28
        %v1701 = vpop.permute.xlu0 %1700
        %1702 = vrot.lane.b32.xlu0 %v1682, 28
        %v1703 = vpop.permute.xlu0 %1702
        %1704 = vrot.lane.b32.xlu0 %v1683, 28
        %v1705 = vpop.permute.xlu0 %1704
        %1706 = vrot.lane.b32.xlu0 %v1684, 28
        %v1707 = vpop.permute.xlu0 %1706
        %1708 = vrot.lane.b32.xlu0 %v1685, 28
        %v1709 = vpop.permute.xlu0 %1708
        %1710 = vrot.lane.b32.xlu0 %v1686, 28
        %v1711 = vpop.permute.xlu0 %1710
        %1712 = vrot.lane.b32.xlu0 %v1687, 28
        %v1713 = vpop.permute.xlu0 %1712
        %1714 = vrot.lane.b32.xlu0 %v1688, 28
        %v1715 = vpop.permute.xlu0 %1714
        %vm1716 = vcmask 228352
        %v1717 = vsel %vm1716, %v1699, %v1701
        %v1718 = vsel %vm1716, %v1701, %v1703
        %v1719 = vsel %vm1716, %v1703, %v1705
        %v1720 = vsel %vm1716, %v1705, %v1707
        %v1721 = vsel %vm1716, %v1707, %v1709
        %v1722 = vsel %vm1716, %v1709, %v1711
        %v1723 = vsel %vm1716, %v1711, %v1713
        %v1724 = vsel %vm1716, %v1713, %v1715
        %1733 = vst [vmem:[#allocation3 + $0x4c0] sm:$0xff] %v1717
        %1734 = vst [vmem:[#allocation3 + $0x4c8] sm:$0xff] %v1718
        %1735 = vst [vmem:[#allocation3 + $0x4d0] sm:$0xff] %v1719
        %1736 = vst [vmem:[#allocation3 + $0x4d8] sm:$0xff] %v1720
        %1737 = vst [vmem:[#allocation3 + $0x4e0] sm:$0xff] %v1721
        %1738 = vst [vmem:[#allocation3 + $0x4e8] sm:$0xff] %v1722
        %1739 = vst [vmem:[#allocation3 + $0x4f0] sm:$0xff] %v1723
        %1740 = vst [vmem:[#allocation3 + $0x4f8] sm:$0xff] %v1724
        %v1741 = vld [vmem:[#allocation2 + $0x8] sm:$0xff]
        %v1742 = vld [vmem:[#allocation2 + $0x10] sm:$0xff]
        %v1743 = vld [vmem:[#allocation2 + $0x18] sm:$0xff]
        %v1744 = vld [vmem:[#allocation2 + $0x20] sm:$0xff]
        %v1745 = vld [vmem:[#allocation2 + $0x28] sm:$0xff]
        %v1746 = vld [vmem:[#allocation2 + $0x30] sm:$0xff]
        %v1747 = vld [vmem:[#allocation2 + $0x38] sm:$0xff]
        %v1748 = vld [vmem:[#allocation2 + $0x40] sm:$0xff]
        %1749 = vst [vmem:[#allocation3 + $0x500] sm:$0xff] %v1741
        %1750 = vst [vmem:[#allocation3 + $0x508] sm:$0xff] %v1742
        %1751 = vst [vmem:[#allocation3 + $0x510] sm:$0xff] %v1743
        %1752 = vst [vmem:[#allocation3 + $0x518] sm:$0xff] %v1744
        %1753 = vst [vmem:[#allocation3 + $0x520] sm:$0xff] %v1745
        %1754 = vst [vmem:[#allocation3 + $0x528] sm:$0xff] %v1746
        %1755 = vst [vmem:[#allocation3 + $0x530] sm:$0xff] %v1747
        %1756 = vst [vmem:[#allocation3 + $0x538] sm:$0xff] %v1748
        %v1757 = vld [vmem:[#allocation2 + $0x8] sm:$0xff]
        %v1758 = vld [vmem:[#allocation2 + $0x10] sm:$0xff]
        %v1759 = vld [vmem:[#allocation2 + $0x18] sm:$0xff]
        %v1760 = vld [vmem:[#allocation2 + $0x20] sm:$0xff]
        %v1761 = vld [vmem:[#allocation2 + $0x28] sm:$0xff]
        %v1762 = vld [vmem:[#allocation2 + $0x30] sm:$0xff]
        %v1763 = vld [vmem:[#allocation2 + $0x38] sm:$0xff]
        %v1764 = vld [vmem:[#allocation2 + $0x40] sm:$0xff]
        %v1765 = vld [vmem:[#allocation2 + $0x48] sm:$0xff]
        %1775 = vrot.lane.b32.xlu0 %v1757, 127
        %v1776 = vpop.permute.xlu0 %1775
        %1777 = vrot.lane.b32.xlu0 %v1758, 127
        %v1778 = vpop.permute.xlu0 %1777
        %1779 = vrot.lane.b32.xlu0 %v1759, 127
        %v1780 = vpop.permute.xlu0 %1779
        %1781 = vrot.lane.b32.xlu0 %v1760, 127
        %v1782 = vpop.permute.xlu0 %1781
        %1783 = vrot.lane.b32.xlu0 %v1761, 127
        %v1784 = vpop.permute.xlu0 %1783
        %1785 = vrot.lane.b32.xlu0 %v1762, 127
        %v1786 = vpop.permute.xlu0 %1785
        %1787 = vrot.lane.b32.xlu0 %v1763, 127
        %v1788 = vpop.permute.xlu0 %1787
        %1789 = vrot.lane.b32.xlu0 %v1764, 127
        %v1790 = vpop.permute.xlu0 %1789
        %1791 = vrot.lane.b32.xlu0 %v1765, 127
        %v1792 = vpop.permute.xlu0 %1791
        %v1793 = vsel %vm618, %v1776, %v1778
        %v1794 = vsel %vm618, %v1778, %v1780
        %v1795 = vsel %vm618, %v1780, %v1782
        %v1796 = vsel %vm618, %v1782, %v1784
        %v1797 = vsel %vm618, %v1784, %v1786
        %v1798 = vsel %vm618, %v1786, %v1788
        %v1799 = vsel %vm618, %v1788, %v1790
        %v1800 = vsel %vm618, %v1790, %v1792
        %1809 = vst [vmem:[#allocation3 + $0x540] sm:$0xff] %v1793
        %1810 = vst [vmem:[#allocation3 + $0x548] sm:$0xff] %v1794
        %1811 = vst [vmem:[#allocation3 + $0x550] sm:$0xff] %v1795
        %1812 = vst [vmem:[#allocation3 + $0x558] sm:$0xff] %v1796
        %1813 = vst [vmem:[#allocation3 + $0x560] sm:$0xff] %v1797
        %1814 = vst [vmem:[#allocation3 + $0x568] sm:$0xff] %v1798
        %1815 = vst [vmem:[#allocation3 + $0x570] sm:$0xff] %v1799
        %1816 = vst [vmem:[#allocation3 + $0x578] sm:$0xff] %v1800
        %v1817 = vld [vmem:[#allocation2 + $0x8] sm:$0xff]
        %v1818 = vld [vmem:[#allocation2 + $0x10] sm:$0xff]
        %v1819 = vld [vmem:[#allocation2 + $0x18] sm:$0xff]
        %v1820 = vld [vmem:[#allocation2 + $0x20] sm:$0xff]
        %v1821 = vld [vmem:[#allocation2 + $0x28] sm:$0xff]
        %v1822 = vld [vmem:[#allocation2 + $0x30] sm:$0xff]
        %v1823 = vld [vmem:[#allocation2 + $0x38] sm:$0xff]
        %v1824 = vld [vmem:[#allocation2 + $0x40] sm:$0xff]
        %v1825 = vld [vmem:[#allocation2 + $0x48] sm:$0xff]
        %1835 = vrot.lane.b32.xlu0 %v1817, 126
        %v1836 = vpop.permute.xlu0 %1835
        %1837 = vrot.lane.b32.xlu0 %v1818, 126
        %v1838 = vpop.permute.xlu0 %1837
        %1839 = vrot.lane.b32.xlu0 %v1819, 126
        %v1840 = vpop.permute.xlu0 %1839
        %1841 = vrot.lane.b32.xlu0 %v1820, 126
        %v1842 = vpop.permute.xlu0 %1841
        %1843 = vrot.lane.b32.xlu0 %v1821, 126
        %v1844 = vpop.permute.xlu0 %1843
        %1845 = vrot.lane.b32.xlu0 %v1822, 126
        %v1846 = vpop.permute.xlu0 %1845
        %1847 = vrot.lane.b32.xlu0 %v1823, 126
        %v1848 = vpop.permute.xlu0 %1847
        %1849 = vrot.lane.b32.xlu0 %v1824, 126
        %v1850 = vpop.permute.xlu0 %1849
        %1851 = vrot.lane.b32.xlu0 %v1825, 126
        %v1852 = vpop.permute.xlu0 %1851
        %v1853 = vsel %vm679, %v1836, %v1838
        %v1854 = vsel %vm679, %v1838, %v1840
        %v1855 = vsel %vm679, %v1840, %v1842
        %v1856 = vsel %vm679, %v1842, %v1844
        %v1857 = vsel %vm679, %v1844, %v1846
        %v1858 = vsel %vm679, %v1846, %v1848
        %v1859 = vsel %vm679, %v1848, %v1850
        %v1860 = vsel %vm679, %v1850, %v1852
        %1869 = vst [vmem:[#allocation3 + $0x580] sm:$0xff] %v1853
        %1870 = vst [vmem:[#allocation3 + $0x588] sm:$0xff] %v1854
        %1871 = vst [vmem:[#allocation3 + $0x590] sm:$0xff] %v1855
        %1872 = vst [vmem:[#allocation3 + $0x598] sm:$0xff] %v1856
        %1873 = vst [vmem:[#allocation3 + $0x5a0] sm:$0xff] %v1857
        %1874 = vst [vmem:[#allocation3 + $0x5a8] sm:$0xff] %v1858
        %1875 = vst [vmem:[#allocation3 + $0x5b0] sm:$0xff] %v1859
        %1876 = vst [vmem:[#allocation3 + $0x5b8] sm:$0xff] %v1860
        %v1877 = vld [vmem:[#allocation2 + $0x8] sm:$0xff]
        %v1878 = vld [vmem:[#allocation2 + $0x10] sm:$0xff]
        %v1879 = vld [vmem:[#allocation2 + $0x18] sm:$0xff]
        %v1880 = vld [vmem:[#allocation2 + $0x20] sm:$0xff]
        %v1881 = vld [vmem:[#allocation2 + $0x28] sm:$0xff]
        %v1882 = vld [vmem:[#allocation2 + $0x30] sm:$0xff]
        %v1883 = vld [vmem:[#allocation2 + $0x38] sm:$0xff]
        %v1884 = vld [vmem:[#allocation2 + $0x40] sm:$0xff]
        %v1885 = vld [vmem:[#allocation2 + $0x48] sm:$0xff]
        %1895 = vrot.lane.b32.xlu0 %v1877, 125
        %v1896 = vpop.permute.xlu0 %1895
        %1897 = vrot.lane.b32.xlu0 %v1878, 125
        %v1898 = vpop.permute.xlu0 %1897
        %1899 = vrot.lane.b32.xlu0 %v1879, 125
        %v1900 = vpop.permute.xlu0 %1899
        %1901 = vrot.lane.b32.xlu0 %v1880, 125
        %v1902 = vpop.permute.xlu0 %1901
        %1903 = vrot.lane.b32.xlu0 %v1881, 125
        %v1904 = vpop.permute.xlu0 %1903
        %1905 = vrot.lane.b32.xlu0 %v1882, 125
        %v1906 = vpop.permute.xlu0 %1905
        %1907 = vrot.lane.b32.xlu0 %v1883, 125
        %v1908 = vpop.permute.xlu0 %1907
        %1909 = vrot.lane.b32.xlu0 %v1884, 125
        %v1910 = vpop.permute.xlu0 %1909
        %1911 = vrot.lane.b32.xlu0 %v1885, 125
        %v1912 = vpop.permute.xlu0 %1911
        %v1913 = vsel %vm740, %v1896, %v1898
        %v1914 = vsel %vm740, %v1898, %v1900
        %v1915 = vsel %vm740, %v1900, %v1902
        %v1916 = vsel %vm740, %v1902, %v1904
        %v1917 = vsel %vm740, %v1904, %v1906
        %v1918 = vsel %vm740, %v1906, %v1908
        %v1919 = vsel %vm740, %v1908, %v1910
        %v1920 = vsel %vm740, %v1910, %v1912
        %1929 = vst [vmem:[#allocation3 + $0x5c0] sm:$0xff] %v1913
        %1930 = vst [vmem:[#allocation3 + $0x5c8] sm:$0xff] %v1914
        %1931 = vst [vmem:[#allocation3 + $0x5d0] sm:$0xff] %v1915
        %1932 = vst [vmem:[#allocation3 + $0x5d8] sm:$0xff] %v1916
        %1933 = vst [vmem:[#allocation3 + $0x5e0] sm:$0xff] %v1917
        %1934 = vst [vmem:[#allocation3 + $0x5e8] sm:$0xff] %v1918
        %1935 = vst [vmem:[#allocation3 + $0x5f0] sm:$0xff] %v1919
        %1936 = vst [vmem:[#allocation3 + $0x5f8] sm:$0xff] %v1920
        %v1937 = vld [vmem:[#allocation2 + $0x8] sm:$0xff]
        %v1938 = vld [vmem:[#allocation2 + $0x10] sm:$0xff]
        %v1939 = vld [vmem:[#allocation2 + $0x18] sm:$0xff]
        %v1940 = vld [vmem:[#allocation2 + $0x20] sm:$0xff]
        %v1941 = vld [vmem:[#allocation2 + $0x28] sm:$0xff]
        %v1942 = vld [vmem:[#allocation2 + $0x30] sm:$0xff]
        %v1943 = vld [vmem:[#allocation2 + $0x38] sm:$0xff]
        %v1944 = vld [vmem:[#allocation2 + $0x40] sm:$0xff]
        %v1945 = vld [vmem:[#allocation2 + $0x48] sm:$0xff]
        %1955 = vrot.lane.b32.xlu0 %v1937, 124
        %v1956 = vpop.permute.xlu0 %1955
        %1957 = vrot.lane.b32.xlu0 %v1938, 124
        %v1958 = vpop.permute.xlu0 %1957
        %1959 = vrot.lane.b32.xlu0 %v1939, 124
        %v1960 = vpop.permute.xlu0 %1959
        %1961 = vrot.lane.b32.xlu0 %v1940, 124
        %v1962 = vpop.permute.xlu0 %1961
        %1963 = vrot.lane.b32.xlu0 %v1941, 124
        %v1964 = vpop.permute.xlu0 %1963
        %1965 = vrot.lane.b32.xlu0 %v1942, 124
        %v1966 = vpop.permute.xlu0 %1965
        %1967 = vrot.lane.b32.xlu0 %v1943, 124
        %v1968 = vpop.permute.xlu0 %1967
        %1969 = vrot.lane.b32.xlu0 %v1944, 124
        %v1970 = vpop.permute.xlu0 %1969
        %1971 = vrot.lane.b32.xlu0 %v1945, 124
        %v1972 = vpop.permute.xlu0 %1971
        %v1973 = vsel %vm801, %v1956, %v1958
        %v1974 = vsel %vm801, %v1958, %v1960
        %v1975 = vsel %vm801, %v1960, %v1962
        %v1976 = vsel %vm801, %v1962, %v1964
        %v1977 = vsel %vm801, %v1964, %v1966
        %v1978 = vsel %vm801, %v1966, %v1968
        %v1979 = vsel %vm801, %v1968, %v1970
        %v1980 = vsel %vm801, %v1970, %v1972
        %1989 = vst [vmem:[#allocation3 + $0x600] sm:$0xff] %v1973
        %1990 = vst [vmem:[#allocation3 + $0x608] sm:$0xff] %v1974
        %1991 = vst [vmem:[#allocation3 + $0x610] sm:$0xff] %v1975
        %1992 = vst [vmem:[#allocation3 + $0x618] sm:$0xff] %v1976
        %1993 = vst [vmem:[#allocation3 + $0x620] sm:$0xff] %v1977
        %1994 = vst [vmem:[#allocation3 + $0x628] sm:$0xff] %v1978
        %1995 = vst [vmem:[#allocation3 + $0x630] sm:$0xff] %v1979
        %1996 = vst [vmem:[#allocation3 + $0x638] sm:$0xff] %v1980
        %v1997 = vld [vmem:[#allocation9] sm:$0x3f]
        %v1998 = vld [vmem:[#allocation9 + $0x8] sm:$0x3f]
        %v1999 = vld [vmem:[#allocation3] sm:$0xff]
        %v2000 = vld [vmem:[#allocation3 + $0x8] sm:$0xff]
        %v2001 = vld [vmem:[#allocation3 + $0x10] sm:$0xff]
        %v2002 = vld [vmem:[#allocation3 + $0x18] sm:$0xff]
        %v2003 = vld [vmem:[#allocation3 + $0x20] sm:$0xff]
        %v2004 = vld [vmem:[#allocation3 + $0x28] sm:$0xff]
        %v2005 = vld [vmem:[#allocation3 + $0x30] sm:$0xff]
        %v2006 = vld [vmem:[#allocation3 + $0x38] sm:$0xff]
        %v2007 = vld [vmem:[#allocation3 + $0x40] sm:$0xff]
        %v2008 = vld [vmem:[#allocation3 + $0x48] sm:$0xff]
        %v2009 = vld [vmem:[#allocation3 + $0x50] sm:$0xff]
        %v2010 = vld [vmem:[#allocation3 + $0x58] sm:$0xff]
        %v2011 = vld [vmem:[#allocation3 + $0x60] sm:$0xff]
        %v2012 = vld [vmem:[#allocation3 + $0x68] sm:$0xff]
        %v2013 = vld [vmem:[#allocation3 + $0x70] sm:$0xff]
        %v2014 = vld [vmem:[#allocation3 + $0x78] sm:$0xff]
        %v2015 = vld [vmem:[#allocation3 + $0x80] sm:$0xff]
        %v2016 = vld [vmem:[#allocation3 + $0x88] sm:$0xff]
        %v2017 = vld [vmem:[#allocation3 + $0x90] sm:$0xff]
        %v2018 = vld [vmem:[#allocation3 + $0x98] sm:$0xff]
        %v2019 = vld [vmem:[#allocation3 + $0xa0] sm:$0xff]
        %v2020 = vld [vmem:[#allocation3 + $0xa8] sm:$0xff]
        %v2021 = vld [vmem:[#allocation3 + $0xb0] sm:$0xff]
        %v2022 = vld [vmem:[#allocation3 + $0xb8] sm:$0xff]
        %v2023 = vld [vmem:[#allocation3 + $0xc0] sm:$0xff]
        %v2024 = vld [vmem:[#allocation3 + $0xc8] sm:$0xff]
        %v2025 = vld [vmem:[#allocation3 + $0xd0] sm:$0xff]
        %v2026 = vld [vmem:[#allocation3 + $0xd8] sm:$0xff]
        %v2027 = vld [vmem:[#allocation3 + $0xe0] sm:$0xff]
        %v2028 = vld [vmem:[#allocation3 + $0xe8] sm:$0xff]
        %v2029 = vld [vmem:[#allocation3 + $0xf0] sm:$0xff]
        %v2030 = vld [vmem:[#allocation3 + $0xf8] sm:$0xff]
        %v2031 = vld [vmem:[#allocation3 + $0x100] sm:$0xff]
        %v2032 = vld [vmem:[#allocation3 + $0x108] sm:$0xff]
        %v2033 = vld [vmem:[#allocation3 + $0x110] sm:$0xff]
        %v2034 = vld [vmem:[#allocation3 + $0x118] sm:$0xff]
        %v2035 = vld [vmem:[#allocation3 + $0x120] sm:$0xff]
        %v2036 = vld [vmem:[#allocation3 + $0x128] sm:$0xff]
        %v2037 = vld [vmem:[#allocation3 + $0x130] sm:$0xff]
        %v2038 = vld [vmem:[#allocation3 + $0x138] sm:$0xff]
        %v2039 = vld [vmem:[#allocation3 + $0x140] sm:$0xff]
        %v2040 = vld [vmem:[#allocation3 + $0x148] sm:$0xff]
        %v2041 = vld [vmem:[#allocation3 + $0x150] sm:$0xff]
        %v2042 = vld [vmem:[#allocation3 + $0x158] sm:$0xff]
        %v2043 = vld [vmem:[#allocation3 + $0x160] sm:$0xff]
        %v2044 = vld [vmem:[#allocation3 + $0x168] sm:$0xff]
        %v2045 = vld [vmem:[#allocation3 + $0x170] sm:$0xff]
        %v2046 = vld [vmem:[#allocation3 + $0x178] sm:$0xff]
        %v2047 = vld [vmem:[#allocation3 + $0x180] sm:$0xff]
        %v2048 = vld [vmem:[#allocation3 + $0x188] sm:$0xff]
        %v2049 = vld [vmem:[#allocation3 + $0x190] sm:$0xff]
        %v2050 = vld [vmem:[#allocation3 + $0x198] sm:$0xff]
        %v2051 = vld [vmem:[#allocation3 + $0x1a0] sm:$0xff]
        %v2052 = vld [vmem:[#allocation3 + $0x1a8] sm:$0xff]
        %v2053 = vld [vmem:[#allocation3 + $0x1b0] sm:$0xff]
        %v2054 = vld [vmem:[#allocation3 + $0x1b8] sm:$0xff]
        %v2055 = vld [vmem:[#allocation3 + $0x1c0] sm:$0xff]
        %v2056 = vld [vmem:[#allocation3 + $0x1c8] sm:$0xff]
        %v2057 = vld [vmem:[#allocation3 + $0x1d0] sm:$0xff]
        %v2058 = vld [vmem:[#allocation3 + $0x1d8] sm:$0xff]
        %v2059 = vld [vmem:[#allocation3 + $0x1e0] sm:$0xff]
        %v2060 = vld [vmem:[#allocation3 + $0x1e8] sm:$0xff]
        %v2061 = vld [vmem:[#allocation3 + $0x1f0] sm:$0xff]
        %v2062 = vld [vmem:[#allocation3 + $0x1f8] sm:$0xff]
        %v2063 = vld [vmem:[#allocation3 + $0x200] sm:$0xff]
        %v2064 = vld [vmem:[#allocation3 + $0x208] sm:$0xff]
        %v2065 = vld [vmem:[#allocation3 + $0x210] sm:$0xff]
        %v2066 = vld [vmem:[#allocation3 + $0x218] sm:$0xff]
        %v2067 = vld [vmem:[#allocation3 + $0x220] sm:$0xff]
        %v2068 = vld [vmem:[#allocation3 + $0x228] sm:$0xff]
        %v2069 = vld [vmem:[#allocation3 + $0x230] sm:$0xff]
        %v2070 = vld [vmem:[#allocation3 + $0x238] sm:$0xff]
        %v2071 = vld [vmem:[#allocation3 + $0x240] sm:$0xff]
        %v2072 = vld [vmem:[#allocation3 + $0x248] sm:$0xff]
        %v2073 = vld [vmem:[#allocation3 + $0x250] sm:$0xff]
        %v2074 = vld [vmem:[#allocation3 + $0x258] sm:$0xff]
        %v2075 = vld [vmem:[#allocation3 + $0x260] sm:$0xff]
        %v2076 = vld [vmem:[#allocation3 + $0x268] sm:$0xff]
        %v2077 = vld [vmem:[#allocation3 + $0x270] sm:$0xff]
        %v2078 = vld [vmem:[#allocation3 + $0x278] sm:$0xff]
        %v2079 = vld [vmem:[#allocation3 + $0x280] sm:$0xff]
        %v2080 = vld [vmem:[#allocation3 + $0x288] sm:$0xff]
        %v2081 = vld [vmem:[#allocation3 + $0x290] sm:$0xff]
        %v2082 = vld [vmem:[#allocation3 + $0x298] sm:$0xff]
        %v2083 = vld [vmem:[#allocation3 + $0x2a0] sm:$0xff]
        %v2084 = vld [vmem:[#allocation3 + $0x2a8] sm:$0xff]
        %v2085 = vld [vmem:[#allocation3 + $0x2b0] sm:$0xff]
        %v2086 = vld [vmem:[#allocation3 + $0x2b8] sm:$0xff]
        %v2087 = vld [vmem:[#allocation3 + $0x2c0] sm:$0xff]
        %v2088 = vld [vmem:[#allocation3 + $0x2c8] sm:$0xff]
        %v2089 = vld [vmem:[#allocation3 + $0x2d0] sm:$0xff]
        %v2090 = vld [vmem:[#allocation3 + $0x2d8] sm:$0xff]
        %v2091 = vld [vmem:[#allocation3 + $0x2e0] sm:$0xff]
        %v2092 = vld [vmem:[#allocation3 + $0x2e8] sm:$0xff]
        %v2093 = vld [vmem:[#allocation3 + $0x2f0] sm:$0xff]
        %v2094 = vld [vmem:[#allocation3 + $0x2f8] sm:$0xff]
        %v2095 = vld [vmem:[#allocation3 + $0x300] sm:$0xff]
        %v2096 = vld [vmem:[#allocation3 + $0x308] sm:$0xff]
        %v2097 = vld [vmem:[#allocation3 + $0x310] sm:$0xff]
        %v2098 = vld [vmem:[#allocation3 + $0x318] sm:$0xff]
        %v2099 = vld [vmem:[#allocation3 + $0x320] sm:$0xff]
        %v2100 = vld [vmem:[#allocation3 + $0x328] sm:$0xff]
        %v2101 = vld [vmem:[#allocation3 + $0x330] sm:$0xff]
        %v2102 = vld [vmem:[#allocation3 + $0x338] sm:$0xff]
        %v2103 = vld [vmem:[#allocation3 + $0x340] sm:$0xff]
        %v2104 = vld [vmem:[#allocation3 + $0x348] sm:$0xff]
        %v2105 = vld [vmem:[#allocation3 + $0x350] sm:$0xff]
        %v2106 = vld [vmem:[#allocation3 + $0x358] sm:$0xff]
        %v2107 = vld [vmem:[#allocation3 + $0x360] sm:$0xff]
        %v2108 = vld [vmem:[#allocation3 + $0x368] sm:$0xff]
        %v2109 = vld [vmem:[#allocation3 + $0x370] sm:$0xff]
        %v2110 = vld [vmem:[#allocation3 + $0x378] sm:$0xff]
        %v2111 = vld [vmem:[#allocation3 + $0x380] sm:$0xff]
        %v2112 = vld [vmem:[#allocation3 + $0x388] sm:$0xff]
        %v2113 = vld [vmem:[#allocation3 + $0x390] sm:$0xff]
        %v2114 = vld [vmem:[#allocation3 + $0x398] sm:$0xff]
        %v2115 = vld [vmem:[#allocation3 + $0x3a0] sm:$0xff]
        %v2116 = vld [vmem:[#allocation3 + $0x3a8] sm:$0xff]
        %v2117 = vld [vmem:[#allocation3 + $0x3b0] sm:$0xff]
        %v2118 = vld [vmem:[#allocation3 + $0x3b8] sm:$0xff]
        %v2119 = vld [vmem:[#allocation3 + $0x3c0] sm:$0xff]
        %v2120 = vld [vmem:[#allocation3 + $0x3c8] sm:$0xff]
        %v2121 = vld [vmem:[#allocation3 + $0x3d0] sm:$0xff]
        %v2122 = vld [vmem:[#allocation3 + $0x3d8] sm:$0xff]
        %v2123 = vld [vmem:[#allocation3 + $0x3e0] sm:$0xff]
        %v2124 = vld [vmem:[#allocation3 + $0x3e8] sm:$0xff]
        %v2125 = vld [vmem:[#allocation3 + $0x3f0] sm:$0xff]
        %v2126 = vld [vmem:[#allocation3 + $0x3f8] sm:$0xff]
        %v2127 = vld [vmem:[#allocation3 + $0x400] sm:$0xff]
        %v2128 = vld [vmem:[#allocation3 + $0x408] sm:$0xff]
        %v2129 = vld [vmem:[#allocation3 + $0x410] sm:$0xff]
        %v2130 = vld [vmem:[#allocation3 + $0x418] sm:$0xff]
        %v2131 = vld [vmem:[#allocation3 + $0x420] sm:$0xff]
        %v2132 = vld [vmem:[#allocation3 + $0x428] sm:$0xff]
        %v2133 = vld [vmem:[#allocation3 + $0x430] sm:$0xff]
        %v2134 = vld [vmem:[#allocation3 + $0x438] sm:$0xff]
        %v2135 = vld [vmem:[#allocation3 + $0x440] sm:$0xff]
        %v2136 = vld [vmem:[#allocation3 + $0x448] sm:$0xff]
        %v2137 = vld [vmem:[#allocation3 + $0x450] sm:$0xff]
        %v2138 = vld [vmem:[#allocation3 + $0x458] sm:$0xff]
        %v2139 = vld [vmem:[#allocation3 + $0x460] sm:$0xff]
        %v2140 = vld [vmem:[#allocation3 + $0x468] sm:$0xff]
        %v2141 = vld [vmem:[#allocation3 + $0x470] sm:$0xff]
        %v2142 = vld [vmem:[#allocation3 + $0x478] sm:$0xff]
        %v2143 = vld [vmem:[#allocation3 + $0x480] sm:$0xff]
        %v2144 = vld [vmem:[#allocation3 + $0x488] sm:$0xff]
        %v2145 = vld [vmem:[#allocation3 + $0x490] sm:$0xff]
        %v2146 = vld [vmem:[#allocation3 + $0x498] sm:$0xff]
        %v2147 = vld [vmem:[#allocation3 + $0x4a0] sm:$0xff]
        %v2148 = vld [vmem:[#allocation3 + $0x4a8] sm:$0xff]
        %v2149 = vld [vmem:[#allocation3 + $0x4b0] sm:$0xff]
        %v2150 = vld [vmem:[#allocation3 + $0x4b8] sm:$0xff]
        %v2151 = vld [vmem:[#allocation3 + $0x4c0] sm:$0xff]
        %v2152 = vld [vmem:[#allocation3 + $0x4c8] sm:$0xff]
        %v2153 = vld [vmem:[#allocation3 + $0x4d0] sm:$0xff]
        %v2154 = vld [vmem:[#allocation3 + $0x4d8] sm:$0xff]
        %v2155 = vld [vmem:[#allocation3 + $0x4e0] sm:$0xff]
        %v2156 = vld [vmem:[#allocation3 + $0x4e8] sm:$0xff]
        %v2157 = vld [vmem:[#allocation3 + $0x4f0] sm:$0xff]
        %v2158 = vld [vmem:[#allocation3 + $0x4f8] sm:$0xff]
        %v2159 = vld [vmem:[#allocation3 + $0x500] sm:$0xff]
        %v2160 = vld [vmem:[#allocation3 + $0x508] sm:$0xff]
        %v2161 = vld [vmem:[#allocation3 + $0x510] sm:$0xff]
        %v2162 = vld [vmem:[#allocation3 + $0x518] sm:$0xff]
        %v2163 = vld [vmem:[#allocation3 + $0x520] sm:$0xff]
        %v2164 = vld [vmem:[#allocation3 + $0x528] sm:$0xff]
        %v2165 = vld [vmem:[#allocation3 + $0x530] sm:$0xff]
        %v2166 = vld [vmem:[#allocation3 + $0x538] sm:$0xff]
        %v2167 = vld [vmem:[#allocation3 + $0x540] sm:$0xff]
        %v2168 = vld [vmem:[#allocation3 + $0x548] sm:$0xff]
        %v2169 = vld [vmem:[#allocation3 + $0x550] sm:$0xff]
        %v2170 = vld [vmem:[#allocation3 + $0x558] sm:$0xff]
        %v2171 = vld [vmem:[#allocation3 + $0x560] sm:$0xff]
        %v2172 = vld [vmem:[#allocation3 + $0x568] sm:$0xff]
        %v2173 = vld [vmem:[#allocation3 + $0x570] sm:$0xff]
        %v2174 = vld [vmem:[#allocation3 + $0x578] sm:$0xff]
        %v2175 = vld [vmem:[#allocation3 + $0x580] sm:$0xff]
        %v2176 = vld [vmem:[#allocation3 + $0x588] sm:$0xff]
        %v2177 = vld [vmem:[#allocation3 + $0x590] sm:$0xff]
        %v2178 = vld [vmem:[#allocation3 + $0x598] sm:$0xff]
        %v2179 = vld [vmem:[#allocation3 + $0x5a0] sm:$0xff]
        %v2180 = vld [vmem:[#allocation3 + $0x5a8] sm:$0xff]
        %v2181 = vld [vmem:[#allocation3 + $0x5b0] sm:$0xff]
        %v2182 = vld [vmem:[#allocation3 + $0x5b8] sm:$0xff]
        %v2183 = vld [vmem:[#allocation3 + $0x5c0] sm:$0xff]
        %v2184 = vld [vmem:[#allocation3 + $0x5c8] sm:$0xff]
        %v2185 = vld [vmem:[#allocation3 + $0x5d0] sm:$0xff]
        %v2186 = vld [vmem:[#allocation3 + $0x5d8] sm:$0xff]
        %v2187 = vld [vmem:[#allocation3 + $0x5e0] sm:$0xff]
        %v2188 = vld [vmem:[#allocation3 + $0x5e8] sm:$0xff]
        %v2189 = vld [vmem:[#allocation3 + $0x5f0] sm:$0xff]
        %v2190 = vld [vmem:[#allocation3 + $0x5f8] sm:$0xff]
        %v2191 = vld [vmem:[#allocation3 + $0x600] sm:$0xff]
        %v2192 = vld [vmem:[#allocation3 + $0x608] sm:$0xff]
        %v2193 = vld [vmem:[#allocation3 + $0x610] sm:$0xff]
        %v2194 = vld [vmem:[#allocation3 + $0x618] sm:$0xff]
        %v2195 = vld [vmem:[#allocation3 + $0x620] sm:$0xff]
        %v2196 = vld [vmem:[#allocation3 + $0x628] sm:$0xff]
        %v2197 = vld [vmem:[#allocation3 + $0x630] sm:$0xff]
        %v2198 = vld [vmem:[#allocation3 + $0x638] sm:$0xff]
        %v2199 = vld [vmem:[%s2] sm:$0x3f]
        %2201 = vset.pattern.permute.xlu0 0
        %2202 = vperm.xlu0 %2201, %v2199
        %v2203 = vpop.permute.xlu0 %2202
        %vm2205 = vcmask 588800
        %v2207 = vsel %vm2205, %v1998, 0
        %2209 = vmatprep.subr.mxu0 %v2000
        %2210 = vmatpush1.msra.mxu0 %v1999
        %2211 = vmatprep.subr.mxu0 %v2008
        %2212 = vmatpush1.msra.mxu0 %v2007
        %2213 = vmatprep.subr.mxu0 %v2016
        %2214 = vmatpush1.msra.mxu0 %v2015
        %2215 = vmatprep.subr.mxu0 %v2024
        %2216 = vmatpush1.msra.mxu0 %v2023
        %2217 = vmatprep.subr.mxu0 %v2032
        %2218 = vmatpush1.msra.mxu0 %v2031
        %2219 = vmatprep.subr.mxu0 %v2040
        %2220 = vmatpush1.msra.mxu0 %v2039
        %2221 = vmatprep.subr.mxu0 %v2048
        %2222 = vmatpush1.msra.mxu0 %v2047
        %2223 = vmatprep.subr.mxu0 %v2056
        %2224 = vmatpush1.msra.mxu0 %v2055
        %2225 = vmatprep.subr.mxu0 %v2064
        %2226 = vmatpush1.msra.mxu0 %v2063
        %2227 = vmatprep.subr.mxu0 %v2072
        %2228 = vmatpush1.msra.mxu0 %v2071
        %2229 = vmatprep.subr.mxu0 %v2080
        %2230 = vmatpush1.msra.mxu0 %v2079
        %2231 = vmatprep.subr.mxu0 %v2088
        %2232 = vmatpush1.msra.mxu0 %v2087
        %2233 = vmatprep.subr.mxu0 %v2096
        %2234 = vmatpush1.msra.mxu0 %v2095
        %2235 = vmatprep.subr.mxu0 %v2104
        %2236 = vmatpush1.msra.mxu0 %v2103
        %2237 = vmatprep.subr.mxu0 %v2112
        %2238 = vmatpush1.msra.mxu0 %v2111
        %2239 = vmatprep.subr.mxu0 %v2120
        %2240 = vmatpush1.msra.mxu0 %v2119
        %2241 = vmatprep.subr.mxu0 %v2128
        %2242 = vmatpush1.msra.mxu0 %v2127
        %2243 = vmatprep.subr.mxu0 %v2136
        %2244 = vmatpush1.msra.mxu0 %v2135
        %2245 = vmatprep.subr.mxu0 %v2144
        %2246 = vmatpush1.msra.mxu0 %v2143
        %2247 = vmatprep.subr.mxu0 %v2152
        %2248 = vmatpush1.msra.mxu0 %v2151
        %2249 = vmatprep.subr.mxu0 %v2160
        %2250 = vmatpush1.msra.mxu0 %v2159
        %2251 = vmatprep.subr.mxu0 %v2168
        %2252 = vmatpush1.msra.mxu0 %v2167
        %2253 = vmatprep.subr.mxu0 %v2176
        %2254 = vmatpush1.msra.mxu0 %v2175
        %2255 = vmatprep.subr.mxu0 %v2184
        %2256 = vmatpush1.msra.mxu0 %v2183
        %2257 = vmatprep.subr.mxu0 %v2192
        %2258 = vmatpush1.msra.mxu0 %v2191
        %2259 = vmatprep.subr.mxu0 0.0
        %2260 = vmatpush1.msra.mxu0 0.0
        %2261 = vmatprep.subr.mxu0 0.0
        %2262 = vmatpush1.msra.mxu0 0.0
        %2263 = vmatprep.subr.mxu0 0.0
        %2264 = vmatpush1.msra.mxu0 0.0
        %2265 = vmatprep.subr.mxu0 0.0
        %2266 = vmatpush1.msra.mxu0 0.0
        %2267 = vmatprep.subr.mxu0 0.0
        %2268 = vmatpush1.msra.mxu0 0.0
        %2269 = vmatprep.subr.mxu0 0.0
        %2270 = vmatpush1.msra.mxu0 0.0
        %2271 = vmatprep.subr.mxu0 0.0
        %2272 = vmatpush1.msra.mxu0 0.0
        %2273 = vmatprep.mubr.f32.mxu0 %v2207
        %2274 = vmatmul.mubr.f32.gmra.mrb[0].mxu0 %v1997
        %v2275 = vpop.f32.mrb[0].mxu0
        %v2276 = vadd.f32 %v2203, %v2275
        %v2277 = vpop.f32.mrb[0].mxu0
        %v2278 = vadd.f32 %v2203, %v2277
        %2279 = vdwg.mxu0
        %2280 = vmatprep.subr.mxu0 %v2002
        %2281 = vmatpush1.msra.mxu0 %v2001
        %2282 = vmatprep.subr.mxu0 %v2010
        %2283 = vmatpush1.msra.mxu0 %v2009
        %2284 = vmatprep.subr.mxu0 %v2018
        %2285 = vmatpush1.msra.mxu0 %v2017
        %2286 = vmatprep.subr.mxu0 %v2026
        %2287 = vmatpush1.msra.mxu0 %v2025
        %2288 = vmatprep.subr.mxu0 %v2034
        %2289 = vmatpush1.msra.mxu0 %v2033
        %2290 = vmatprep.subr.mxu0 %v2042
        %2291 = vmatpush1.msra.mxu0 %v2041
        %2292 = vmatprep.subr.mxu0 %v2050
        %2293 = vmatpush1.msra.mxu0 %v2049
        %2294 = vmatprep.subr.mxu0 %v2058
        %2295 = vmatpush1.msra.mxu0 %v2057
        %2296 = vmatprep.subr.mxu0 %v2066
        %2297 = vmatpush1.msra.mxu0 %v2065
        %2298 = vmatprep.subr.mxu0 %v2074
        %2299 = vmatpush1.msra.mxu0 %v2073
        %2300 = vmatprep.subr.mxu0 %v2082
        %2301 = vmatpush1.msra.mxu0 %v2081
        %2302 = vmatprep.subr.mxu0 %v2090
        %2303 = vmatpush1.msra.mxu0 %v2089
        %2304 = vmatprep.subr.mxu0 %v2098
        %2305 = vmatpush1.msra.mxu0 %v2097
        %2306 = vmatprep.subr.mxu0 %v2106
        %2307 = vmatpush1.msra.mxu0 %v2105
        %2308 = vmatprep.subr.mxu0 %v2114
        %2309 = vmatpush1.msra.mxu0 %v2113
        %2310 = vmatprep.subr.mxu0 %v2122
        %2311 = vmatpush1.msra.mxu0 %v2121
        %2312 = vmatprep.subr.mxu0 %v2130
        %2313 = vmatpush1.msra.mxu0 %v2129
        %2314 = vmatprep.subr.mxu0 %v2138
        %2315 = vmatpush1.msra.mxu0 %v2137
        %2316 = vmatprep.subr.mxu0 %v2146
        %2317 = vmatpush1.msra.mxu0 %v2145
        %2318 = vmatprep.subr.mxu0 %v2154
        %2319 = vmatpush1.msra.mxu0 %v2153
        %2320 = vmatprep.subr.mxu0 %v2162
        %2321 = vmatpush1.msra.mxu0 %v2161
        %2322 = vmatprep.subr.mxu0 %v2170
        %2323 = vmatpush1.msra.mxu0 %v2169
        %2324 = vmatprep.subr.mxu0 %v2178
        %2325 = vmatpush1.msra.mxu0 %v2177
        %2326 = vmatprep.subr.mxu0 %v2186
        %2327 = vmatpush1.msra.mxu0 %v2185
        %2328 = vmatprep.subr.mxu0 %v2194
        %2329 = vmatpush1.msra.mxu0 %v2193
        %2330 = vmatprep.subr.mxu0 0.0
        %2331 = vmatpush1.msra.mxu0 0.0
        %2332 = vmatprep.subr.mxu0 0.0
        %2333 = vmatpush1.msra.mxu0 0.0
        %2334 = vmatprep.subr.mxu0 0.0
        %2335 = vmatpush1.msra.mxu0 0.0
        %2336 = vmatprep.subr.mxu0 0.0
        %2337 = vmatpush1.msra.mxu0 0.0
        %2338 = vmatprep.subr.mxu0 0.0
        %2339 = vmatpush1.msra.mxu0 0.0
        %2340 = vmatprep.subr.mxu0 0.0
        %2341 = vmatpush1.msra.mxu0 0.0
        %2342 = vmatprep.subr.mxu0 0.0
        %2343 = vmatpush1.msra.mxu0 0.0
        %2344 = vmatprep.mubr.f32.mxu0 %v2207
        %2345 = vmatmul.mubr.f32.gmra.mrb[0].mxu0 %v1997
        %v2346 = vpop.f32.mrb[0].mxu0
        %v2347 = vadd.f32 %v2203, %v2346
        %v2348 = vpop.f32.mrb[0].mxu0
        %v2349 = vadd.f32 %v2203, %v2348
        %2350 = vdwg.mxu0
        %2351 = vmatprep.subr.mxu0 %v2004
        %2352 = vmatpush1.msra.mxu0 %v2003
        %2353 = vmatprep.subr.mxu0 %v2012
        %2354 = vmatpush1.msra.mxu0 %v2011
        %2355 = vmatprep.subr.mxu0 %v2020
        %2356 = vmatpush1.msra.mxu0 %v2019
        %2357 = vmatprep.subr.mxu0 %v2028
        %2358 = vmatpush1.msra.mxu0 %v2027
        %2359 = vmatprep.subr.mxu0 %v2036
        %2360 = vmatpush1.msra.mxu0 %v2035
        %2361 = vmatprep.subr.mxu0 %v2044
        %2362 = vmatpush1.msra.mxu0 %v2043
        %2363 = vmatprep.subr.mxu0 %v2052
        %2364 = vmatpush1.msra.mxu0 %v2051
        %2365 = vmatprep.subr.mxu0 %v2060
        %2366 = vmatpush1.msra.mxu0 %v2059
        %2367 = vmatprep.subr.mxu0 %v2068
        %2368 = vmatpush1.msra.mxu0 %v2067
        %2369 = vmatprep.subr.mxu0 %v2076
        %2370 = vmatpush1.msra.mxu0 %v2075
        %2371 = vmatprep.subr.mxu0 %v2084
        %2372 = vmatpush1.msra.mxu0 %v2083
        %2373 = vmatprep.subr.mxu0 %v2092
        %2374 = vmatpush1.msra.mxu0 %v2091
        %2375 = vmatprep.subr.mxu0 %v2100
        %2376 = vmatpush1.msra.mxu0 %v2099
        %2377 = vmatprep.subr.mxu0 %v2108
        %2378 = vmatpush1.msra.mxu0 %v2107
        %2379 = vmatprep.subr.mxu0 %v2116
        %2380 = vmatpush1.msra.mxu0 %v2115
        %2381 = vmatprep.subr.mxu0 %v2124
        %2382 = vmatpush1.msra.mxu0 %v2123
        %2383 = vmatprep.subr.mxu0 %v2132
        %2384 = vmatpush1.msra.mxu0 %v2131
        %2385 = vmatprep.subr.mxu0 %v2140
        %2386 = vmatpush1.msra.mxu0 %v2139
        %2387 = vmatprep.subr.mxu0 %v2148
        %2388 = vmatpush1.msra.mxu0 %v2147
        %2389 = vmatprep.subr.mxu0 %v2156
        %2390 = vmatpush1.msra.mxu0 %v2155
        %2391 = vmatprep.subr.mxu0 %v2164
        %2392 = vmatpush1.msra.mxu0 %v2163
        %2393 = vmatprep.subr.mxu0 %v2172
        %2394 = vmatpush1.msra.mxu0 %v2171
        %2395 = vmatprep.subr.mxu0 %v2180
        %2396 = vmatpush1.msra.mxu0 %v2179
        %2397 = vmatprep.subr.mxu0 %v2188
        %2398 = vmatpush1.msra.mxu0 %v2187
        %2399 = vmatprep.subr.mxu0 %v2196
        %2400 = vmatpush1.msra.mxu0 %v2195
        %2401 = vmatprep.subr.mxu0 0.0
        %2402 = vmatpush1.msra.mxu0 0.0
        %2403 = vmatprep.subr.mxu0 0.0
        %2404 = vmatpush1.msra.mxu0 0.0
        %2405 = vmatprep.subr.mxu0 0.0
        %2406 = vmatpush1.msra.mxu0 0.0
        %2407 = vmatprep.subr.mxu0 0.0
        %2408 = vmatpush1.msra.mxu0 0.0
        %2409 = vmatprep.subr.mxu0 0.0
        %2410 = vmatpush1.msra.mxu0 0.0
        %2411 = vmatprep.subr.mxu0 0.0
        %2412 = vmatpush1.msra.mxu0 0.0
        %2413 = vmatprep.subr.mxu0 0.0
        %2414 = vmatpush1.msra.mxu0 0.0
        %2415 = vmatprep.mubr.f32.mxu0 %v2207
        %2416 = vmatmul.mubr.f32.gmra.mrb[0].mxu0 %v1997
        %v2417 = vpop.f32.mrb[0].mxu0
        %v2418 = vadd.f32 %v2203, %v2417
        %v2419 = vpop.f32.mrb[0].mxu0
        %v2420 = vadd.f32 %v2203, %v2419
        %2421 = vdwg.mxu0
        %2422 = vmatprep.subr.mxu0 %v2006
        %2423 = vmatpush1.msra.mxu0 %v2005
        %2424 = vmatprep.subr.mxu0 %v2014
        %2425 = vmatpush1.msra.mxu0 %v2013
        %2426 = vmatprep.subr.mxu0 %v2022
        %2427 = vmatpush1.msra.mxu0 %v2021
        %2428 = vmatprep.subr.mxu0 %v2030
        %2429 = vmatpush1.msra.mxu0 %v2029
        %2430 = vmatprep.subr.mxu0 %v2038
        %2431 = vmatpush1.msra.mxu0 %v2037
        %2432 = vmatprep.subr.mxu0 %v2046
        %2433 = vmatpush1.msra.mxu0 %v2045
        %2434 = vmatprep.subr.mxu0 %v2054
        %2435 = vmatpush1.msra.mxu0 %v2053
        %2436 = vmatprep.subr.mxu0 %v2062
        %2437 = vmatpush1.msra.mxu0 %v2061
        %2438 = vmatprep.subr.mxu0 %v2070
        %2439 = vmatpush1.msra.mxu0 %v2069
        %2440 = vmatprep.subr.mxu0 %v2078
        %2441 = vmatpush1.msra.mxu0 %v2077
        %2442 = vmatprep.subr.mxu0 %v2086
        %2443 = vmatpush1.msra.mxu0 %v2085
        %2444 = vmatprep.subr.mxu0 %v2094
        %2445 = vmatpush1.msra.mxu0 %v2093
        %2446 = vmatprep.subr.mxu0 %v2102
        %2447 = vmatpush1.msra.mxu0 %v2101
        %2448 = vmatprep.subr.mxu0 %v2110
        %2449 = vmatpush1.msra.mxu0 %v2109
        %2450 = vmatprep.subr.mxu0 %v2118
        %2451 = vmatpush1.msra.mxu0 %v2117
        %2452 = vmatprep.subr.mxu0 %v2126
        %2453 = vmatpush1.msra.mxu0 %v2125
        %2454 = vmatprep.subr.mxu0 %v2134
        %2455 = vmatpush1.msra.mxu0 %v2133
        %2456 = vmatprep.subr.mxu0 %v2142
        %2457 = vmatpush1.msra.mxu0 %v2141
        %2458 = vmatprep.subr.mxu0 %v2150
        %2459 = vmatpush1.msra.mxu0 %v2149
        %2460 = vmatprep.subr.mxu0 %v2158
        %2461 = vmatpush1.msra.mxu0 %v2157
        %2462 = vmatprep.subr.mxu0 %v2166
        %2463 = vmatpush1.msra.mxu0 %v2165
        %2464 = vmatprep.subr.mxu0 %v2174
        %2465 = vmatpush1.msra.mxu0 %v2173
        %2466 = vmatprep.subr.mxu0 %v2182
        %2467 = vmatpush1.msra.mxu0 %v2181
        %2468 = vmatprep.subr.mxu0 %v2190
        %2469 = vmatpush1.msra.mxu0 %v2189
        %2470 = vmatprep.subr.mxu0 %v2198
        %2471 = vmatpush1.msra.mxu0 %v2197
        %2472 = vmatprep.subr.mxu0 0.0
        %2473 = vmatpush1.msra.mxu0 0.0
        %2474 = vmatprep.subr.mxu0 0.0
        %2475 = vmatpush1.msra.mxu0 0.0
        %2476 = vmatprep.subr.mxu0 0.0
        %2477 = vmatpush1.msra.mxu0 0.0
        %2478 = vmatprep.subr.mxu0 0.0
        %2479 = vmatpush1.msra.mxu0 0.0
        %2480 = vmatprep.subr.mxu0 0.0
        %2481 = vmatpush1.msra.mxu0 0.0
        %2482 = vmatprep.subr.mxu0 0.0
        %2483 = vmatpush1.msra.mxu0 0.0
        %2484 = vmatprep.subr.mxu0 0.0
        %2485 = vmatpush1.msra.mxu0 0.0
        %2486 = vmatprep.mubr.f32.mxu0 %v2207
        %2487 = vmatmul.mubr.f32.gmra.mrb[0].mxu0 %v1997
        %v2488 = vpop.f32.mrb[0].mxu0
        %v2489 = vadd.f32 %v2203, %v2488
        %v2490 = vpop.f32.mrb[0].mxu0
        %v2491 = vadd.f32 %v2203, %v2490
        %2492 = vdwg.mxu0
        %v2493 = vmax.f32 %v2276, 0.0
        %v2494 = vmax.f32 %v2278, 0.0
        %v2495 = vmax.f32 %v2347, 0.0
        %v2496 = vmax.f32 %v2349, 0.0
        %v2497 = vmax.f32 %v2418, 0.0
        %v2498 = vmax.f32 %v2420, 0.0
        %v2499 = vmax.f32 %v2489, 0.0
        %v2500 = vmax.f32 %v2491, 0.0
        %2501 = vst [vmem:[#allocation4] sm:$0xff] 0.0
        %2502 = vst [vmem:[#allocation4 + $0x8] sm:$0xff] 0.0
        %2503 = vst [vmem:[#allocation4 + $0x10] sm:$0xff] 0.0
        %2504 = vst [vmem:[#allocation4 + $0x18] sm:$0xff] 0.0
        %2505 = vst [vmem:[#allocation4 + $0x20] sm:$0xff] 0.0
        %2506 = vst [vmem:[#allocation4 + $0x28] sm:$0xff] 0.0
        %2507 = vst [vmem:[#allocation4 + $0x30] sm:$0xff] 0.0
        %2508 = vst [vmem:[#allocation4 + $0x38] sm:$0xff] 0.0
        %2509 = vst [vmem:[#allocation4 + $0x40] sm:$0xff] 0.0
        %2510 = vst [vmem:[#allocation4] sm:$0x3f] %v2493
        %2511 = vst [vmem:[#allocation4 + $0x8] sm:$0x3f] %v2494
        %2512 = vst [vmem:[#allocation4 + $0x10] sm:$0x3f] %v2495
        %2513 = vst [vmem:[#allocation4 + $0x18] sm:$0x3f] %v2496
        %2514 = vst [vmem:[#allocation4 + $0x20] sm:$0x3f] %v2497
        %2515 = vst [vmem:[#allocation4 + $0x28] sm:$0x3f] %v2498
        %2516 = vst [vmem:[#allocation4 + $0x30] sm:$0x3f] %v2499
        %2517 = vst [vmem:[#allocation4 + $0x38] sm:$0x3f] %v2500
        %v2518 = vld [vmem:[#allocation4] sm:$0x3f]
        %v2519 = vld [vmem:[#allocation4 + $0x8] sm:$0x3f]
        %v2520 = vld [vmem:[#allocation4 + $0x10] sm:$0x3f]
        %v2521 = vld [vmem:[#allocation4 + $0x18] sm:$0x3f]
        %v2522 = vld [vmem:[#allocation4 + $0x20] sm:$0x3f]
        %v2523 = vld [vmem:[#allocation4 + $0x28] sm:$0x3f]
        %v2524 = vld [vmem:[#allocation4 + $0x30] sm:$0x3f]
        %v2525 = vld [vmem:[#allocation4 + $0x38] sm:$0x3f]
        %v2526 = vld [vmem:[#allocation4] sm:$0x3f]
        %v2527 = vld [vmem:[#allocation4 + $0x8] sm:$0x3f]
        %v2528 = vld [vmem:[#allocation4 + $0x10] sm:$0x3f]
        %v2529 = vld [vmem:[#allocation4 + $0x18] sm:$0x3f]
        %v2530 = vld [vmem:[#allocation4 + $0x20] sm:$0x3f]
        %v2531 = vld [vmem:[#allocation4 + $0x28] sm:$0x3f]
        %v2532 = vld [vmem:[#allocation4 + $0x30] sm:$0x3f]
        %v2533 = vld [vmem:[#allocation4 + $0x38] sm:$0x3f]
        %v2534 = vld [vmem:[#allocation4 + $0x40] sm:$0x3f]
        %2544 = vrot.lane.b32.xlu0 %v2526, 127
        %v2545 = vpop.permute.xlu0 %2544
        %2546 = vrot.lane.b32.xlu0 %v2527, 127
        %v2547 = vpop.permute.xlu0 %2546
        %2548 = vrot.lane.b32.xlu0 %v2528, 127
        %v2549 = vpop.permute.xlu0 %2548
        %2550 = vrot.lane.b32.xlu0 %v2529, 127
        %v2551 = vpop.permute.xlu0 %2550
        %2552 = vrot.lane.b32.xlu0 %v2530, 127
        %v2553 = vpop.permute.xlu0 %2552
        %2554 = vrot.lane.b32.xlu0 %v2531, 127
        %v2555 = vpop.permute.xlu0 %2554
        %2556 = vrot.lane.b32.xlu0 %v2532, 127
        %v2557 = vpop.permute.xlu0 %2556
        %2558 = vrot.lane.b32.xlu0 %v2533, 127
        %v2559 = vpop.permute.xlu0 %2558
        %2560 = vrot.lane.b32.xlu0 %v2534, 127
        %v2561 = vpop.permute.xlu0 %2560
        %v2562 = vsel %vm618, %v2545, %v2547
        %v2563 = vsel %vm618, %v2547, %v2549
        %v2564 = vsel %vm618, %v2549, %v2551
        %v2565 = vsel %vm618, %v2551, %v2553
        %v2566 = vsel %vm618, %v2553, %v2555
        %v2567 = vsel %vm618, %v2555, %v2557
        %v2568 = vsel %vm618, %v2557, %v2559
        %v2569 = vsel %vm618, %v2559, %v2561
        %v2578 = vmax.f32 %v2518, %v2562
        %v2579 = vmax.f32 %v2519, %v2563
        %v2580 = vmax.f32 %v2520, %v2564
        %v2581 = vmax.f32 %v2521, %v2565
        %v2582 = vmax.f32 %v2522, %v2566
        %v2583 = vmax.f32 %v2523, %v2567
        %v2584 = vmax.f32 %v2524, %v2568
        %v2585 = vmax.f32 %v2525, %v2569
        %v2587 = vmax.f32 %v2526, %v2562
        %v2588 = vmax.f32 %v2527, %v2563
        %v2589 = vmax.f32 %v2528, %v2564
        %v2590 = vmax.f32 %v2529, %v2565
        %v2591 = vmax.f32 %v2530, %v2566
        %v2592 = vmax.f32 %v2531, %v2567
        %v2593 = vmax.f32 %v2532, %v2568
        %v2594 = vmax.f32 %v2533, %v2569
        %v2595 = vmax.f32 %v2534, %v2561
        %2605 = vrot.lane.b32.xlu0 %v2587, 96
        %v2606 = vpop.permute.xlu0 %2605
        %2607 = vrot.lane.b32.xlu0 %v2588, 96
        %v2608 = vpop.permute.xlu0 %2607
        %2609 = vrot.lane.b32.xlu0 %v2589, 96
        %v2610 = vpop.permute.xlu0 %2609
        %2611 = vrot.lane.b32.xlu0 %v2590, 96
        %v2612 = vpop.permute.xlu0 %2611
        %2613 = vrot.lane.b32.xlu0 %v2591, 96
        %v2614 = vpop.permute.xlu0 %2613
        %2615 = vrot.lane.b32.xlu0 %v2592, 96
        %v2616 = vpop.permute.xlu0 %2615
        %2617 = vrot.lane.b32.xlu0 %v2593, 96
        %v2618 = vpop.permute.xlu0 %2617
        %2619 = vrot.lane.b32.xlu0 %v2594, 96
        %v2620 = vpop.permute.xlu0 %2619
        %2621 = vrot.lane.b32.xlu0 %v2595, 96
        %v2622 = vpop.permute.xlu0 %2621
        %v2623 = vsel %vm862, %v2606, %v2608
        %v2624 = vsel %vm862, %v2608, %v2610
        %v2625 = vsel %vm862, %v2610, %v2612
        %v2626 = vsel %vm862, %v2612, %v2614
        %v2627 = vsel %vm862, %v2614, %v2616
        %v2628 = vsel %vm862, %v2616, %v2618
        %v2629 = vsel %vm862, %v2618, %v2620
        %v2630 = vsel %vm862, %v2620, %v2622
        %v2639 = vmax.f32 %v2578, %v2623
        %v2640 = vmax.f32 %v2579, %v2624
        %v2641 = vmax.f32 %v2580, %v2625
        %v2642 = vmax.f32 %v2581, %v2626
        %v2643 = vmax.f32 %v2582, %v2627
        %v2644 = vmax.f32 %v2583, %v2628
        %v2645 = vmax.f32 %v2584, %v2629
        %v2646 = vmax.f32 %v2585, %v2630
        %2647 = vst [vmem:[#allocation5] sm:$0xff] 0.0
        %2648 = vst [vmem:[#allocation5 + $0x8] sm:$0xff] 0.0
        %2649 = vst [vmem:[#allocation5 + $0x10] sm:$0xff] 0.0
        %2650 = vst [vmem:[#allocation5 + $0x18] sm:$0xff] 0.0
        %2651 = vst [vmem:[#allocation5 + $0x20] sm:$0xff] 0.0
        %2652 = vst [vmem:[#allocation5 + $0x28] sm:$0xff] 0.0
        %2653 = vst [vmem:[#allocation5 + $0x30] sm:$0xff] 0.0
        %2654 = vst [vmem:[#allocation5 + $0x38] sm:$0xff] 0.0
        %2655 = vst [vmem:[#allocation5 + $0x40] sm:$0xff] 0.0
        %2656 = vst [vmem:[#allocation5 + $0x48] sm:$0xff] 0.0
        %2657 = vst [vmem:[#allocation5 + $0x50] sm:$0xff] 0.0
        %2658 = vst [vmem:[#allocation5] sm:$0x3f] %v2639
        %2659 = vst [vmem:[#allocation5 + $0x8] sm:$0x3f] %v2640
        %2660 = vst [vmem:[#allocation5 + $0x10] sm:$0x3f] %v2641
        %2661 = vst [vmem:[#allocation5 + $0x18] sm:$0x3f] %v2642
        %2662 = vst [vmem:[#allocation5 + $0x20] sm:$0x3f] %v2643
        %2663 = vst [vmem:[#allocation5 + $0x28] sm:$0x3f] %v2644
        %2664 = vst [vmem:[#allocation5 + $0x30] sm:$0x3f] %v2645
        %2665 = vst [vmem:[#allocation5 + $0x38] sm:$0x3f] %v2646
        %v2666 = vld [vmem:[#allocation5] sm:$0xff]
        %v2667 = vld [vmem:[#allocation5 + $0x8] sm:$0xff]
        %v2668 = vld [vmem:[#allocation5 + $0x10] sm:$0xff]
        %v2669 = vld [vmem:[#allocation5 + $0x18] sm:$0xff]
        %v2670 = vld [vmem:[#allocation5 + $0x20] sm:$0xff]
        %v2671 = vld [vmem:[#allocation5 + $0x28] sm:$0xff]
        %v2672 = vld [vmem:[#allocation5 + $0x30] sm:$0xff]
        %v2673 = vld [vmem:[#allocation5 + $0x38] sm:$0xff]
        %2674 = vst [vmem:[#allocation6] sm:$0xff] %v2666
        %2675 = vst [vmem:[#allocation6 + $0x8] sm:$0xff] %v2667
        %2676 = vst [vmem:[#allocation6 + $0x10] sm:$0xff] %v2668
        %2677 = vst [vmem:[#allocation6 + $0x18] sm:$0xff] %v2669
        %2678 = vst [vmem:[#allocation6 + $0x20] sm:$0xff] %v2670
        %2679 = vst [vmem:[#allocation6 + $0x28] sm:$0xff] %v2671
        %2680 = vst [vmem:[#allocation6 + $0x30] sm:$0xff] %v2672
        %2681 = vst [vmem:[#allocation6 + $0x38] sm:$0xff] %v2673
        %v2682 = vld [vmem:[#allocation5] sm:$0xff]
        %v2683 = vld [vmem:[#allocation5 + $0x8] sm:$0xff]
        %v2684 = vld [vmem:[#allocation5 + $0x10] sm:$0xff]
        %v2685 = vld [vmem:[#allocation5 + $0x18] sm:$0xff]
        %v2686 = vld [vmem:[#allocation5 + $0x20] sm:$0xff]
        %v2687 = vld [vmem:[#allocation5 + $0x28] sm:$0xff]
        %v2688 = vld [vmem:[#allocation5 + $0x30] sm:$0xff]
        %v2689 = vld [vmem:[#allocation5 + $0x38] sm:$0xff]
        %v2690 = vld [vmem:[#allocation5 + $0x40] sm:$0xff]
        %2700 = vrot.lane.b32.xlu0 %v2682, 126
        %v2701 = vpop.permute.xlu0 %2700
        %2702 = vrot.lane.b32.xlu0 %v2683, 126
        %v2703 = vpop.permute.xlu0 %2702
        %2704 = vrot.lane.b32.xlu0 %v2684, 126
        %v2705 = vpop.permute.xlu0 %2704
        %2706 = vrot.lane.b32.xlu0 %v2685, 126
        %v2707 = vpop.permute.xlu0 %2706
        %2708 = vrot.lane.b32.xlu0 %v2686, 126
        %v2709 = vpop.permute.xlu0 %2708
        %2710 = vrot.lane.b32.xlu0 %v2687, 126
        %v2711 = vpop.permute.xlu0 %2710
        %2712 = vrot.lane.b32.xlu0 %v2688, 126
        %v2713 = vpop.permute.xlu0 %2712
        %2714 = vrot.lane.b32.xlu0 %v2689, 126
        %v2715 = vpop.permute.xlu0 %2714
        %2716 = vrot.lane.b32.xlu0 %v2690, 126
        %v2717 = vpop.permute.xlu0 %2716
        %v2718 = vsel %vm679, %v2701, %v2703
        %v2719 = vsel %vm679, %v2703, %v2705
        %v2720 = vsel %vm679, %v2705, %v2707
        %v2721 = vsel %vm679, %v2707, %v2709
        %v2722 = vsel %vm679, %v2709, %v2711
        %v2723 = vsel %vm679, %v2711, %v2713
        %v2724 = vsel %vm679, %v2713, %v2715
        %v2725 = vsel %vm679, %v2715, %v2717
        %2734 = vst [vmem:[#allocation6 + $0x40] sm:$0xff] %v2718
        %2735 = vst [vmem:[#allocation6 + $0x48] sm:$0xff] %v2719
        %2736 = vst [vmem:[#allocation6 + $0x50] sm:$0xff] %v2720
        %2737 = vst [vmem:[#allocation6 + $0x58] sm:$0xff] %v2721
        %2738 = vst [vmem:[#allocation6 + $0x60] sm:$0xff] %v2722
        %2739 = vst [vmem:[#allocation6 + $0x68] sm:$0xff] %v2723
        %2740 = vst [vmem:[#allocation6 + $0x70] sm:$0xff] %v2724
        %2741 = vst [vmem:[#allocation6 + $0x78] sm:$0xff] %v2725
        %v2742 = vld [vmem:[#allocation5] sm:$0xff]
        %v2743 = vld [vmem:[#allocation5 + $0x8] sm:$0xff]
        %v2744 = vld [vmem:[#allocation5 + $0x10] sm:$0xff]
        %v2745 = vld [vmem:[#allocation5 + $0x18] sm:$0xff]
        %v2746 = vld [vmem:[#allocation5 + $0x20] sm:$0xff]
        %v2747 = vld [vmem:[#allocation5 + $0x28] sm:$0xff]
        %v2748 = vld [vmem:[#allocation5 + $0x30] sm:$0xff]
        %v2749 = vld [vmem:[#allocation5 + $0x38] sm:$0xff]
        %v2750 = vld [vmem:[#allocation5 + $0x40] sm:$0xff]
        %2760 = vrot.lane.b32.xlu0 %v2742, 124
        %v2761 = vpop.permute.xlu0 %2760
        %2762 = vrot.lane.b32.xlu0 %v2743, 124
        %v2763 = vpop.permute.xlu0 %2762
        %2764 = vrot.lane.b32.xlu0 %v2744, 124
        %v2765 = vpop.permute.xlu0 %2764
        %2766 = vrot.lane.b32.xlu0 %v2745, 124
        %v2767 = vpop.permute.xlu0 %2766
        %2768 = vrot.lane.b32.xlu0 %v2746, 124
        %v2769 = vpop.permute.xlu0 %2768
        %2770 = vrot.lane.b32.xlu0 %v2747, 124
        %v2771 = vpop.permute.xlu0 %2770
        %2772 = vrot.lane.b32.xlu0 %v2748, 124
        %v2773 = vpop.permute.xlu0 %2772
        %2774 = vrot.lane.b32.xlu0 %v2749, 124
        %v2775 = vpop.permute.xlu0 %2774
        %2776 = vrot.lane.b32.xlu0 %v2750, 124
        %v2777 = vpop.permute.xlu0 %2776
        %v2778 = vsel %vm801, %v2761, %v2763
        %v2779 = vsel %vm801, %v2763, %v2765
        %v2780 = vsel %vm801, %v2765, %v2767
        %v2781 = vsel %vm801, %v2767, %v2769
        %v2782 = vsel %vm801, %v2769, %v2771
        %v2783 = vsel %vm801, %v2771, %v2773
        %v2784 = vsel %vm801, %v2773, %v2775
        %v2785 = vsel %vm801, %v2775, %v2777
        %2794 = vst [vmem:[#allocation6 + $0x80] sm:$0xff] %v2778
        %2795 = vst [vmem:[#allocation6 + $0x88] sm:$0xff] %v2779
        %2796 = vst [vmem:[#allocation6 + $0x90] sm:$0xff] %v2780
        %2797 = vst [vmem:[#allocation6 + $0x98] sm:$0xff] %v2781
        %2798 = vst [vmem:[#allocation6 + $0xa0] sm:$0xff] %v2782
        %2799 = vst [vmem:[#allocation6 + $0xa8] sm:$0xff] %v2783
        %2800 = vst [vmem:[#allocation6 + $0xb0] sm:$0xff] %v2784
        %2801 = vst [vmem:[#allocation6 + $0xb8] sm:$0xff] %v2785
        %v2802 = vld [vmem:[#allocation5] sm:$0xff]
        %v2803 = vld [vmem:[#allocation5 + $0x8] sm:$0xff]
        %v2804 = vld [vmem:[#allocation5 + $0x10] sm:$0xff]
        %v2805 = vld [vmem:[#allocation5 + $0x18] sm:$0xff]
        %v2806 = vld [vmem:[#allocation5 + $0x20] sm:$0xff]
        %v2807 = vld [vmem:[#allocation5 + $0x28] sm:$0xff]
        %v2808 = vld [vmem:[#allocation5 + $0x30] sm:$0xff]
        %v2809 = vld [vmem:[#allocation5 + $0x38] sm:$0xff]
        %v2810 = vld [vmem:[#allocation5 + $0x40] sm:$0xff]
        %2820 = vrot.lane.b32.xlu0 %v2802, 122
        %v2821 = vpop.permute.xlu0 %2820
        %2822 = vrot.lane.b32.xlu0 %v2803, 122
        %v2823 = vpop.permute.xlu0 %2822
        %2824 = vrot.lane.b32.xlu0 %v2804, 122
        %v2825 = vpop.permute.xlu0 %2824
        %2826 = vrot.lane.b32.xlu0 %v2805, 122
        %v2827 = vpop.permute.xlu0 %2826
        %2828 = vrot.lane.b32.xlu0 %v2806, 122
        %v2829 = vpop.permute.xlu0 %2828
        %2830 = vrot.lane.b32.xlu0 %v2807, 122
        %v2831 = vpop.permute.xlu0 %2830
        %2832 = vrot.lane.b32.xlu0 %v2808, 122
        %v2833 = vpop.permute.xlu0 %2832
        %2834 = vrot.lane.b32.xlu0 %v2809, 122
        %v2835 = vpop.permute.xlu0 %2834
        %2836 = vrot.lane.b32.xlu0 %v2810, 122
        %v2837 = vpop.permute.xlu0 %2836
        %vm2838 = vcmask 998400
        %v2839 = vsel %vm2838, %v2821, %v2823
        %v2840 = vsel %vm2838, %v2823, %v2825
        %v2841 = vsel %vm2838, %v2825, %v2827
        %v2842 = vsel %vm2838, %v2827, %v2829
        %v2843 = vsel %vm2838, %v2829, %v2831
        %v2844 = vsel %vm2838, %v2831, %v2833
        %v2845 = vsel %vm2838, %v2833, %v2835
        %v2846 = vsel %vm2838, %v2835, %v2837
        %2855 = vst [vmem:[#allocation6 + $0xc0] sm:$0xff] %v2839
        %2856 = vst [vmem:[#allocation6 + $0xc8] sm:$0xff] %v2840
        %2857 = vst [vmem:[#allocation6 + $0xd0] sm:$0xff] %v2841
        %2858 = vst [vmem:[#allocation6 + $0xd8] sm:$0xff] %v2842
        %2859 = vst [vmem:[#allocation6 + $0xe0] sm:$0xff] %v2843
        %2860 = vst [vmem:[#allocation6 + $0xe8] sm:$0xff] %v2844
        %2861 = vst [vmem:[#allocation6 + $0xf0] sm:$0xff] %v2845
        %2862 = vst [vmem:[#allocation6 + $0xf8] sm:$0xff] %v2846
        %v2863 = vld [vmem:[#allocation5] sm:$0xff]
        %v2864 = vld [vmem:[#allocation5 + $0x8] sm:$0xff]
        %v2865 = vld [vmem:[#allocation5 + $0x10] sm:$0xff]
        %v2866 = vld [vmem:[#allocation5 + $0x18] sm:$0xff]
        %v2867 = vld [vmem:[#allocation5 + $0x20] sm:$0xff]
        %v2868 = vld [vmem:[#allocation5 + $0x28] sm:$0xff]
        %v2869 = vld [vmem:[#allocation5 + $0x30] sm:$0xff]
        %v2870 = vld [vmem:[#allocation5 + $0x38] sm:$0xff]
        %v2871 = vld [vmem:[#allocation5 + $0x40] sm:$0xff]
        %2881 = vrot.lane.b32.xlu0 %v2863, 120
        %v2882 = vpop.permute.xlu0 %2881
        %2883 = vrot.lane.b32.xlu0 %v2864, 120
        %v2884 = vpop.permute.xlu0 %2883
        %2885 = vrot.lane.b32.xlu0 %v2865, 120
        %v2886 = vpop.permute.xlu0 %2885
        %2887 = vrot.lane.b32.xlu0 %v2866, 120
        %v2888 = vpop.permute.xlu0 %2887
        %2889 = vrot.lane.b32.xlu0 %v2867, 120
        %v2890 = vpop.permute.xlu0 %2889
        %2891 = vrot.lane.b32.xlu0 %v2868, 120
        %v2892 = vpop.permute.xlu0 %2891
        %2893 = vrot.lane.b32.xlu0 %v2869, 120
        %v2894 = vpop.permute.xlu0 %2893
        %2895 = vrot.lane.b32.xlu0 %v2870, 120
        %v2896 = vpop.permute.xlu0 %2895
        %2897 = vrot.lane.b32.xlu0 %v2871, 120
        %v2898 = vpop.permute.xlu0 %2897
        %vm2899 = vcmask 982016
        %v2900 = vsel %vm2899, %v2882, %v2884
        %v2901 = vsel %vm2899, %v2884, %v2886
        %v2902 = vsel %vm2899, %v2886, %v2888
        %v2903 = vsel %vm2899, %v2888, %v2890
        %v2904 = vsel %vm2899, %v2890, %v2892
        %v2905 = vsel %vm2899, %v2892, %v2894
        %v2906 = vsel %vm2899, %v2894, %v2896
        %v2907 = vsel %vm2899, %v2896, %v2898
        %2916 = vst [vmem:[#allocation6 + $0x100] sm:$0xff] %v2900
        %2917 = vst [vmem:[#allocation6 + $0x108] sm:$0xff] %v2901
        %2918 = vst [vmem:[#allocation6 + $0x110] sm:$0xff] %v2902
        %2919 = vst [vmem:[#allocation6 + $0x118] sm:$0xff] %v2903
        %2920 = vst [vmem:[#allocation6 + $0x120] sm:$0xff] %v2904
        %2921 = vst [vmem:[#allocation6 + $0x128] sm:$0xff] %v2905
        %2922 = vst [vmem:[#allocation6 + $0x130] sm:$0xff] %v2906
        %2923 = vst [vmem:[#allocation6 + $0x138] sm:$0xff] %v2907
        %v2924 = vld [vmem:[#allocation5] sm:$0xff]
        %v2925 = vld [vmem:[#allocation5 + $0x8] sm:$0xff]
        %v2926 = vld [vmem:[#allocation5 + $0x10] sm:$0xff]
        %v2927 = vld [vmem:[#allocation5 + $0x18] sm:$0xff]
        %v2928 = vld [vmem:[#allocation5 + $0x20] sm:$0xff]
        %v2929 = vld [vmem:[#allocation5 + $0x28] sm:$0xff]
        %v2930 = vld [vmem:[#allocation5 + $0x30] sm:$0xff]
        %v2931 = vld [vmem:[#allocation5 + $0x38] sm:$0xff]
        %v2932 = vld [vmem:[#allocation5 + $0x40] sm:$0xff]
        %2942 = vrot.lane.b32.xlu0 %v2924, 64
        %v2943 = vpop.permute.xlu0 %2942
        %2944 = vrot.lane.b32.xlu0 %v2925, 64
        %v2945 = vpop.permute.xlu0 %2944
        %2946 = vrot.lane.b32.xlu0 %v2926, 64
        %v2947 = vpop.permute.xlu0 %2946
        %2948 = vrot.lane.b32.xlu0 %v2927, 64
        %v2949 = vpop.permute.xlu0 %2948
        %2950 = vrot.lane.b32.xlu0 %v2928, 64
        %v2951 = vpop.permute.xlu0 %2950
        %2952 = vrot.lane.b32.xlu0 %v2929, 64
        %v2953 = vpop.permute.xlu0 %2952
        %2954 = vrot.lane.b32.xlu0 %v2930, 64
        %v2955 = vpop.permute.xlu0 %2954
        %2956 = vrot.lane.b32.xlu0 %v2931, 64
        %v2957 = vpop.permute.xlu0 %2956
        %2958 = vrot.lane.b32.xlu0 %v2932, 64
        %v2959 = vpop.permute.xlu0 %2958
        %v2960 = vsel %vm1167, %v2943, %v2945
        %v2961 = vsel %vm1167, %v2945, %v2947
        %v2962 = vsel %vm1167, %v2947, %v2949
        %v2963 = vsel %vm1167, %v2949, %v2951
        %v2964 = vsel %vm1167, %v2951, %v2953
        %v2965 = vsel %vm1167, %v2953, %v2955
        %v2966 = vsel %vm1167, %v2955, %v2957
        %v2967 = vsel %vm1167, %v2957, %v2959
        %2976 = vst [vmem:[#allocation6 + $0x140] sm:$0xff] %v2960
        %2977 = vst [vmem:[#allocation6 + $0x148] sm:$0xff] %v2961
        %2978 = vst [vmem:[#allocation6 + $0x150] sm:$0xff] %v2962
        %2979 = vst [vmem:[#allocation6 + $0x158] sm:$0xff] %v2963
        %2980 = vst [vmem:[#allocation6 + $0x160] sm:$0xff] %v2964
        %2981 = vst [vmem:[#allocation6 + $0x168] sm:$0xff] %v2965
        %2982 = vst [vmem:[#allocation6 + $0x170] sm:$0xff] %v2966
        %2983 = vst [vmem:[#allocation6 + $0x178] sm:$0xff] %v2967
        %v2984 = vld [vmem:[#allocation5] sm:$0xff]
        %v2985 = vld [vmem:[#allocation5 + $0x8] sm:$0xff]
        %v2986 = vld [vmem:[#allocation5 + $0x10] sm:$0xff]
        %v2987 = vld [vmem:[#allocation5 + $0x18] sm:$0xff]
        %v2988 = vld [vmem:[#allocation5 + $0x20] sm:$0xff]
        %v2989 = vld [vmem:[#allocation5 + $0x28] sm:$0xff]
        %v2990 = vld [vmem:[#allocation5 + $0x30] sm:$0xff]
        %v2991 = vld [vmem:[#allocation5 + $0x38] sm:$0xff]
        %v2992 = vld [vmem:[#allocation5 + $0x40] sm:$0xff]
        %3002 = vrot.lane.b32.xlu0 %v2984, 62
        %v3003 = vpop.permute.xlu0 %3002
        %3004 = vrot.lane.b32.xlu0 %v2985, 62
        %v3005 = vpop.permute.xlu0 %3004
        %3006 = vrot.lane.b32.xlu0 %v2986, 62
        %v3007 = vpop.permute.xlu0 %3006
        %3008 = vrot.lane.b32.xlu0 %v2987, 62
        %v3009 = vpop.permute.xlu0 %3008
        %3010 = vrot.lane.b32.xlu0 %v2988, 62
        %v3011 = vpop.permute.xlu0 %3010
        %3012 = vrot.lane.b32.xlu0 %v2989, 62
        %v3013 = vpop.permute.xlu0 %3012
        %3014 = vrot.lane.b32.xlu0 %v2990, 62
        %v3015 = vpop.permute.xlu0 %3014
        %3016 = vrot.lane.b32.xlu0 %v2991, 62
        %v3017 = vpop.permute.xlu0 %3016
        %3018 = vrot.lane.b32.xlu0 %v2992, 62
        %v3019 = vpop.permute.xlu0 %3018
        %v3020 = vsel %vm1289, %v3003, %v3005
        %v3021 = vsel %vm1289, %v3005, %v3007
        %v3022 = vsel %vm1289, %v3007, %v3009
        %v3023 = vsel %vm1289, %v3009, %v3011
        %v3024 = vsel %vm1289, %v3011, %v3013
        %v3025 = vsel %vm1289, %v3013, %v3015
        %v3026 = vsel %vm1289, %v3015, %v3017
        %v3027 = vsel %vm1289, %v3017, %v3019
        %3036 = vst [vmem:[#allocation6 + $0x180] sm:$0xff] %v3020
        %3037 = vst [vmem:[#allocation6 + $0x188] sm:$0xff] %v3021
        %3038 = vst [vmem:[#allocation6 + $0x190] sm:$0xff] %v3022
        %3039 = vst [vmem:[#allocation6 + $0x198] sm:$0xff] %v3023
        %3040 = vst [vmem:[#allocation6 + $0x1a0] sm:$0xff] %v3024
        %3041 = vst [vmem:[#allocation6 + $0x1a8] sm:$0xff] %v3025
        %3042 = vst [vmem:[#allocation6 + $0x1b0] sm:$0xff] %v3026
        %3043 = vst [vmem:[#allocation6 + $0x1b8] sm:$0xff] %v3027
        %v3044 = vld [vmem:[#allocation5] sm:$0xff]
        %v3045 = vld [vmem:[#allocation5 + $0x8] sm:$0xff]
        %v3046 = vld [vmem:[#allocation5 + $0x10] sm:$0xff]
        %v3047 = vld [vmem:[#allocation5 + $0x18] sm:$0xff]
        %v3048 = vld [vmem:[#allocation5 + $0x20] sm:$0xff]
        %v3049 = vld [vmem:[#allocation5 + $0x28] sm:$0xff]
        %v3050 = vld [vmem:[#allocation5 + $0x30] sm:$0xff]
        %v3051 = vld [vmem:[#allocation5 + $0x38] sm:$0xff]
        %v3052 = vld [vmem:[#allocation5 + $0x40] sm:$0xff]
        %3062 = vrot.lane.b32.xlu0 %v3044, 60
        %v3063 = vpop.permute.xlu0 %3062
        %3064 = vrot.lane.b32.xlu0 %v3045, 60
        %v3065 = vpop.permute.xlu0 %3064
        %3066 = vrot.lane.b32.xlu0 %v3046, 60
        %v3067 = vpop.permute.xlu0 %3066
        %3068 = vrot.lane.b32.xlu0 %v3047, 60
        %v3069 = vpop.permute.xlu0 %3068
        %3070 = vrot.lane.b32.xlu0 %v3048, 60
        %v3071 = vpop.permute.xlu0 %3070
        %3072 = vrot.lane.b32.xlu0 %v3049, 60
        %v3073 = vpop.permute.xlu0 %3072
        %3074 = vrot.lane.b32.xlu0 %v3050, 60
        %v3075 = vpop.permute.xlu0 %3074
        %3076 = vrot.lane.b32.xlu0 %v3051, 60
        %v3077 = vpop.permute.xlu0 %3076
        %3078 = vrot.lane.b32.xlu0 %v3052, 60
        %v3079 = vpop.permute.xlu0 %3078
        %v3080 = vsel %vm1411, %v3063, %v3065
        %v3081 = vsel %vm1411, %v3065, %v3067
        %v3082 = vsel %vm1411, %v3067, %v3069
        %v3083 = vsel %vm1411, %v3069, %v3071
        %v3084 = vsel %vm1411, %v3071, %v3073
        %v3085 = vsel %vm1411, %v3073, %v3075
        %v3086 = vsel %vm1411, %v3075, %v3077
        %v3087 = vsel %vm1411, %v3077, %v3079
        %3096 = vst [vmem:[#allocation6 + $0x1c0] sm:$0xff] %v3080
        %3097 = vst [vmem:[#allocation6 + $0x1c8] sm:$0xff] %v3081
        %3098 = vst [vmem:[#allocation6 + $0x1d0] sm:$0xff] %v3082
        %3099 = vst [vmem:[#allocation6 + $0x1d8] sm:$0xff] %v3083
        %3100 = vst [vmem:[#allocation6 + $0x1e0] sm:$0xff] %v3084
        %3101 = vst [vmem:[#allocation6 + $0x1e8] sm:$0xff] %v3085
        %3102 = vst [vmem:[#allocation6 + $0x1f0] sm:$0xff] %v3086
        %3103 = vst [vmem:[#allocation6 + $0x1f8] sm:$0xff] %v3087
        %v3104 = vld [vmem:[#allocation5] sm:$0xff]
        %v3105 = vld [vmem:[#allocation5 + $0x8] sm:$0xff]
        %v3106 = vld [vmem:[#allocation5 + $0x10] sm:$0xff]
        %v3107 = vld [vmem:[#allocation5 + $0x18] sm:$0xff]
        %v3108 = vld [vmem:[#allocation5 + $0x20] sm:$0xff]
        %v3109 = vld [vmem:[#allocation5 + $0x28] sm:$0xff]
        %v3110 = vld [vmem:[#allocation5 + $0x30] sm:$0xff]
        %v3111 = vld [vmem:[#allocation5 + $0x38] sm:$0xff]
        %v3112 = vld [vmem:[#allocation5 + $0x40] sm:$0xff]
        %3122 = vrot.lane.b32.xlu0 %v3104, 58
        %v3123 = vpop.permute.xlu0 %3122
        %3124 = vrot.lane.b32.xlu0 %v3105, 58
        %v3125 = vpop.permute.xlu0 %3124
        %3126 = vrot.lane.b32.xlu0 %v3106, 58
        %v3127 = vpop.permute.xlu0 %3126
        %3128 = vrot.lane.b32.xlu0 %v3107, 58
        %v3129 = vpop.permute.xlu0 %3128
        %3130 = vrot.lane.b32.xlu0 %v3108, 58
        %v3131 = vpop.permute.xlu0 %3130
        %3132 = vrot.lane.b32.xlu0 %v3109, 58
        %v3133 = vpop.permute.xlu0 %3132
        %3134 = vrot.lane.b32.xlu0 %v3110, 58
        %v3135 = vpop.permute.xlu0 %3134
        %3136 = vrot.lane.b32.xlu0 %v3111, 58
        %v3137 = vpop.permute.xlu0 %3136
        %3138 = vrot.lane.b32.xlu0 %v3112, 58
        %v3139 = vpop.permute.xlu0 %3138
        %vm3140 = vcmask 474112
        %v3141 = vsel %vm3140, %v3123, %v3125
        %v3142 = vsel %vm3140, %v3125, %v3127
        %v3143 = vsel %vm3140, %v3127, %v3129
        %v3144 = vsel %vm3140, %v3129, %v3131
        %v3145 = vsel %vm3140, %v3131, %v3133
        %v3146 = vsel %vm3140, %v3133, %v3135
        %v3147 = vsel %vm3140, %v3135, %v3137
        %v3148 = vsel %vm3140, %v3137, %v3139
        %3157 = vst [vmem:[#allocation6 + $0x200] sm:$0xff] %v3141
        %3158 = vst [vmem:[#allocation6 + $0x208] sm:$0xff] %v3142
        %3159 = vst [vmem:[#allocation6 + $0x210] sm:$0xff] %v3143
        %3160 = vst [vmem:[#allocation6 + $0x218] sm:$0xff] %v3144
        %3161 = vst [vmem:[#allocation6 + $0x220] sm:$0xff] %v3145
        %3162 = vst [vmem:[#allocation6 + $0x228] sm:$0xff] %v3146
        %3163 = vst [vmem:[#allocation6 + $0x230] sm:$0xff] %v3147
        %3164 = vst [vmem:[#allocation6 + $0x238] sm:$0xff] %v3148
        %v3165 = vld [vmem:[#allocation5] sm:$0xff]
        %v3166 = vld [vmem:[#allocation5 + $0x8] sm:$0xff]
        %v3167 = vld [vmem:[#allocation5 + $0x10] sm:$0xff]
        %v3168 = vld [vmem:[#allocation5 + $0x18] sm:$0xff]
        %v3169 = vld [vmem:[#allocation5 + $0x20] sm:$0xff]
        %v3170 = vld [vmem:[#allocation5 + $0x28] sm:$0xff]
        %v3171 = vld [vmem:[#allocation5 + $0x30] sm:$0xff]
        %v3172 = vld [vmem:[#allocation5 + $0x38] sm:$0xff]
        %v3173 = vld [vmem:[#allocation5 + $0x40] sm:$0xff]
        %3183 = vrot.lane.b32.xlu0 %v3165, 56
        %v3184 = vpop.permute.xlu0 %3183
        %3185 = vrot.lane.b32.xlu0 %v3166, 56
        %v3186 = vpop.permute.xlu0 %3185
        %3187 = vrot.lane.b32.xlu0 %v3167, 56
        %v3188 = vpop.permute.xlu0 %3187
        %3189 = vrot.lane.b32.xlu0 %v3168, 56
        %v3190 = vpop.permute.xlu0 %3189
        %3191 = vrot.lane.b32.xlu0 %v3169, 56
        %v3192 = vpop.permute.xlu0 %3191
        %3193 = vrot.lane.b32.xlu0 %v3170, 56
        %v3194 = vpop.permute.xlu0 %3193
        %3195 = vrot.lane.b32.xlu0 %v3171, 56
        %v3196 = vpop.permute.xlu0 %3195
        %3197 = vrot.lane.b32.xlu0 %v3172, 56
        %v3198 = vpop.permute.xlu0 %3197
        %3199 = vrot.lane.b32.xlu0 %v3173, 56
        %v3200 = vpop.permute.xlu0 %3199
        %vm3201 = vcmask 457728
        %v3202 = vsel %vm3201, %v3184, %v3186
        %v3203 = vsel %vm3201, %v3186, %v3188
        %v3204 = vsel %vm3201, %v3188, %v3190
        %v3205 = vsel %vm3201, %v3190, %v3192
        %v3206 = vsel %vm3201, %v3192, %v3194
        %v3207 = vsel %vm3201, %v3194, %v3196
        %v3208 = vsel %vm3201, %v3196, %v3198
        %v3209 = vsel %vm3201, %v3198, %v3200
        %3218 = vst [vmem:[#allocation6 + $0x240] sm:$0xff] %v3202
        %3219 = vst [vmem:[#allocation6 + $0x248] sm:$0xff] %v3203
        %3220 = vst [vmem:[#allocation6 + $0x250] sm:$0xff] %v3204
        %3221 = vst [vmem:[#allocation6 + $0x258] sm:$0xff] %v3205
        %3222 = vst [vmem:[#allocation6 + $0x260] sm:$0xff] %v3206
        %3223 = vst [vmem:[#allocation6 + $0x268] sm:$0xff] %v3207
        %3224 = vst [vmem:[#allocation6 + $0x270] sm:$0xff] %v3208
        %3225 = vst [vmem:[#allocation6 + $0x278] sm:$0xff] %v3209
        %v3226 = vld [vmem:[#allocation5 + $0x8] sm:$0xff]
        %v3227 = vld [vmem:[#allocation5 + $0x10] sm:$0xff]
        %v3228 = vld [vmem:[#allocation5 + $0x18] sm:$0xff]
        %v3229 = vld [vmem:[#allocation5 + $0x20] sm:$0xff]
        %v3230 = vld [vmem:[#allocation5 + $0x28] sm:$0xff]
        %v3231 = vld [vmem:[#allocation5 + $0x30] sm:$0xff]
        %v3232 = vld [vmem:[#allocation5 + $0x38] sm:$0xff]
        %v3233 = vld [vmem:[#allocation5 + $0x40] sm:$0xff]
        %3234 = vst [vmem:[#allocation6 + $0x280] sm:$0xff] %v3226
        %3235 = vst [vmem:[#allocation6 + $0x288] sm:$0xff] %v3227
        %3236 = vst [vmem:[#allocation6 + $0x290] sm:$0xff] %v3228
        %3237 = vst [vmem:[#allocation6 + $0x298] sm:$0xff] %v3229
        %3238 = vst [vmem:[#allocation6 + $0x2a0] sm:$0xff] %v3230
        %3239 = vst [vmem:[#allocation6 + $0x2a8] sm:$0xff] %v3231
        %3240 = vst [vmem:[#allocation6 + $0x2b0] sm:$0xff] %v3232
        %3241 = vst [vmem:[#allocation6 + $0x2b8] sm:$0xff] %v3233
        %v3242 = vld [vmem:[#allocation5 + $0x8] sm:$0xff]
        %v3243 = vld [vmem:[#allocation5 + $0x10] sm:$0xff]
        %v3244 = vld [vmem:[#allocation5 + $0x18] sm:$0xff]
        %v3245 = vld [vmem:[#allocation5 + $0x20] sm:$0xff]
        %v3246 = vld [vmem:[#allocation5 + $0x28] sm:$0xff]
        %v3247 = vld [vmem:[#allocation5 + $0x30] sm:$0xff]
        %v3248 = vld [vmem:[#allocation5 + $0x38] sm:$0xff]
        %v3249 = vld [vmem:[#allocation5 + $0x40] sm:$0xff]
        %v3250 = vld [vmem:[#allocation5 + $0x48] sm:$0xff]
        %3260 = vrot.lane.b32.xlu0 %v3242, 126
        %v3261 = vpop.permute.xlu0 %3260
        %3262 = vrot.lane.b32.xlu0 %v3243, 126
        %v3263 = vpop.permute.xlu0 %3262
        %3264 = vrot.lane.b32.xlu0 %v3244, 126
        %v3265 = vpop.permute.xlu0 %3264
        %3266 = vrot.lane.b32.xlu0 %v3245, 126
        %v3267 = vpop.permute.xlu0 %3266
        %3268 = vrot.lane.b32.xlu0 %v3246, 126
        %v3269 = vpop.permute.xlu0 %3268
        %3270 = vrot.lane.b32.xlu0 %v3247, 126
        %v3271 = vpop.permute.xlu0 %3270
        %3272 = vrot.lane.b32.xlu0 %v3248, 126
        %v3273 = vpop.permute.xlu0 %3272
        %3274 = vrot.lane.b32.xlu0 %v3249, 126
        %v3275 = vpop.permute.xlu0 %3274
        %3276 = vrot.lane.b32.xlu0 %v3250, 126
        %v3277 = vpop.permute.xlu0 %3276
        %v3278 = vsel %vm679, %v3261, %v3263
        %v3279 = vsel %vm679, %v3263, %v3265
        %v3280 = vsel %vm679, %v3265, %v3267
        %v3281 = vsel %vm679, %v3267, %v3269
        %v3282 = vsel %vm679, %v3269, %v3271
        %v3283 = vsel %vm679, %v3271, %v3273
        %v3284 = vsel %vm679, %v3273, %v3275
        %v3285 = vsel %vm679, %v3275, %v3277
        %3294 = vst [vmem:[#allocation6 + $0x2c0] sm:$0xff] %v3278
        %3295 = vst [vmem:[#allocation6 + $0x2c8] sm:$0xff] %v3279
        %3296 = vst [vmem:[#allocation6 + $0x2d0] sm:$0xff] %v3280
        %3297 = vst [vmem:[#allocation6 + $0x2d8] sm:$0xff] %v3281
        %3298 = vst [vmem:[#allocation6 + $0x2e0] sm:$0xff] %v3282
        %3299 = vst [vmem:[#allocation6 + $0x2e8] sm:$0xff] %v3283
        %3300 = vst [vmem:[#allocation6 + $0x2f0] sm:$0xff] %v3284
        %3301 = vst [vmem:[#allocation6 + $0x2f8] sm:$0xff] %v3285
        %v3302 = vld [vmem:[#allocation5 + $0x8] sm:$0xff]
        %v3303 = vld [vmem:[#allocation5 + $0x10] sm:$0xff]
        %v3304 = vld [vmem:[#allocation5 + $0x18] sm:$0xff]
        %v3305 = vld [vmem:[#allocation5 + $0x20] sm:$0xff]
        %v3306 = vld [vmem:[#allocation5 + $0x28] sm:$0xff]
        %v3307 = vld [vmem:[#allocation5 + $0x30] sm:$0xff]
        %v3308 = vld [vmem:[#allocation5 + $0x38] sm:$0xff]
        %v3309 = vld [vmem:[#allocation5 + $0x40] sm:$0xff]
        %v3310 = vld [vmem:[#allocation5 + $0x48] sm:$0xff]
        %3320 = vrot.lane.b32.xlu0 %v3302, 124
        %v3321 = vpop.permute.xlu0 %3320
        %3322 = vrot.lane.b32.xlu0 %v3303, 124
        %v3323 = vpop.permute.xlu0 %3322
        %3324 = vrot.lane.b32.xlu0 %v3304, 124
        %v3325 = vpop.permute.xlu0 %3324
        %3326 = vrot.lane.b32.xlu0 %v3305, 124
        %v3327 = vpop.permute.xlu0 %3326
        %3328 = vrot.lane.b32.xlu0 %v3306, 124
        %v3329 = vpop.permute.xlu0 %3328
        %3330 = vrot.lane.b32.xlu0 %v3307, 124
        %v3331 = vpop.permute.xlu0 %3330
        %3332 = vrot.lane.b32.xlu0 %v3308, 124
        %v3333 = vpop.permute.xlu0 %3332
        %3334 = vrot.lane.b32.xlu0 %v3309, 124
        %v3335 = vpop.permute.xlu0 %3334
        %3336 = vrot.lane.b32.xlu0 %v3310, 124
        %v3337 = vpop.permute.xlu0 %3336
        %v3338 = vsel %vm801, %v3321, %v3323
        %v3339 = vsel %vm801, %v3323, %v3325
        %v3340 = vsel %vm801, %v3325, %v3327
        %v3341 = vsel %vm801, %v3327, %v3329
        %v3342 = vsel %vm801, %v3329, %v3331
        %v3343 = vsel %vm801, %v3331, %v3333
        %v3344 = vsel %vm801, %v3333, %v3335
        %v3345 = vsel %vm801, %v3335, %v3337
        %3354 = vst [vmem:[#allocation6 + $0x300] sm:$0xff] %v3338
        %3355 = vst [vmem:[#allocation6 + $0x308] sm:$0xff] %v3339
        %3356 = vst [vmem:[#allocation6 + $0x310] sm:$0xff] %v3340
        %3357 = vst [vmem:[#allocation6 + $0x318] sm:$0xff] %v3341
        %3358 = vst [vmem:[#allocation6 + $0x320] sm:$0xff] %v3342
        %3359 = vst [vmem:[#allocation6 + $0x328] sm:$0xff] %v3343
        %3360 = vst [vmem:[#allocation6 + $0x330] sm:$0xff] %v3344
        %3361 = vst [vmem:[#allocation6 + $0x338] sm:$0xff] %v3345
        %v3362 = vld [vmem:[#allocation5 + $0x8] sm:$0xff]
        %v3363 = vld [vmem:[#allocation5 + $0x10] sm:$0xff]
        %v3364 = vld [vmem:[#allocation5 + $0x18] sm:$0xff]
        %v3365 = vld [vmem:[#allocation5 + $0x20] sm:$0xff]
        %v3366 = vld [vmem:[#allocation5 + $0x28] sm:$0xff]
        %v3367 = vld [vmem:[#allocation5 + $0x30] sm:$0xff]
        %v3368 = vld [vmem:[#allocation5 + $0x38] sm:$0xff]
        %v3369 = vld [vmem:[#allocation5 + $0x40] sm:$0xff]
        %v3370 = vld [vmem:[#allocation5 + $0x48] sm:$0xff]
        %3380 = vrot.lane.b32.xlu0 %v3362, 122
        %v3381 = vpop.permute.xlu0 %3380
        %3382 = vrot.lane.b32.xlu0 %v3363, 122
        %v3383 = vpop.permute.xlu0 %3382
        %3384 = vrot.lane.b32.xlu0 %v3364, 122
        %v3385 = vpop.permute.xlu0 %3384
        %3386 = vrot.lane.b32.xlu0 %v3365, 122
        %v3387 = vpop.permute.xlu0 %3386
        %3388 = vrot.lane.b32.xlu0 %v3366, 122
        %v3389 = vpop.permute.xlu0 %3388
        %3390 = vrot.lane.b32.xlu0 %v3367, 122
        %v3391 = vpop.permute.xlu0 %3390
        %3392 = vrot.lane.b32.xlu0 %v3368, 122
        %v3393 = vpop.permute.xlu0 %3392
        %3394 = vrot.lane.b32.xlu0 %v3369, 122
        %v3395 = vpop.permute.xlu0 %3394
        %3396 = vrot.lane.b32.xlu0 %v3370, 122
        %v3397 = vpop.permute.xlu0 %3396
        %v3398 = vsel %vm2838, %v3381, %v3383
        %v3399 = vsel %vm2838, %v3383, %v3385
        %v3400 = vsel %vm2838, %v3385, %v3387
        %v3401 = vsel %vm2838, %v3387, %v3389
        %v3402 = vsel %vm2838, %v3389, %v3391
        %v3403 = vsel %vm2838, %v3391, %v3393
        %v3404 = vsel %vm2838, %v3393, %v3395
        %v3405 = vsel %vm2838, %v3395, %v3397
        %3414 = vst [vmem:[#allocation6 + $0x340] sm:$0xff] %v3398
        %3415 = vst [vmem:[#allocation6 + $0x348] sm:$0xff] %v3399
        %3416 = vst [vmem:[#allocation6 + $0x350] sm:$0xff] %v3400
        %3417 = vst [vmem:[#allocation6 + $0x358] sm:$0xff] %v3401
        %3418 = vst [vmem:[#allocation6 + $0x360] sm:$0xff] %v3402
        %3419 = vst [vmem:[#allocation6 + $0x368] sm:$0xff] %v3403
        %3420 = vst [vmem:[#allocation6 + $0x370] sm:$0xff] %v3404
        %3421 = vst [vmem:[#allocation6 + $0x378] sm:$0xff] %v3405
        %v3422 = vld [vmem:[#allocation5 + $0x8] sm:$0xff]
        %v3423 = vld [vmem:[#allocation5 + $0x10] sm:$0xff]
        %v3424 = vld [vmem:[#allocation5 + $0x18] sm:$0xff]
        %v3425 = vld [vmem:[#allocation5 + $0x20] sm:$0xff]
        %v3426 = vld [vmem:[#allocation5 + $0x28] sm:$0xff]
        %v3427 = vld [vmem:[#allocation5 + $0x30] sm:$0xff]
        %v3428 = vld [vmem:[#allocation5 + $0x38] sm:$0xff]
        %v3429 = vld [vmem:[#allocation5 + $0x40] sm:$0xff]
        %v3430 = vld [vmem:[#allocation5 + $0x48] sm:$0xff]
        %3440 = vrot.lane.b32.xlu0 %v3422, 120
        %v3441 = vpop.permute.xlu0 %3440
        %3442 = vrot.lane.b32.xlu0 %v3423, 120
        %v3443 = vpop.permute.xlu0 %3442
        %3444 = vrot.lane.b32.xlu0 %v3424, 120
        %v3445 = vpop.permute.xlu0 %3444
        %3446 = vrot.lane.b32.xlu0 %v3425, 120
        %v3447 = vpop.permute.xlu0 %3446
        %3448 = vrot.lane.b32.xlu0 %v3426, 120
        %v3449 = vpop.permute.xlu0 %3448
        %3450 = vrot.lane.b32.xlu0 %v3427, 120
        %v3451 = vpop.permute.xlu0 %3450
        %3452 = vrot.lane.b32.xlu0 %v3428, 120
        %v3453 = vpop.permute.xlu0 %3452
        %3454 = vrot.lane.b32.xlu0 %v3429, 120
        %v3455 = vpop.permute.xlu0 %3454
        %3456 = vrot.lane.b32.xlu0 %v3430, 120
        %v3457 = vpop.permute.xlu0 %3456
        %v3458 = vsel %vm2899, %v3441, %v3443
        %v3459 = vsel %vm2899, %v3443, %v3445
        %v3460 = vsel %vm2899, %v3445, %v3447
        %v3461 = vsel %vm2899, %v3447, %v3449
        %v3462 = vsel %vm2899, %v3449, %v3451
        %v3463 = vsel %vm2899, %v3451, %v3453
        %v3464 = vsel %vm2899, %v3453, %v3455
        %v3465 = vsel %vm2899, %v3455, %v3457
        %3474 = vst [vmem:[#allocation6 + $0x380] sm:$0xff] %v3458
        %3475 = vst [vmem:[#allocation6 + $0x388] sm:$0xff] %v3459
        %3476 = vst [vmem:[#allocation6 + $0x390] sm:$0xff] %v3460
        %3477 = vst [vmem:[#allocation6 + $0x398] sm:$0xff] %v3461
        %3478 = vst [vmem:[#allocation6 + $0x3a0] sm:$0xff] %v3462
        %3479 = vst [vmem:[#allocation6 + $0x3a8] sm:$0xff] %v3463
        %3480 = vst [vmem:[#allocation6 + $0x3b0] sm:$0xff] %v3464
        %3481 = vst [vmem:[#allocation6 + $0x3b8] sm:$0xff] %v3465
        %v3482 = vld [vmem:[#allocation5 + $0x8] sm:$0xff]
        %v3483 = vld [vmem:[#allocation5 + $0x10] sm:$0xff]
        %v3484 = vld [vmem:[#allocation5 + $0x18] sm:$0xff]
        %v3485 = vld [vmem:[#allocation5 + $0x20] sm:$0xff]
        %v3486 = vld [vmem:[#allocation5 + $0x28] sm:$0xff]
        %v3487 = vld [vmem:[#allocation5 + $0x30] sm:$0xff]
        %v3488 = vld [vmem:[#allocation5 + $0x38] sm:$0xff]
        %v3489 = vld [vmem:[#allocation5 + $0x40] sm:$0xff]
        %v3490 = vld [vmem:[#allocation5 + $0x48] sm:$0xff]
        %3500 = vrot.lane.b32.xlu0 %v3482, 64
        %v3501 = vpop.permute.xlu0 %3500
        %3502 = vrot.lane.b32.xlu0 %v3483, 64
        %v3503 = vpop.permute.xlu0 %3502
        %3504 = vrot.lane.b32.xlu0 %v3484, 64
        %v3505 = vpop.permute.xlu0 %3504
        %3506 = vrot.lane.b32.xlu0 %v3485, 64
        %v3507 = vpop.permute.xlu0 %3506
        %3508 = vrot.lane.b32.xlu0 %v3486, 64
        %v3509 = vpop.permute.xlu0 %3508
        %3510 = vrot.lane.b32.xlu0 %v3487, 64
        %v3511 = vpop.permute.xlu0 %3510
        %3512 = vrot.lane.b32.xlu0 %v3488, 64
        %v3513 = vpop.permute.xlu0 %3512
        %3514 = vrot.lane.b32.xlu0 %v3489, 64
        %v3515 = vpop.permute.xlu0 %3514
        %3516 = vrot.lane.b32.xlu0 %v3490, 64
        %v3517 = vpop.permute.xlu0 %3516
        %v3518 = vsel %vm1167, %v3501, %v3503
        %v3519 = vsel %vm1167, %v3503, %v3505
        %v3520 = vsel %vm1167, %v3505, %v3507
        %v3521 = vsel %vm1167, %v3507, %v3509
        %v3522 = vsel %vm1167, %v3509, %v3511
        %v3523 = vsel %vm1167, %v3511, %v3513
        %v3524 = vsel %vm1167, %v3513, %v3515
        %v3525 = vsel %vm1167, %v3515, %v3517
        %3534 = vst [vmem:[#allocation6 + $0x3c0] sm:$0xff] %v3518
        %3535 = vst [vmem:[#allocation6 + $0x3c8] sm:$0xff] %v3519
        %3536 = vst [vmem:[#allocation6 + $0x3d0] sm:$0xff] %v3520
        %3537 = vst [vmem:[#allocation6 + $0x3d8] sm:$0xff] %v3521
        %3538 = vst [vmem:[#allocation6 + $0x3e0] sm:$0xff] %v3522
        %3539 = vst [vmem:[#allocation6 + $0x3e8] sm:$0xff] %v3523
        %3540 = vst [vmem:[#allocation6 + $0x3f0] sm:$0xff] %v3524
        %3541 = vst [vmem:[#allocation6 + $0x3f8] sm:$0xff] %v3525
        %v3542 = vld [vmem:[#allocation5 + $0x8] sm:$0xff]
        %v3543 = vld [vmem:[#allocation5 + $0x10] sm:$0xff]
        %v3544 = vld [vmem:[#allocation5 + $0x18] sm:$0xff]
        %v3545 = vld [vmem:[#allocation5 + $0x20] sm:$0xff]
        %v3546 = vld [vmem:[#allocation5 + $0x28] sm:$0xff]
        %v3547 = vld [vmem:[#allocation5 + $0x30] sm:$0xff]
        %v3548 = vld [vmem:[#allocation5 + $0x38] sm:$0xff]
        %v3549 = vld [vmem:[#allocation5 + $0x40] sm:$0xff]
        %v3550 = vld [vmem:[#allocation5 + $0x48] sm:$0xff]
        %3560 = vrot.lane.b32.xlu0 %v3542, 62
        %v3561 = vpop.permute.xlu0 %3560
        %3562 = vrot.lane.b32.xlu0 %v3543, 62
        %v3563 = vpop.permute.xlu0 %3562
        %3564 = vrot.lane.b32.xlu0 %v3544, 62
        %v3565 = vpop.permute.xlu0 %3564
        %3566 = vrot.lane.b32.xlu0 %v3545, 62
        %v3567 = vpop.permute.xlu0 %3566
        %3568 = vrot.lane.b32.xlu0 %v3546, 62
        %v3569 = vpop.permute.xlu0 %3568
        %3570 = vrot.lane.b32.xlu0 %v3547, 62
        %v3571 = vpop.permute.xlu0 %3570
        %3572 = vrot.lane.b32.xlu0 %v3548, 62
        %v3573 = vpop.permute.xlu0 %3572
        %3574 = vrot.lane.b32.xlu0 %v3549, 62
        %v3575 = vpop.permute.xlu0 %3574
        %3576 = vrot.lane.b32.xlu0 %v3550, 62
        %v3577 = vpop.permute.xlu0 %3576
        %v3578 = vsel %vm1289, %v3561, %v3563
        %v3579 = vsel %vm1289, %v3563, %v3565
        %v3580 = vsel %vm1289, %v3565, %v3567
        %v3581 = vsel %vm1289, %v3567, %v3569
        %v3582 = vsel %vm1289, %v3569, %v3571
        %v3583 = vsel %vm1289, %v3571, %v3573
        %v3584 = vsel %vm1289, %v3573, %v3575
        %v3585 = vsel %vm1289, %v3575, %v3577
        %3594 = vst [vmem:[#allocation6 + $0x400] sm:$0xff] %v3578
        %3595 = vst [vmem:[#allocation6 + $0x408] sm:$0xff] %v3579
        %3596 = vst [vmem:[#allocation6 + $0x410] sm:$0xff] %v3580
        %3597 = vst [vmem:[#allocation6 + $0x418] sm:$0xff] %v3581
        %3598 = vst [vmem:[#allocation6 + $0x420] sm:$0xff] %v3582
        %3599 = vst [vmem:[#allocation6 + $0x428] sm:$0xff] %v3583
        %3600 = vst [vmem:[#allocation6 + $0x430] sm:$0xff] %v3584
        %3601 = vst [vmem:[#allocation6 + $0x438] sm:$0xff] %v3585
        %v3602 = vld [vmem:[#allocation5 + $0x8] sm:$0xff]
        %v3603 = vld [vmem:[#allocation5 + $0x10] sm:$0xff]
        %v3604 = vld [vmem:[#allocation5 + $0x18] sm:$0xff]
        %v3605 = vld [vmem:[#allocation5 + $0x20] sm:$0xff]
        %v3606 = vld [vmem:[#allocation5 + $0x28] sm:$0xff]
        %v3607 = vld [vmem:[#allocation5 + $0x30] sm:$0xff]
        %v3608 = vld [vmem:[#allocation5 + $0x38] sm:$0xff]
        %v3609 = vld [vmem:[#allocation5 + $0x40] sm:$0xff]
        %v3610 = vld [vmem:[#allocation5 + $0x48] sm:$0xff]
        %3620 = vrot.lane.b32.xlu0 %v3602, 60
        %v3621 = vpop.permute.xlu0 %3620
        %3622 = vrot.lane.b32.xlu0 %v3603, 60
        %v3623 = vpop.permute.xlu0 %3622
        %3624 = vrot.lane.b32.xlu0 %v3604, 60
        %v3625 = vpop.permute.xlu0 %3624
        %3626 = vrot.lane.b32.xlu0 %v3605, 60
        %v3627 = vpop.permute.xlu0 %3626
        %3628 = vrot.lane.b32.xlu0 %v3606, 60
        %v3629 = vpop.permute.xlu0 %3628
        %3630 = vrot.lane.b32.xlu0 %v3607, 60
        %v3631 = vpop.permute.xlu0 %3630
        %3632 = vrot.lane.b32.xlu0 %v3608, 60
        %v3633 = vpop.permute.xlu0 %3632
        %3634 = vrot.lane.b32.xlu0 %v3609, 60
        %v3635 = vpop.permute.xlu0 %3634
        %3636 = vrot.lane.b32.xlu0 %v3610, 60
        %v3637 = vpop.permute.xlu0 %3636
        %v3638 = vsel %vm1411, %v3621, %v3623
        %v3639 = vsel %vm1411, %v3623, %v3625
        %v3640 = vsel %vm1411, %v3625, %v3627
        %v3641 = vsel %vm1411, %v3627, %v3629
        %v3642 = vsel %vm1411, %v3629, %v3631
        %v3643 = vsel %vm1411, %v3631, %v3633
        %v3644 = vsel %vm1411, %v3633, %v3635
        %v3645 = vsel %vm1411, %v3635, %v3637
        %3654 = vst [vmem:[#allocation6 + $0x440] sm:$0xff] %v3638
        %3655 = vst [vmem:[#allocation6 + $0x448] sm:$0xff] %v3639
        %3656 = vst [vmem:[#allocation6 + $0x450] sm:$0xff] %v3640
        %3657 = vst [vmem:[#allocation6 + $0x458] sm:$0xff] %v3641
        %3658 = vst [vmem:[#allocation6 + $0x460] sm:$0xff] %v3642
        %3659 = vst [vmem:[#allocation6 + $0x468] sm:$0xff] %v3643
        %3660 = vst [vmem:[#allocation6 + $0x470] sm:$0xff] %v3644
        %3661 = vst [vmem:[#allocation6 + $0x478] sm:$0xff] %v3645
        %v3662 = vld [vmem:[#allocation5 + $0x8] sm:$0xff]
        %v3663 = vld [vmem:[#allocation5 + $0x10] sm:$0xff]
        %v3664 = vld [vmem:[#allocation5 + $0x18] sm:$0xff]
        %v3665 = vld [vmem:[#allocation5 + $0x20] sm:$0xff]
        %v3666 = vld [vmem:[#allocation5 + $0x28] sm:$0xff]
        %v3667 = vld [vmem:[#allocation5 + $0x30] sm:$0xff]
        %v3668 = vld [vmem:[#allocation5 + $0x38] sm:$0xff]
        %v3669 = vld [vmem:[#allocation5 + $0x40] sm:$0xff]
        %v3670 = vld [vmem:[#allocation5 + $0x48] sm:$0xff]
        %3680 = vrot.lane.b32.xlu0 %v3662, 58
        %v3681 = vpop.permute.xlu0 %3680
        %3682 = vrot.lane.b32.xlu0 %v3663, 58
        %v3683 = vpop.permute.xlu0 %3682
        %3684 = vrot.lane.b32.xlu0 %v3664, 58
        %v3685 = vpop.permute.xlu0 %3684
        %3686 = vrot.lane.b32.xlu0 %v3665, 58
        %v3687 = vpop.permute.xlu0 %3686
        %3688 = vrot.lane.b32.xlu0 %v3666, 58
        %v3689 = vpop.permute.xlu0 %3688
        %3690 = vrot.lane.b32.xlu0 %v3667, 58
        %v3691 = vpop.permute.xlu0 %3690
        %3692 = vrot.lane.b32.xlu0 %v3668, 58
        %v3693 = vpop.permute.xlu0 %3692
        %3694 = vrot.lane.b32.xlu0 %v3669, 58
        %v3695 = vpop.permute.xlu0 %3694
        %3696 = vrot.lane.b32.xlu0 %v3670, 58
        %v3697 = vpop.permute.xlu0 %3696
        %v3698 = vsel %vm3140, %v3681, %v3683
        %v3699 = vsel %vm3140, %v3683, %v3685
        %v3700 = vsel %vm3140, %v3685, %v3687
        %v3701 = vsel %vm3140, %v3687, %v3689
        %v3702 = vsel %vm3140, %v3689, %v3691
        %v3703 = vsel %vm3140, %v3691, %v3693
        %v3704 = vsel %vm3140, %v3693, %v3695
        %v3705 = vsel %vm3140, %v3695, %v3697
        %3714 = vst [vmem:[#allocation6 + $0x480] sm:$0xff] %v3698
        %3715 = vst [vmem:[#allocation6 + $0x488] sm:$0xff] %v3699
        %3716 = vst [vmem:[#allocation6 + $0x490] sm:$0xff] %v3700
        %3717 = vst [vmem:[#allocation6 + $0x498] sm:$0xff] %v3701
        %3718 = vst [vmem:[#allocation6 + $0x4a0] sm:$0xff] %v3702
        %3719 = vst [vmem:[#allocation6 + $0x4a8] sm:$0xff] %v3703
        %3720 = vst [vmem:[#allocation6 + $0x4b0] sm:$0xff] %v3704
        %3721 = vst [vmem:[#allocation6 + $0x4b8] sm:$0xff] %v3705
        %v3722 = vld [vmem:[#allocation5 + $0x8] sm:$0xff]
        %v3723 = vld [vmem:[#allocation5 + $0x10] sm:$0xff]
        %v3724 = vld [vmem:[#allocation5 + $0x18] sm:$0xff]
        %v3725 = vld [vmem:[#allocation5 + $0x20] sm:$0xff]
        %v3726 = vld [vmem:[#allocation5 + $0x28] sm:$0xff]
        %v3727 = vld [vmem:[#allocation5 + $0x30] sm:$0xff]
        %v3728 = vld [vmem:[#allocation5 + $0x38] sm:$0xff]
        %v3729 = vld [vmem:[#allocation5 + $0x40] sm:$0xff]
        %v3730 = vld [vmem:[#allocation5 + $0x48] sm:$0xff]
        %3740 = vrot.lane.b32.xlu0 %v3722, 56
        %v3741 = vpop.permute.xlu0 %3740
        %3742 = vrot.lane.b32.xlu0 %v3723, 56
        %v3743 = vpop.permute.xlu0 %3742
        %3744 = vrot.lane.b32.xlu0 %v3724, 56
        %v3745 = vpop.permute.xlu0 %3744
        %3746 = vrot.lane.b32.xlu0 %v3725, 56
        %v3747 = vpop.permute.xlu0 %3746
        %3748 = vrot.lane.b32.xlu0 %v3726, 56
        %v3749 = vpop.permute.xlu0 %3748
        %3750 = vrot.lane.b32.xlu0 %v3727, 56
        %v3751 = vpop.permute.xlu0 %3750
        %3752 = vrot.lane.b32.xlu0 %v3728, 56
        %v3753 = vpop.permute.xlu0 %3752
        %3754 = vrot.lane.b32.xlu0 %v3729, 56
        %v3755 = vpop.permute.xlu0 %3754
        %3756 = vrot.lane.b32.xlu0 %v3730, 56
        %v3757 = vpop.permute.xlu0 %3756
        %v3758 = vsel %vm3201, %v3741, %v3743
        %v3759 = vsel %vm3201, %v3743, %v3745
        %v3760 = vsel %vm3201, %v3745, %v3747
        %v3761 = vsel %vm3201, %v3747, %v3749
        %v3762 = vsel %vm3201, %v3749, %v3751
        %v3763 = vsel %vm3201, %v3751, %v3753
        %v3764 = vsel %vm3201, %v3753, %v3755
        %v3765 = vsel %vm3201, %v3755, %v3757
        %3774 = vst [vmem:[#allocation6 + $0x4c0] sm:$0xff] %v3758
        %3775 = vst [vmem:[#allocation6 + $0x4c8] sm:$0xff] %v3759
        %3776 = vst [vmem:[#allocation6 + $0x4d0] sm:$0xff] %v3760
        %3777 = vst [vmem:[#allocation6 + $0x4d8] sm:$0xff] %v3761
        %3778 = vst [vmem:[#allocation6 + $0x4e0] sm:$0xff] %v3762
        %3779 = vst [vmem:[#allocation6 + $0x4e8] sm:$0xff] %v3763
        %3780 = vst [vmem:[#allocation6 + $0x4f0] sm:$0xff] %v3764
        %3781 = vst [vmem:[#allocation6 + $0x4f8] sm:$0xff] %v3765
        %v3782 = vld [vmem:[#allocation5 + $0x10] sm:$0xff]
        %v3783 = vld [vmem:[#allocation5 + $0x18] sm:$0xff]
        %v3784 = vld [vmem:[#allocation5 + $0x20] sm:$0xff]
        %v3785 = vld [vmem:[#allocation5 + $0x28] sm:$0xff]
        %v3786 = vld [vmem:[#allocation5 + $0x30] sm:$0xff]
        %v3787 = vld [vmem:[#allocation5 + $0x38] sm:$0xff]
        %v3788 = vld [vmem:[#allocation5 + $0x40] sm:$0xff]
        %v3789 = vld [vmem:[#allocation5 + $0x48] sm:$0xff]
        %3790 = vst [vmem:[#allocation6 + $0x500] sm:$0xff] %v3782
        %3791 = vst [vmem:[#allocation6 + $0x508] sm:$0xff] %v3783
        %3792 = vst [vmem:[#allocation6 + $0x510] sm:$0xff] %v3784
        %3793 = vst [vmem:[#allocation6 + $0x518] sm:$0xff] %v3785
        %3794 = vst [vmem:[#allocation6 + $0x520] sm:$0xff] %v3786
        %3795 = vst [vmem:[#allocation6 + $0x528] sm:$0xff] %v3787
        %3796 = vst [vmem:[#allocation6 + $0x530] sm:$0xff] %v3788
        %3797 = vst [vmem:[#allocation6 + $0x538] sm:$0xff] %v3789
        %v3798 = vld [vmem:[#allocation5 + $0x10] sm:$0xff]
        %v3799 = vld [vmem:[#allocation5 + $0x18] sm:$0xff]
        %v3800 = vld [vmem:[#allocation5 + $0x20] sm:$0xff]
        %v3801 = vld [vmem:[#allocation5 + $0x28] sm:$0xff]
        %v3802 = vld [vmem:[#allocation5 + $0x30] sm:$0xff]
        %v3803 = vld [vmem:[#allocation5 + $0x38] sm:$0xff]
        %v3804 = vld [vmem:[#allocation5 + $0x40] sm:$0xff]
        %v3805 = vld [vmem:[#allocation5 + $0x48] sm:$0xff]
        %v3806 = vld [vmem:[#allocation5 + $0x50] sm:$0xff]
        %3816 = vrot.lane.b32.xlu0 %v3798, 126
        %v3817 = vpop.permute.xlu0 %3816
        %3818 = vrot.lane.b32.xlu0 %v3799, 126
        %v3819 = vpop.permute.xlu0 %3818
        %3820 = vrot.lane.b32.xlu0 %v3800, 126
        %v3821 = vpop.permute.xlu0 %3820
        %3822 = vrot.lane.b32.xlu0 %v3801, 126
        %v3823 = vpop.permute.xlu0 %3822
        %3824 = vrot.lane.b32.xlu0 %v3802, 126
        %v3825 = vpop.permute.xlu0 %3824
        %3826 = vrot.lane.b32.xlu0 %v3803, 126
        %v3827 = vpop.permute.xlu0 %3826
        %3828 = vrot.lane.b32.xlu0 %v3804, 126
        %v3829 = vpop.permute.xlu0 %3828
        %3830 = vrot.lane.b32.xlu0 %v3805, 126
        %v3831 = vpop.permute.xlu0 %3830
        %3832 = vrot.lane.b32.xlu0 %v3806, 126
        %v3833 = vpop.permute.xlu0 %3832
        %v3834 = vsel %vm679, %v3817, %v3819
        %v3835 = vsel %vm679, %v3819, %v3821
        %v3836 = vsel %vm679, %v3821, %v3823
        %v3837 = vsel %vm679, %v3823, %v3825
        %v3838 = vsel %vm679, %v3825, %v3827
        %v3839 = vsel %vm679, %v3827, %v3829
        %v3840 = vsel %vm679, %v3829, %v3831
        %v3841 = vsel %vm679, %v3831, %v3833
        %3850 = vst [vmem:[#allocation6 + $0x540] sm:$0xff] %v3834
        %3851 = vst [vmem:[#allocation6 + $0x548] sm:$0xff] %v3835
        %3852 = vst [vmem:[#allocation6 + $0x550] sm:$0xff] %v3836
        %3853 = vst [vmem:[#allocation6 + $0x558] sm:$0xff] %v3837
        %3854 = vst [vmem:[#allocation6 + $0x560] sm:$0xff] %v3838
        %3855 = vst [vmem:[#allocation6 + $0x568] sm:$0xff] %v3839
        %3856 = vst [vmem:[#allocation6 + $0x570] sm:$0xff] %v3840
        %3857 = vst [vmem:[#allocation6 + $0x578] sm:$0xff] %v3841
        %v3858 = vld [vmem:[#allocation5 + $0x10] sm:$0xff]
        %v3859 = vld [vmem:[#allocation5 + $0x18] sm:$0xff]
        %v3860 = vld [vmem:[#allocation5 + $0x20] sm:$0xff]
        %v3861 = vld [vmem:[#allocation5 + $0x28] sm:$0xff]
        %v3862 = vld [vmem:[#allocation5 + $0x30] sm:$0xff]
        %v3863 = vld [vmem:[#allocation5 + $0x38] sm:$0xff]
        %v3864 = vld [vmem:[#allocation5 + $0x40] sm:$0xff]
        %v3865 = vld [vmem:[#allocation5 + $0x48] sm:$0xff]
        %v3866 = vld [vmem:[#allocation5 + $0x50] sm:$0xff]
        %3876 = vrot.lane.b32.xlu0 %v3858, 124
        %v3877 = vpop.permute.xlu0 %3876
        %3878 = vrot.lane.b32.xlu0 %v3859, 124
        %v3879 = vpop.permute.xlu0 %3878
        %3880 = vrot.lane.b32.xlu0 %v3860, 124
        %v3881 = vpop.permute.xlu0 %3880
        %3882 = vrot.lane.b32.xlu0 %v3861, 124
        %v3883 = vpop.permute.xlu0 %3882
        %3884 = vrot.lane.b32.xlu0 %v3862, 124
        %v3885 = vpop.permute.xlu0 %3884
        %3886 = vrot.lane.b32.xlu0 %v3863, 124
        %v3887 = vpop.permute.xlu0 %3886
        %3888 = vrot.lane.b32.xlu0 %v3864, 124
        %v3889 = vpop.permute.xlu0 %3888
        %3890 = vrot.lane.b32.xlu0 %v3865, 124
        %v3891 = vpop.permute.xlu0 %3890
        %3892 = vrot.lane.b32.xlu0 %v3866, 124
        %v3893 = vpop.permute.xlu0 %3892
        %v3894 = vsel %vm801, %v3877, %v3879
        %v3895 = vsel %vm801, %v3879, %v3881
        %v3896 = vsel %vm801, %v3881, %v3883
        %v3897 = vsel %vm801, %v3883, %v3885
        %v3898 = vsel %vm801, %v3885, %v3887
        %v3899 = vsel %vm801, %v3887, %v3889
        %v3900 = vsel %vm801, %v3889, %v3891
        %v3901 = vsel %vm801, %v3891, %v3893
        %3910 = vst [vmem:[#allocation6 + $0x580] sm:$0xff] %v3894
        %3911 = vst [vmem:[#allocation6 + $0x588] sm:$0xff] %v3895
        %3912 = vst [vmem:[#allocation6 + $0x590] sm:$0xff] %v3896
        %3913 = vst [vmem:[#allocation6 + $0x598] sm:$0xff] %v3897
        %3914 = vst [vmem:[#allocation6 + $0x5a0] sm:$0xff] %v3898
        %3915 = vst [vmem:[#allocation6 + $0x5a8] sm:$0xff] %v3899
        %3916 = vst [vmem:[#allocation6 + $0x5b0] sm:$0xff] %v3900
        %3917 = vst [vmem:[#allocation6 + $0x5b8] sm:$0xff] %v3901
        %v3918 = vld [vmem:[#allocation5 + $0x10] sm:$0xff]
        %v3919 = vld [vmem:[#allocation5 + $0x18] sm:$0xff]
        %v3920 = vld [vmem:[#allocation5 + $0x20] sm:$0xff]
        %v3921 = vld [vmem:[#allocation5 + $0x28] sm:$0xff]
        %v3922 = vld [vmem:[#allocation5 + $0x30] sm:$0xff]
        %v3923 = vld [vmem:[#allocation5 + $0x38] sm:$0xff]
        %v3924 = vld [vmem:[#allocation5 + $0x40] sm:$0xff]
        %v3925 = vld [vmem:[#allocation5 + $0x48] sm:$0xff]
        %v3926 = vld [vmem:[#allocation5 + $0x50] sm:$0xff]
        %3936 = vrot.lane.b32.xlu0 %v3918, 122
        %v3937 = vpop.permute.xlu0 %3936
        %3938 = vrot.lane.b32.xlu0 %v3919, 122
        %v3939 = vpop.permute.xlu0 %3938
        %3940 = vrot.lane.b32.xlu0 %v3920, 122
        %v3941 = vpop.permute.xlu0 %3940
        %3942 = vrot.lane.b32.xlu0 %v3921, 122
        %v3943 = vpop.permute.xlu0 %3942
        %3944 = vrot.lane.b32.xlu0 %v3922, 122
        %v3945 = vpop.permute.xlu0 %3944
        %3946 = vrot.lane.b32.xlu0 %v3923, 122
        %v3947 = vpop.permute.xlu0 %3946
        %3948 = vrot.lane.b32.xlu0 %v3924, 122
        %v3949 = vpop.permute.xlu0 %3948
        %3950 = vrot.lane.b32.xlu0 %v3925, 122
        %v3951 = vpop.permute.xlu0 %3950
        %3952 = vrot.lane.b32.xlu0 %v3926, 122
        %v3953 = vpop.permute.xlu0 %3952
        %v3954 = vsel %vm2838, %v3937, %v3939
        %v3955 = vsel %vm2838, %v3939, %v3941
        %v3956 = vsel %vm2838, %v3941, %v3943
        %v3957 = vsel %vm2838, %v3943, %v3945
        %v3958 = vsel %vm2838, %v3945, %v3947
        %v3959 = vsel %vm2838, %v3947, %v3949
        %v3960 = vsel %vm2838, %v3949, %v3951
        %v3961 = vsel %vm2838, %v3951, %v3953
        %3970 = vst [vmem:[#allocation6 + $0x5c0] sm:$0xff] %v3954
        %3971 = vst [vmem:[#allocation6 + $0x5c8] sm:$0xff] %v3955
        %3972 = vst [vmem:[#allocation6 + $0x5d0] sm:$0xff] %v3956
        %3973 = vst [vmem:[#allocation6 + $0x5d8] sm:$0xff] %v3957
        %3974 = vst [vmem:[#allocation6 + $0x5e0] sm:$0xff] %v3958
        %3975 = vst [vmem:[#allocation6 + $0x5e8] sm:$0xff] %v3959
        %3976 = vst [vmem:[#allocation6 + $0x5f0] sm:$0xff] %v3960
        %3977 = vst [vmem:[#allocation6 + $0x5f8] sm:$0xff] %v3961
        %v3978 = vld [vmem:[#allocation5 + $0x10] sm:$0xff]
        %v3979 = vld [vmem:[#allocation5 + $0x18] sm:$0xff]
        %v3980 = vld [vmem:[#allocation5 + $0x20] sm:$0xff]
        %v3981 = vld [vmem:[#allocation5 + $0x28] sm:$0xff]
        %v3982 = vld [vmem:[#allocation5 + $0x30] sm:$0xff]
        %v3983 = vld [vmem:[#allocation5 + $0x38] sm:$0xff]
        %v3984 = vld [vmem:[#allocation5 + $0x40] sm:$0xff]
        %v3985 = vld [vmem:[#allocation5 + $0x48] sm:$0xff]
        %v3986 = vld [vmem:[#allocation5 + $0x50] sm:$0xff]
        %3996 = vrot.lane.b32.xlu0 %v3978, 120
        %v3997 = vpop.permute.xlu0 %3996
        %3998 = vrot.lane.b32.xlu0 %v3979, 120
        %v3999 = vpop.permute.xlu0 %3998
        %4000 = vrot.lane.b32.xlu0 %v3980, 120
        %v4001 = vpop.permute.xlu0 %4000
        %4002 = vrot.lane.b32.xlu0 %v3981, 120
        %v4003 = vpop.permute.xlu0 %4002
        %4004 = vrot.lane.b32.xlu0 %v3982, 120
        %v4005 = vpop.permute.xlu0 %4004
        %4006 = vrot.lane.b32.xlu0 %v3983, 120
        %v4007 = vpop.permute.xlu0 %4006
        %4008 = vrot.lane.b32.xlu0 %v3984, 120
        %v4009 = vpop.permute.xlu0 %4008
        %4010 = vrot.lane.b32.xlu0 %v3985, 120
        %v4011 = vpop.permute.xlu0 %4010
        %4012 = vrot.lane.b32.xlu0 %v3986, 120
        %v4013 = vpop.permute.xlu0 %4012
        %v4014 = vsel %vm2899, %v3997, %v3999
        %v4015 = vsel %vm2899, %v3999, %v4001
        %v4016 = vsel %vm2899, %v4001, %v4003
        %v4017 = vsel %vm2899, %v4003, %v4005
        %v4018 = vsel %vm2899, %v4005, %v4007
        %v4019 = vsel %vm2899, %v4007, %v4009
        %v4020 = vsel %vm2899, %v4009, %v4011
        %v4021 = vsel %vm2899, %v4011, %v4013
        %4030 = vst [vmem:[#allocation6 + $0x600] sm:$0xff] %v4014
        %4031 = vst [vmem:[#allocation6 + $0x608] sm:$0xff] %v4015
        %4032 = vst [vmem:[#allocation6 + $0x610] sm:$0xff] %v4016
        %4033 = vst [vmem:[#allocation6 + $0x618] sm:$0xff] %v4017
        %4034 = vst [vmem:[#allocation6 + $0x620] sm:$0xff] %v4018
        %4035 = vst [vmem:[#allocation6 + $0x628] sm:$0xff] %v4019
        %4036 = vst [vmem:[#allocation6 + $0x630] sm:$0xff] %v4020
        %4037 = vst [vmem:[#allocation6 + $0x638] sm:$0xff] %v4021
        %v4038 = vld [vmem:[%s3] sm:$0xff]
        %v4039 = vld [vmem:[%s3 + $0x8] sm:$0xff]
        %v4040 = vld [vmem:[%s3 + $0x10] sm:$0xff]
        %v4041 = vld [vmem:[%s3 + $0x18] sm:$0xff]
        %v4042 = vld [vmem:[#allocation6] sm:$0xff]
        %v4043 = vld [vmem:[#allocation6 + $0x8] sm:$0xff]
        %v4044 = vld [vmem:[#allocation6 + $0x10] sm:$0xff]
        %v4045 = vld [vmem:[#allocation6 + $0x18] sm:$0xff]
        %v4046 = vld [vmem:[#allocation6 + $0x20] sm:$0xff]
        %v4047 = vld [vmem:[#allocation6 + $0x28] sm:$0xff]
        %v4048 = vld [vmem:[#allocation6 + $0x30] sm:$0xff]
        %v4049 = vld [vmem:[#allocation6 + $0x38] sm:$0xff]
        %v4050 = vld [vmem:[#allocation6 + $0x40] sm:$0xff]
        %v4051 = vld [vmem:[#allocation6 + $0x48] sm:$0xff]
        %v4052 = vld [vmem:[#allocation6 + $0x50] sm:$0xff]
        %v4053 = vld [vmem:[#allocation6 + $0x58] sm:$0xff]
        %v4054 = vld [vmem:[#allocation6 + $0x60] sm:$0xff]
        %v4055 = vld [vmem:[#allocation6 + $0x68] sm:$0xff]
        %v4056 = vld [vmem:[#allocation6 + $0x70] sm:$0xff]
        %v4057 = vld [vmem:[#allocation6 + $0x78] sm:$0xff]
        %v4058 = vld [vmem:[#allocation6 + $0x80] sm:$0xff]
        %v4059 = vld [vmem:[#allocation6 + $0x88] sm:$0xff]
        %v4060 = vld [vmem:[#allocation6 + $0x90] sm:$0xff]
        %v4061 = vld [vmem:[#allocation6 + $0x98] sm:$0xff]
        %v4062 = vld [vmem:[#allocation6 + $0xa0] sm:$0xff]
        %v4063 = vld [vmem:[#allocation6 + $0xa8] sm:$0xff]
        %v4064 = vld [vmem:[#allocation6 + $0xb0] sm:$0xff]
        %v4065 = vld [vmem:[#allocation6 + $0xb8] sm:$0xff]
        %v4066 = vld [vmem:[#allocation6 + $0xc0] sm:$0xff]
        %v4067 = vld [vmem:[#allocation6 + $0xc8] sm:$0xff]
        %v4068 = vld [vmem:[#allocation6 + $0xd0] sm:$0xff]
        %v4069 = vld [vmem:[#allocation6 + $0xd8] sm:$0xff]
        %v4070 = vld [vmem:[#allocation6 + $0xe0] sm:$0xff]
        %v4071 = vld [vmem:[#allocation6 + $0xe8] sm:$0xff]
        %v4072 = vld [vmem:[#allocation6 + $0xf0] sm:$0xff]
        %v4073 = vld [vmem:[#allocation6 + $0xf8] sm:$0xff]
        %v4074 = vld [vmem:[#allocation6 + $0x100] sm:$0xff]
        %v4075 = vld [vmem:[#allocation6 + $0x108] sm:$0xff]
        %v4076 = vld [vmem:[#allocation6 + $0x110] sm:$0xff]
        %v4077 = vld [vmem:[#allocation6 + $0x118] sm:$0xff]
        %v4078 = vld [vmem:[#allocation6 + $0x120] sm:$0xff]
        %v4079 = vld [vmem:[#allocation6 + $0x128] sm:$0xff]
        %v4080 = vld [vmem:[#allocation6 + $0x130] sm:$0xff]
        %v4081 = vld [vmem:[#allocation6 + $0x138] sm:$0xff]
        %v4082 = vld [vmem:[#allocation6 + $0x140] sm:$0xff]
        %v4083 = vld [vmem:[#allocation6 + $0x148] sm:$0xff]
        %v4084 = vld [vmem:[#allocation6 + $0x150] sm:$0xff]
        %v4085 = vld [vmem:[#allocation6 + $0x158] sm:$0xff]
        %v4086 = vld [vmem:[#allocation6 + $0x160] sm:$0xff]
        %v4087 = vld [vmem:[#allocation6 + $0x168] sm:$0xff]
        %v4088 = vld [vmem:[#allocation6 + $0x170] sm:$0xff]
        %v4089 = vld [vmem:[#allocation6 + $0x178] sm:$0xff]
        %v4090 = vld [vmem:[#allocation6 + $0x180] sm:$0xff]
        %v4091 = vld [vmem:[#allocation6 + $0x188] sm:$0xff]
        %v4092 = vld [vmem:[#allocation6 + $0x190] sm:$0xff]
        %v4093 = vld [vmem:[#allocation6 + $0x198] sm:$0xff]
        %v4094 = vld [vmem:[#allocation6 + $0x1a0] sm:$0xff]
        %v4095 = vld [vmem:[#allocation6 + $0x1a8] sm:$0xff]
        %v4096 = vld [vmem:[#allocation6 + $0x1b0] sm:$0xff]
        %v4097 = vld [vmem:[#allocation6 + $0x1b8] sm:$0xff]
        %v4098 = vld [vmem:[#allocation6 + $0x1c0] sm:$0xff]
        %v4099 = vld [vmem:[#allocation6 + $0x1c8] sm:$0xff]
        %v4100 = vld [vmem:[#allocation6 + $0x1d0] sm:$0xff]
        %v4101 = vld [vmem:[#allocation6 + $0x1d8] sm:$0xff]
        %v4102 = vld [vmem:[#allocation6 + $0x1e0] sm:$0xff]
        %v4103 = vld [vmem:[#allocation6 + $0x1e8] sm:$0xff]
        %v4104 = vld [vmem:[#allocation6 + $0x1f0] sm:$0xff]
        %v4105 = vld [vmem:[#allocation6 + $0x1f8] sm:$0xff]
        %v4106 = vld [vmem:[#allocation6 + $0x200] sm:$0xff]
        %v4107 = vld [vmem:[#allocation6 + $0x208] sm:$0xff]
        %v4108 = vld [vmem:[#allocation6 + $0x210] sm:$0xff]
        %v4109 = vld [vmem:[#allocation6 + $0x218] sm:$0xff]
        %v4110 = vld [vmem:[#allocation6 + $0x220] sm:$0xff]
        %v4111 = vld [vmem:[#allocation6 + $0x228] sm:$0xff]
        %v4112 = vld [vmem:[#allocation6 + $0x230] sm:$0xff]
        %v4113 = vld [vmem:[#allocation6 + $0x238] sm:$0xff]
        %v4114 = vld [vmem:[#allocation6 + $0x240] sm:$0xff]
        %v4115 = vld [vmem:[#allocation6 + $0x248] sm:$0xff]
        %v4116 = vld [vmem:[#allocation6 + $0x250] sm:$0xff]
        %v4117 = vld [vmem:[#allocation6 + $0x258] sm:$0xff]
        %v4118 = vld [vmem:[#allocation6 + $0x260] sm:$0xff]
        %v4119 = vld [vmem:[#allocation6 + $0x268] sm:$0xff]
        %v4120 = vld [vmem:[#allocation6 + $0x270] sm:$0xff]
        %v4121 = vld [vmem:[#allocation6 + $0x278] sm:$0xff]
        %v4122 = vld [vmem:[#allocation6 + $0x280] sm:$0xff]
        %v4123 = vld [vmem:[#allocation6 + $0x288] sm:$0xff]
        %v4124 = vld [vmem:[#allocation6 + $0x290] sm:$0xff]
        %v4125 = vld [vmem:[#allocation6 + $0x298] sm:$0xff]
        %v4126 = vld [vmem:[#allocation6 + $0x2a0] sm:$0xff]
        %v4127 = vld [vmem:[#allocation6 + $0x2a8] sm:$0xff]
        %v4128 = vld [vmem:[#allocation6 + $0x2b0] sm:$0xff]
        %v4129 = vld [vmem:[#allocation6 + $0x2b8] sm:$0xff]
        %v4130 = vld [vmem:[#allocation6 + $0x2c0] sm:$0xff]
        %v4131 = vld [vmem:[#allocation6 + $0x2c8] sm:$0xff]
        %v4132 = vld [vmem:[#allocation6 + $0x2d0] sm:$0xff]
        %v4133 = vld [vmem:[#allocation6 + $0x2d8] sm:$0xff]
        %v4134 = vld [vmem:[#allocation6 + $0x2e0] sm:$0xff]
        %v4135 = vld [vmem:[#allocation6 + $0x2e8] sm:$0xff]
        %v4136 = vld [vmem:[#allocation6 + $0x2f0] sm:$0xff]
        %v4137 = vld [vmem:[#allocation6 + $0x2f8] sm:$0xff]
        %v4138 = vld [vmem:[#allocation6 + $0x300] sm:$0xff]
        %v4139 = vld [vmem:[#allocation6 + $0x308] sm:$0xff]
        %v4140 = vld [vmem:[#allocation6 + $0x310] sm:$0xff]
        %v4141 = vld [vmem:[#allocation6 + $0x318] sm:$0xff]
        %v4142 = vld [vmem:[#allocation6 + $0x320] sm:$0xff]
        %v4143 = vld [vmem:[#allocation6 + $0x328] sm:$0xff]
        %v4144 = vld [vmem:[#allocation6 + $0x330] sm:$0xff]
        %v4145 = vld [vmem:[#allocation6 + $0x338] sm:$0xff]
        %v4146 = vld [vmem:[#allocation6 + $0x340] sm:$0xff]
        %v4147 = vld [vmem:[#allocation6 + $0x348] sm:$0xff]
        %v4148 = vld [vmem:[#allocation6 + $0x350] sm:$0xff]
        %v4149 = vld [vmem:[#allocation6 + $0x358] sm:$0xff]
        %v4150 = vld [vmem:[#allocation6 + $0x360] sm:$0xff]
        %v4151 = vld [vmem:[#allocation6 + $0x368] sm:$0xff]
        %v4152 = vld [vmem:[#allocation6 + $0x370] sm:$0xff]
        %v4153 = vld [vmem:[#allocation6 + $0x378] sm:$0xff]
        %v4154 = vld [vmem:[#allocation6 + $0x380] sm:$0xff]
        %v4155 = vld [vmem:[#allocation6 + $0x388] sm:$0xff]
        %v4156 = vld [vmem:[#allocation6 + $0x390] sm:$0xff]
        %v4157 = vld [vmem:[#allocation6 + $0x398] sm:$0xff]
        %v4158 = vld [vmem:[#allocation6 + $0x3a0] sm:$0xff]
        %v4159 = vld [vmem:[#allocation6 + $0x3a8] sm:$0xff]
        %v4160 = vld [vmem:[#allocation6 + $0x3b0] sm:$0xff]
        %v4161 = vld [vmem:[#allocation6 + $0x3b8] sm:$0xff]
        %v4162 = vld [vmem:[#allocation6 + $0x3c0] sm:$0xff]
        %v4163 = vld [vmem:[#allocation6 + $0x3c8] sm:$0xff]
        %v4164 = vld [vmem:[#allocation6 + $0x3d0] sm:$0xff]
        %v4165 = vld [vmem:[#allocation6 + $0x3d8] sm:$0xff]
        %v4166 = vld [vmem:[#allocation6 + $0x3e0] sm:$0xff]
        %v4167 = vld [vmem:[#allocation6 + $0x3e8] sm:$0xff]
        %v4168 = vld [vmem:[#allocation6 + $0x3f0] sm:$0xff]
        %v4169 = vld [vmem:[#allocation6 + $0x3f8] sm:$0xff]
        %v4170 = vld [vmem:[#allocation6 + $0x400] sm:$0xff]
        %v4171 = vld [vmem:[#allocation6 + $0x408] sm:$0xff]
        %v4172 = vld [vmem:[#allocation6 + $0x410] sm:$0xff]
        %v4173 = vld [vmem:[#allocation6 + $0x418] sm:$0xff]
        %v4174 = vld [vmem:[#allocation6 + $0x420] sm:$0xff]
        %v4175 = vld [vmem:[#allocation6 + $0x428] sm:$0xff]
        %v4176 = vld [vmem:[#allocation6 + $0x430] sm:$0xff]
        %v4177 = vld [vmem:[#allocation6 + $0x438] sm:$0xff]
        %v4178 = vld [vmem:[#allocation6 + $0x440] sm:$0xff]
        %v4179 = vld [vmem:[#allocation6 + $0x448] sm:$0xff]
        %v4180 = vld [vmem:[#allocation6 + $0x450] sm:$0xff]
        %v4181 = vld [vmem:[#allocation6 + $0x458] sm:$0xff]
        %v4182 = vld [vmem:[#allocation6 + $0x460] sm:$0xff]
        %v4183 = vld [vmem:[#allocation6 + $0x468] sm:$0xff]
        %v4184 = vld [vmem:[#allocation6 + $0x470] sm:$0xff]
        %v4185 = vld [vmem:[#allocation6 + $0x478] sm:$0xff]
        %v4186 = vld [vmem:[#allocation6 + $0x480] sm:$0xff]
        %v4187 = vld [vmem:[#allocation6 + $0x488] sm:$0xff]
        %v4188 = vld [vmem:[#allocation6 + $0x490] sm:$0xff]
        %v4189 = vld [vmem:[#allocation6 + $0x498] sm:$0xff]
        %v4190 = vld [vmem:[#allocation6 + $0x4a0] sm:$0xff]
        %v4191 = vld [vmem:[#allocation6 + $0x4a8] sm:$0xff]
        %v4192 = vld [vmem:[#allocation6 + $0x4b0] sm:$0xff]
        %v4193 = vld [vmem:[#allocation6 + $0x4b8] sm:$0xff]
        %v4194 = vld [vmem:[#allocation6 + $0x4c0] sm:$0xff]
        %v4195 = vld [vmem:[#allocation6 + $0x4c8] sm:$0xff]
        %v4196 = vld [vmem:[#allocation6 + $0x4d0] sm:$0xff]
        %v4197 = vld [vmem:[#allocation6 + $0x4d8] sm:$0xff]
        %v4198 = vld [vmem:[#allocation6 + $0x4e0] sm:$0xff]
        %v4199 = vld [vmem:[#allocation6 + $0x4e8] sm:$0xff]
        %v4200 = vld [vmem:[#allocation6 + $0x4f0] sm:$0xff]
        %v4201 = vld [vmem:[#allocation6 + $0x4f8] sm:$0xff]
        %v4202 = vld [vmem:[#allocation6 + $0x500] sm:$0xff]
        %v4203 = vld [vmem:[#allocation6 + $0x508] sm:$0xff]
        %v4204 = vld [vmem:[#allocation6 + $0x510] sm:$0xff]
        %v4205 = vld [vmem:[#allocation6 + $0x518] sm:$0xff]
        %v4206 = vld [vmem:[#allocation6 + $0x520] sm:$0xff]
        %v4207 = vld [vmem:[#allocation6 + $0x528] sm:$0xff]
        %v4208 = vld [vmem:[#allocation6 + $0x530] sm:$0xff]
        %v4209 = vld [vmem:[#allocation6 + $0x538] sm:$0xff]
        %v4210 = vld [vmem:[#allocation6 + $0x540] sm:$0xff]
        %v4211 = vld [vmem:[#allocation6 + $0x548] sm:$0xff]
        %v4212 = vld [vmem:[#allocation6 + $0x550] sm:$0xff]
        %v4213 = vld [vmem:[#allocation6 + $0x558] sm:$0xff]
        %v4214 = vld [vmem:[#allocation6 + $0x560] sm:$0xff]
        %v4215 = vld [vmem:[#allocation6 + $0x568] sm:$0xff]
        %v4216 = vld [vmem:[#allocation6 + $0x570] sm:$0xff]
        %v4217 = vld [vmem:[#allocation6 + $0x578] sm:$0xff]
        %v4218 = vld [vmem:[#allocation6 + $0x580] sm:$0xff]
        %v4219 = vld [vmem:[#allocation6 + $0x588] sm:$0xff]
        %v4220 = vld [vmem:[#allocation6 + $0x590] sm:$0xff]
        %v4221 = vld [vmem:[#allocation6 + $0x598] sm:$0xff]
        %v4222 = vld [vmem:[#allocation6 + $0x5a0] sm:$0xff]
        %v4223 = vld [vmem:[#allocation6 + $0x5a8] sm:$0xff]
        %v4224 = vld [vmem:[#allocation6 + $0x5b0] sm:$0xff]
        %v4225 = vld [vmem:[#allocation6 + $0x5b8] sm:$0xff]
        %v4226 = vld [vmem:[#allocation6 + $0x5c0] sm:$0xff]
        %v4227 = vld [vmem:[#allocation6 + $0x5c8] sm:$0xff]
        %v4228 = vld [vmem:[#allocation6 + $0x5d0] sm:$0xff]
        %v4229 = vld [vmem:[#allocation6 + $0x5d8] sm:$0xff]
        %v4230 = vld [vmem:[#allocation6 + $0x5e0] sm:$0xff]
        %v4231 = vld [vmem:[#allocation6 + $0x5e8] sm:$0xff]
        %v4232 = vld [vmem:[#allocation6 + $0x5f0] sm:$0xff]
        %v4233 = vld [vmem:[#allocation6 + $0x5f8] sm:$0xff]
        %v4234 = vld [vmem:[#allocation6 + $0x600] sm:$0xff]
        %v4235 = vld [vmem:[#allocation6 + $0x608] sm:$0xff]
        %v4236 = vld [vmem:[#allocation6 + $0x610] sm:$0xff]
        %v4237 = vld [vmem:[#allocation6 + $0x618] sm:$0xff]
        %v4238 = vld [vmem:[#allocation6 + $0x620] sm:$0xff]
        %v4239 = vld [vmem:[#allocation6 + $0x628] sm:$0xff]
        %v4240 = vld [vmem:[#allocation6 + $0x630] sm:$0xff]
        %v4241 = vld [vmem:[#allocation6 + $0x638] sm:$0xff]
        %v4242 = vld [vmem:[%s4] sm:$0xff]
        %v4243 = vld [vmem:[%s4 + $0x8] sm:$0xff]
        %4245 = vset.pattern.permute.xlu0 0
        %4246 = vperm.xlu0 %4245, %v4242
        %v4247 = vpop.permute.xlu0 %4246
        %4250 = vset.pattern.permute.xlu0 0
        %4251 = vperm.xlu0 %4250, %v4243
        %v4252 = vpop.permute.xlu0 %4251
        %v4255 = vsel %vm2205, %v4039, 0
        %v4258 = vsel %vm2205, %v4041, 0
        %4260 = vmatprep.subr.mxu0 %v4043
        %4261 = vmatpush1.msra.mxu0 %v4042
        %4262 = vmatprep.subr.mxu0 %v4051
        %4263 = vmatpush1.msra.mxu0 %v4050
        %4264 = vmatprep.subr.mxu0 %v4059
        %4265 = vmatpush1.msra.mxu0 %v4058
        %4266 = vmatprep.subr.mxu0 %v4067
        %4267 = vmatpush1.msra.mxu0 %v4066
        %4268 = vmatprep.subr.mxu0 %v4075
        %4269 = vmatpush1.msra.mxu0 %v4074
        %4270 = vmatprep.subr.mxu0 %v4083
        %4271 = vmatpush1.msra.mxu0 %v4082
        %4272 = vmatprep.subr.mxu0 %v4091
        %4273 = vmatpush1.msra.mxu0 %v4090
        %4274 = vmatprep.subr.mxu0 %v4099
        %4275 = vmatpush1.msra.mxu0 %v4098
        %4276 = vmatprep.subr.mxu0 %v4107
        %4277 = vmatpush1.msra.mxu0 %v4106
        %4278 = vmatprep.subr.mxu0 %v4115
        %4279 = vmatpush1.msra.mxu0 %v4114
        %4280 = vmatprep.subr.mxu0 %v4123
        %4281 = vmatpush1.msra.mxu0 %v4122
        %4282 = vmatprep.subr.mxu0 %v4131
        %4283 = vmatpush1.msra.mxu0 %v4130
        %4284 = vmatprep.subr.mxu0 %v4139
        %4285 = vmatpush1.msra.mxu0 %v4138
        %4286 = vmatprep.subr.mxu0 %v4147
        %4287 = vmatpush1.msra.mxu0 %v4146
        %4288 = vmatprep.subr.mxu0 %v4155
        %4289 = vmatpush1.msra.mxu0 %v4154
        %4290 = vmatprep.subr.mxu0 %v4163
        %4291 = vmatpush1.msra.mxu0 %v4162
        %4292 = vmatprep.subr.mxu0 %v4171
        %4293 = vmatpush1.msra.mxu0 %v4170
        %4294 = vmatprep.subr.mxu0 %v4179
        %4295 = vmatpush1.msra.mxu0 %v4178
        %4296 = vmatprep.subr.mxu0 %v4187
        %4297 = vmatpush1.msra.mxu0 %v4186
        %4298 = vmatprep.subr.mxu0 %v4195
        %4299 = vmatpush1.msra.mxu0 %v4194
        %4300 = vmatprep.subr.mxu0 %v4203
        %4301 = vmatpush1.msra.mxu0 %v4202
        %4302 = vmatprep.subr.mxu0 %v4211
        %4303 = vmatpush1.msra.mxu0 %v4210
        %4304 = vmatprep.subr.mxu0 %v4219
        %4305 = vmatpush1.msra.mxu0 %v4218
        %4306 = vmatprep.subr.mxu0 %v4227
        %4307 = vmatpush1.msra.mxu0 %v4226
        %4308 = vmatprep.subr.mxu0 %v4235
        %4309 = vmatpush1.msra.mxu0 %v4234
        %4310 = vmatprep.subr.mxu0 0.0
        %4311 = vmatpush1.msra.mxu0 0.0
        %4312 = vmatprep.subr.mxu0 0.0
        %4313 = vmatpush1.msra.mxu0 0.0
        %4314 = vmatprep.subr.mxu0 0.0
        %4315 = vmatpush1.msra.mxu0 0.0
        %4316 = vmatprep.subr.mxu0 0.0
        %4317 = vmatpush1.msra.mxu0 0.0
        %4318 = vmatprep.subr.mxu0 0.0
        %4319 = vmatpush1.msra.mxu0 0.0
        %4320 = vmatprep.subr.mxu0 0.0
        %4321 = vmatpush1.msra.mxu0 0.0
        %4322 = vmatprep.subr.mxu0 0.0
        %4323 = vmatpush1.msra.mxu0 0.0
        %4324 = vmatprep.mubr.f32.mxu0 %v4255
        %4325 = vmatmul.mubr.f32.gmra.mrb[0].mxu0 %v4038
        %v4326 = vpop.f32.mrb[0].mxu0
        %v4327 = vadd.f32 %v4247, %v4326
        %v4328 = vpop.f32.mrb[0].mxu0
        %v4329 = vadd.f32 %v4247, %v4328
        %4330 = vmatprep.mubr.f32.mxu0 %v4258
        %4331 = vmatmul.mubr.f32.gmra.mrb[0].mxu0 %v4040
        %v4332 = vpop.f32.mrb[0].mxu0
        %v4333 = vadd.f32 %v4252, %v4332
        %v4334 = vpop.f32.mrb[0].mxu0
        %v4335 = vadd.f32 %v4252, %v4334
        %4336 = vdwg.mxu0
        %4337 = vmatprep.subr.mxu0 %v4045
        %4338 = vmatpush1.msra.mxu0 %v4044
        %4339 = vmatprep.subr.mxu0 %v4053
        %4340 = vmatpush1.msra.mxu0 %v4052
        %4341 = vmatprep.subr.mxu0 %v4061
        %4342 = vmatpush1.msra.mxu0 %v4060
        %4343 = vmatprep.subr.mxu0 %v4069
        %4344 = vmatpush1.msra.mxu0 %v4068
        %4345 = vmatprep.subr.mxu0 %v4077
        %4346 = vmatpush1.msra.mxu0 %v4076
        %4347 = vmatprep.subr.mxu0 %v4085
        %4348 = vmatpush1.msra.mxu0 %v4084
        %4349 = vmatprep.subr.mxu0 %v4093
        %4350 = vmatpush1.msra.mxu0 %v4092
        %4351 = vmatprep.subr.mxu0 %v4101
        %4352 = vmatpush1.msra.mxu0 %v4100
        %4353 = vmatprep.subr.mxu0 %v4109
        %4354 = vmatpush1.msra.mxu0 %v4108
        %4355 = vmatprep.subr.mxu0 %v4117
        %4356 = vmatpush1.msra.mxu0 %v4116
        %4357 = vmatprep.subr.mxu0 %v4125
        %4358 = vmatpush1.msra.mxu0 %v4124
        %4359 = vmatprep.subr.mxu0 %v4133
        %4360 = vmatpush1.msra.mxu0 %v4132
        %4361 = vmatprep.subr.mxu0 %v4141
        %4362 = vmatpush1.msra.mxu0 %v4140
        %4363 = vmatprep.subr.mxu0 %v4149
        %4364 = vmatpush1.msra.mxu0 %v4148
        %4365 = vmatprep.subr.mxu0 %v4157
        %4366 = vmatpush1.msra.mxu0 %v4156
        %4367 = vmatprep.subr.mxu0 %v4165
        %4368 = vmatpush1.msra.mxu0 %v4164
        %4369 = vmatprep.subr.mxu0 %v4173
        %4370 = vmatpush1.msra.mxu0 %v4172
        %4371 = vmatprep.subr.mxu0 %v4181
        %4372 = vmatpush1.msra.mxu0 %v4180
        %4373 = vmatprep.subr.mxu0 %v4189
        %4374 = vmatpush1.msra.mxu0 %v4188
        %4375 = vmatprep.subr.mxu0 %v4197
        %4376 = vmatpush1.msra.mxu0 %v4196
        %4377 = vmatprep.subr.mxu0 %v4205
        %4378 = vmatpush1.msra.mxu0 %v4204
        %4379 = vmatprep.subr.mxu0 %v4213
        %4380 = vmatpush1.msra.mxu0 %v4212
        %4381 = vmatprep.subr.mxu0 %v4221
        %4382 = vmatpush1.msra.mxu0 %v4220
        %4383 = vmatprep.subr.mxu0 %v4229
        %4384 = vmatpush1.msra.mxu0 %v4228
        %4385 = vmatprep.subr.mxu0 %v4237
        %4386 = vmatpush1.msra.mxu0 %v4236
        %4387 = vmatprep.subr.mxu0 0.0
        %4388 = vmatpush1.msra.mxu0 0.0
        %4389 = vmatprep.subr.mxu0 0.0
        %4390 = vmatpush1.msra.mxu0 0.0
        %4391 = vmatprep.subr.mxu0 0.0
        %4392 = vmatpush1.msra.mxu0 0.0
        %4393 = vmatprep.subr.mxu0 0.0
        %4394 = vmatpush1.msra.mxu0 0.0
        %4395 = vmatprep.subr.mxu0 0.0
        %4396 = vmatpush1.msra.mxu0 0.0
        %4397 = vmatprep.subr.mxu0 0.0
        %4398 = vmatpush1.msra.mxu0 0.0
        %4399 = vmatprep.subr.mxu0 0.0
        %4400 = vmatpush1.msra.mxu0 0.0
        %4401 = vmatprep.mubr.f32.mxu0 %v4255
        %4402 = vmatmul.mubr.f32.gmra.mrb[0].mxu0 %v4038
        %v4403 = vpop.f32.mrb[0].mxu0
        %v4404 = vadd.f32 %v4247, %v4403
        %v4405 = vpop.f32.mrb[0].mxu0
        %v4406 = vadd.f32 %v4247, %v4405
        %4407 = vmatprep.mubr.f32.mxu0 %v4258
        %4408 = vmatmul.mubr.f32.gmra.mrb[0].mxu0 %v4040
        %v4409 = vpop.f32.mrb[0].mxu0
        %v4410 = vadd.f32 %v4252, %v4409
        %v4411 = vpop.f32.mrb[0].mxu0
        %v4412 = vadd.f32 %v4252, %v4411
        %4413 = vdwg.mxu0
        %4414 = vmatprep.subr.mxu0 %v4047
        %4415 = vmatpush1.msra.mxu0 %v4046
        %4416 = vmatprep.subr.mxu0 %v4055
        %4417 = vmatpush1.msra.mxu0 %v4054
        %4418 = vmatprep.subr.mxu0 %v4063
        %4419 = vmatpush1.msra.mxu0 %v4062
        %4420 = vmatprep.subr.mxu0 %v4071
        %4421 = vmatpush1.msra.mxu0 %v4070
        %4422 = vmatprep.subr.mxu0 %v4079
        %4423 = vmatpush1.msra.mxu0 %v4078
        %4424 = vmatprep.subr.mxu0 %v4087
        %4425 = vmatpush1.msra.mxu0 %v4086
        %4426 = vmatprep.subr.mxu0 %v4095
        %4427 = vmatpush1.msra.mxu0 %v4094
        %4428 = vmatprep.subr.mxu0 %v4103
        %4429 = vmatpush1.msra.mxu0 %v4102
        %4430 = vmatprep.subr.mxu0 %v4111
        %4431 = vmatpush1.msra.mxu0 %v4110
        %4432 = vmatprep.subr.mxu0 %v4119
        %4433 = vmatpush1.msra.mxu0 %v4118
        %4434 = vmatprep.subr.mxu0 %v4127
        %4435 = vmatpush1.msra.mxu0 %v4126
        %4436 = vmatprep.subr.mxu0 %v4135
        %4437 = vmatpush1.msra.mxu0 %v4134
        %4438 = vmatprep.subr.mxu0 %v4143
        %4439 = vmatpush1.msra.mxu0 %v4142
        %4440 = vmatprep.subr.mxu0 %v4151
        %4441 = vmatpush1.msra.mxu0 %v4150
        %4442 = vmatprep.subr.mxu0 %v4159
        %4443 = vmatpush1.msra.mxu0 %v4158
        %4444 = vmatprep.subr.mxu0 %v4167
        %4445 = vmatpush1.msra.mxu0 %v4166
        %4446 = vmatprep.subr.mxu0 %v4175
        %4447 = vmatpush1.msra.mxu0 %v4174
        %4448 = vmatprep.subr.mxu0 %v4183
        %4449 = vmatpush1.msra.mxu0 %v4182
        %4450 = vmatprep.subr.mxu0 %v4191
        %4451 = vmatpush1.msra.mxu0 %v4190
        %4452 = vmatprep.subr.mxu0 %v4199
        %4453 = vmatpush1.msra.mxu0 %v4198
        %4454 = vmatprep.subr.mxu0 %v4207
        %4455 = vmatpush1.msra.mxu0 %v4206
        %4456 = vmatprep.subr.mxu0 %v4215
        %4457 = vmatpush1.msra.mxu0 %v4214
        %4458 = vmatprep.subr.mxu0 %v4223
        %4459 = vmatpush1.msra.mxu0 %v4222
        %4460 = vmatprep.subr.mxu0 %v4231
        %4461 = vmatpush1.msra.mxu0 %v4230
        %4462 = vmatprep.subr.mxu0 %v4239
        %4463 = vmatpush1.msra.mxu0 %v4238
        %4464 = vmatprep.subr.mxu0 0.0
        %4465 = vmatpush1.msra.mxu0 0.0
        %4466 = vmatprep.subr.mxu0 0.0
        %4467 = vmatpush1.msra.mxu0 0.0
        %4468 = vmatprep.subr.mxu0 0.0
        %4469 = vmatpush1.msra.mxu0 0.0
        %4470 = vmatprep.subr.mxu0 0.0
        %4471 = vmatpush1.msra.mxu0 0.0
        %4472 = vmatprep.subr.mxu0 0.0
        %4473 = vmatpush1.msra.mxu0 0.0
        %4474 = vmatprep.subr.mxu0 0.0
        %4475 = vmatpush1.msra.mxu0 0.0
        %4476 = vmatprep.subr.mxu0 0.0
        %4477 = vmatpush1.msra.mxu0 0.0
        %4478 = vmatprep.mubr.f32.mxu0 %v4255
        %4479 = vmatmul.mubr.f32.gmra.mrb[0].mxu0 %v4038
        %v4480 = vpop.f32.mrb[0].mxu0
        %v4481 = vadd.f32 %v4247, %v4480
        %v4482 = vpop.f32.mrb[0].mxu0
        %v4483 = vadd.f32 %v4247, %v4482
        %4484 = vmatprep.mubr.f32.mxu0 %v4258
        %4485 = vmatmul.mubr.f32.gmra.mrb[0].mxu0 %v4040
        %v4486 = vpop.f32.mrb[0].mxu0
        %v4487 = vadd.f32 %v4252, %v4486
        %v4488 = vpop.f32.mrb[0].mxu0
        %v4489 = vadd.f32 %v4252, %v4488
        %4490 = vdwg.mxu0
        %4491 = vmatprep.subr.mxu0 %v4049
        %4492 = vmatpush1.msra.mxu0 %v4048
        %4493 = vmatprep.subr.mxu0 %v4057
        %4494 = vmatpush1.msra.mxu0 %v4056
        %4495 = vmatprep.subr.mxu0 %v4065
        %4496 = vmatpush1.msra.mxu0 %v4064
        %4497 = vmatprep.subr.mxu0 %v4073
        %4498 = vmatpush1.msra.mxu0 %v4072
        %4499 = vmatprep.subr.mxu0 %v4081
        %4500 = vmatpush1.msra.mxu0 %v4080
        %4501 = vmatprep.subr.mxu0 %v4089
        %4502 = vmatpush1.msra.mxu0 %v4088
        %4503 = vmatprep.subr.mxu0 %v4097
        %4504 = vmatpush1.msra.mxu0 %v4096
        %4505 = vmatprep.subr.mxu0 %v4105
        %4506 = vmatpush1.msra.mxu0 %v4104
        %4507 = vmatprep.subr.mxu0 %v4113
        %4508 = vmatpush1.msra.mxu0 %v4112
        %4509 = vmatprep.subr.mxu0 %v4121
        %4510 = vmatpush1.msra.mxu0 %v4120
        %4511 = vmatprep.subr.mxu0 %v4129
        %4512 = vmatpush1.msra.mxu0 %v4128
        %4513 = vmatprep.subr.mxu0 %v4137
        %4514 = vmatpush1.msra.mxu0 %v4136
        %4515 = vmatprep.subr.mxu0 %v4145
        %4516 = vmatpush1.msra.mxu0 %v4144
        %4517 = vmatprep.subr.mxu0 %v4153
        %4518 = vmatpush1.msra.mxu0 %v4152
        %4519 = vmatprep.subr.mxu0 %v4161
        %4520 = vmatpush1.msra.mxu0 %v4160
        %4521 = vmatprep.subr.mxu0 %v4169
        %4522 = vmatpush1.msra.mxu0 %v4168
        %4523 = vmatprep.subr.mxu0 %v4177
        %4524 = vmatpush1.msra.mxu0 %v4176
        %4525 = vmatprep.subr.mxu0 %v4185
        %4526 = vmatpush1.msra.mxu0 %v4184
        %4527 = vmatprep.subr.mxu0 %v4193
        %4528 = vmatpush1.msra.mxu0 %v4192
        %4529 = vmatprep.subr.mxu0 %v4201
        %4530 = vmatpush1.msra.mxu0 %v4200
        %4531 = vmatprep.subr.mxu0 %v4209
        %4532 = vmatpush1.msra.mxu0 %v4208
        %4533 = vmatprep.subr.mxu0 %v4217
        %4534 = vmatpush1.msra.mxu0 %v4216
        %4535 = vmatprep.subr.mxu0 %v4225
        %4536 = vmatpush1.msra.mxu0 %v4224
        %4537 = vmatprep.subr.mxu0 %v4233
        %4538 = vmatpush1.msra.mxu0 %v4232
        %4539 = vmatprep.subr.mxu0 %v4241
        %4540 = vmatpush1.msra.mxu0 %v4240
        %4541 = vmatprep.subr.mxu0 0.0
        %4542 = vmatpush1.msra.mxu0 0.0
        %4543 = vmatprep.subr.mxu0 0.0
        %4544 = vmatpush1.msra.mxu0 0.0
        %4545 = vmatprep.subr.mxu0 0.0
        %4546 = vmatpush1.msra.mxu0 0.0
        %4547 = vmatprep.subr.mxu0 0.0
        %4548 = vmatpush1.msra.mxu0 0.0
        %4549 = vmatprep.subr.mxu0 0.0
        %4550 = vmatpush1.msra.mxu0 0.0
        %4551 = vmatprep.subr.mxu0 0.0
        %4552 = vmatpush1.msra.mxu0 0.0
        %4553 = vmatprep.subr.mxu0 0.0
        %4554 = vmatpush1.msra.mxu0 0.0
        %4555 = vmatprep.mubr.f32.mxu0 %v4255
        %4556 = vmatmul.mubr.f32.gmra.mrb[0].mxu0 %v4038
        %v4557 = vpop.f32.mrb[0].mxu0
        %v4558 = vadd.f32 %v4247, %v4557
        %v4559 = vpop.f32.mrb[0].mxu0
        %v4560 = vadd.f32 %v4247, %v4559
        %4561 = vmatprep.mubr.f32.mxu0 %v4258
        %4562 = vmatmul.mubr.f32.gmra.mrb[0].mxu0 %v4040
        %v4563 = vpop.f32.mrb[0].mxu0
        %v4564 = vadd.f32 %v4252, %v4563
        %v4565 = vpop.f32.mrb[0].mxu0
        %v4566 = vadd.f32 %v4252, %v4565
        %4567 = vdwg.mxu0
        %v4568 = vmax.f32 %v4327, 0.0
        %v4569 = vmax.f32 %v4329, 0.0
        %v4570 = vmax.f32 %v4404, 0.0
        %v4571 = vmax.f32 %v4406, 0.0
        %v4572 = vmax.f32 %v4481, 0.0
        %v4573 = vmax.f32 %v4483, 0.0
        %v4574 = vmax.f32 %v4558, 0.0
        %v4575 = vmax.f32 %v4560, 0.0
        %v4576 = vmax.f32 %v4333, 0.0
        %v4577 = vmax.f32 %v4335, 0.0
        %v4578 = vmax.f32 %v4410, 0.0
        %v4579 = vmax.f32 %v4412, 0.0
        %v4580 = vmax.f32 %v4487, 0.0
        %v4581 = vmax.f32 %v4489, 0.0
        %v4582 = vmax.f32 %v4564, 0.0
        %v4583 = vmax.f32 %v4566, 0.0
        %4584 = vst [vmem:[#allocation7] sm:$0xff] %v4568
        %4585 = vst [vmem:[#allocation7 + $0x8] sm:$0xff] %v4569
        %4586 = vst [vmem:[#allocation7 + $0x10] sm:$0xff] %v4570
        %4587 = vst [vmem:[#allocation7 + $0x18] sm:$0xff] %v4571
        %4588 = vst [vmem:[#allocation7 + $0x20] sm:$0xff] %v4572
        %4589 = vst [vmem:[#allocation7 + $0x28] sm:$0xff] %v4573
        %4590 = vst [vmem:[#allocation7 + $0x30] sm:$0xff] %v4574
        %4591 = vst [vmem:[#allocation7 + $0x38] sm:$0xff] %v4575
        %4592 = vst [vmem:[#allocation7 + $0x40] sm:$0xff] %v4576
        %4593 = vst [vmem:[#allocation7 + $0x48] sm:$0xff] %v4577
        %4594 = vst [vmem:[#allocation7 + $0x50] sm:$0xff] %v4578
        %4595 = vst [vmem:[#allocation7 + $0x58] sm:$0xff] %v4579
        %4596 = vst [vmem:[#allocation7 + $0x60] sm:$0xff] %v4580
        %4597 = vst [vmem:[#allocation7 + $0x68] sm:$0xff] %v4581
        %4598 = vst [vmem:[#allocation7 + $0x70] sm:$0xff] %v4582
        %4599 = vst [vmem:[#allocation7 + $0x78] sm:$0xff] %v4583
        %4600 = vst [vmem:[#allocation8] sm:$0xff] 0.0
        %4601 = vst.msk [vmem:[#allocation8 + $0x8] sm:$0xff] %vm1472, 0.0
        %4602 = vst [vmem:[#allocation8 + $0x10] sm:$0xff] 0.0
        %4603 = vst.msk [vmem:[#allocation8 + $0x18] sm:$0xff] %vm1472, 0.0
        %v4604 = vld [vmem:[#allocation7] sm:$0xff]
        %v4605 = vld [vmem:[#allocation7 + $0x40] sm:$0xff]
        %4608 = vrot.lane.b32.xlu0 %v4604, 64
        %v4609 = vpop.permute.xlu0 %4608
        %4610 = vrot.lane.b32.xlu0 %v4605, 64
        %v4611 = vpop.permute.xlu0 %4610
        %v4614 = vmax.f32 %v4604, %v4609
        %v4615 = vmax.f32 %v4605, %v4611
        %4618 = vrot.lane.b32.xlu0 %v4614, 126
        %v4619 = vpop.permute.xlu0 %4618
        %4620 = vrot.lane.b32.xlu0 %v4615, 126
        %v4621 = vpop.permute.xlu0 %4620
        %v4624 = vmax.f32 %v4614, %v4619
        %v4625 = vmax.f32 %v4615, %v4621
        %vm4626 = vcmask 146432
        %4627 = vst.msk [vmem:[#allocation8] sm:$0xff] %vm4626, %v4624
        %4628 = vst.msk [vmem:[#allocation8 + $0x10] sm:$0xff] %vm4626, %v4625
        %v4629 = vld [vmem:[#allocation7 + $0x8] sm:$0xff]
        %v4630 = vld [vmem:[#allocation7 + $0x48] sm:$0xff]
        %4633 = vrot.lane.b32.xlu0 %v4629, 64
        %v4634 = vpop.permute.xlu0 %4633
        %4635 = vrot.lane.b32.xlu0 %v4630, 64
        %v4636 = vpop.permute.xlu0 %4635
        %v4639 = vmax.f32 %v4629, %v4634
        %v4640 = vmax.f32 %v4630, %v4636
        %4643 = vrot.lane.b32.xlu0 %v4639, 126
        %v4644 = vpop.permute.xlu0 %4643
        %4645 = vrot.lane.b32.xlu0 %v4640, 126
        %v4646 = vpop.permute.xlu0 %4645
        %v4649 = vmax.f32 %v4639, %v4644
        %v4650 = vmax.f32 %v4640, %v4646
        %4653 = vrot.lane.b32.xlu0 %v4649, 32
        %v4654 = vpop.permute.xlu0 %4653
        %4655 = vrot.lane.b32.xlu0 %v4650, 32
        %v4656 = vpop.permute.xlu0 %4655
        %vm4659 = vcmask 408832
        %4660 = vst.msk [vmem:[#allocation8] sm:$0xff] %vm4659, %v4654
        %4661 = vst.msk [vmem:[#allocation8 + $0x10] sm:$0xff] %vm4659, %v4656
        %v4662 = vld [vmem:[#allocation7 + $0x10] sm:$0xff]
        %v4663 = vld [vmem:[#allocation7 + $0x50] sm:$0xff]
        %4666 = vrot.lane.b32.xlu0 %v4662, 64
        %v4667 = vpop.permute.xlu0 %4666
        %4668 = vrot.lane.b32.xlu0 %v4663, 64
        %v4669 = vpop.permute.xlu0 %4668
        %v4672 = vmax.f32 %v4662, %v4667
        %v4673 = vmax.f32 %v4663, %v4669
        %4676 = vrot.lane.b32.xlu0 %v4672, 126
        %v4677 = vpop.permute.xlu0 %4676
        %4678 = vrot.lane.b32.xlu0 %v4673, 126
        %v4679 = vpop.permute.xlu0 %4678
        %v4682 = vmax.f32 %v4672, %v4677
        %v4683 = vmax.f32 %v4673, %v4679
        %4686 = vrot.lane.b32.xlu0 %v4682, 64
        %v4687 = vpop.permute.xlu0 %4686
        %4688 = vrot.lane.b32.xlu0 %v4683, 64
        %v4689 = vpop.permute.xlu0 %4688
        %vm4692 = vcmask 671232
        %4693 = vst.msk [vmem:[#allocation8] sm:$0xff] %vm4692, %v4687
        %4694 = vst.msk [vmem:[#allocation8 + $0x10] sm:$0xff] %vm4692, %v4689
        %v4695 = vld [vmem:[#allocation7 + $0x18] sm:$0xff]
        %v4696 = vld [vmem:[#allocation7 + $0x58] sm:$0xff]
        %4699 = vrot.lane.b32.xlu0 %v4695, 64
        %v4700 = vpop.permute.xlu0 %4699
        %4701 = vrot.lane.b32.xlu0 %v4696, 64
        %v4702 = vpop.permute.xlu0 %4701
        %v4705 = vmax.f32 %v4695, %v4700
        %v4706 = vmax.f32 %v4696, %v4702
        %4709 = vrot.lane.b32.xlu0 %v4705, 126
        %v4710 = vpop.permute.xlu0 %4709
        %4711 = vrot.lane.b32.xlu0 %v4706, 126
        %v4712 = vpop.permute.xlu0 %4711
        %v4715 = vmax.f32 %v4705, %v4710
        %v4716 = vmax.f32 %v4706, %v4712
        %4719 = vrot.lane.b32.xlu0 %v4715, 96
        %v4720 = vpop.permute.xlu0 %4719
        %4721 = vrot.lane.b32.xlu0 %v4716, 96
        %v4722 = vpop.permute.xlu0 %4721
        %vm4725 = vcmask 933632
        %4726 = vst.msk [vmem:[#allocation8] sm:$0xff] %vm4725, %v4720
        %4727 = vst.msk [vmem:[#allocation8 + $0x10] sm:$0xff] %vm4725, %v4722
        %v4728 = vld [vmem:[#allocation7 + $0x20] sm:$0xff]
        %v4729 = vld [vmem:[#allocation7 + $0x60] sm:$0xff]
        %4732 = vrot.lane.b32.xlu0 %v4728, 64
        %v4733 = vpop.permute.xlu0 %4732
        %4734 = vrot.lane.b32.xlu0 %v4729, 64
        %v4735 = vpop.permute.xlu0 %4734
        %v4738 = vmax.f32 %v4728, %v4733
        %v4739 = vmax.f32 %v4729, %v4735
        %4742 = vrot.lane.b32.xlu0 %v4738, 126
        %v4743 = vpop.permute.xlu0 %4742
        %4744 = vrot.lane.b32.xlu0 %v4739, 126
        %v4745 = vpop.permute.xlu0 %4744
        %v4748 = vmax.f32 %v4738, %v4743
        %v4749 = vmax.f32 %v4739, %v4745
        %4750 = vst.msk [vmem:[#allocation8 + $0x8] sm:$0xff] %vm4626, %v4748
        %4751 = vst.msk [vmem:[#allocation8 + $0x18] sm:$0xff] %vm4626, %v4749
        %v4752 = vld [vmem:[#allocation8] sm:$0xff]
        %v4753 = vld [vmem:[#allocation8 + $0x8] sm:$0xff]
        %v4754 = vld [vmem:[#allocation8 + $0x10] sm:$0xff]
        %v4755 = vld [vmem:[#allocation8 + $0x18] sm:$0xff]
        %v4756 = vld [vmem:[#allocation12] sm:$0xff]
        %v4757 = vld [vmem:[#allocation12 + $0x8] sm:$0xff]
        %v4758 = vld [vmem:[#allocation12 + $0x10] sm:$0xff]
        %v4759 = vld [vmem:[#allocation12 + $0x18] sm:$0xff]
        %v4760 = vld [vmem:[#allocation12 + $0x20] sm:$0xff]
        %v4761 = vld [vmem:[#allocation12 + $0x28] sm:$0xff]
        %v4762 = vld [vmem:[#allocation12 + $0x30] sm:$0xff]
        %v4763 = vld [vmem:[#allocation12 + $0x38] sm:$0xff]
        %v4764 = vld [vmem:[#allocation12 + $0x40] sm:$0xff]
        %v4765 = vld [vmem:[#allocation12 + $0x48] sm:$0xff]
        %v4766 = vld [vmem:[#allocation12 + $0x50] sm:$0xff]
        %v4767 = vld [vmem:[#allocation12 + $0x58] sm:$0xff]
        %v4768 = vld [vmem:[#allocation12 + $0x60] sm:$0xff]
        %v4769 = vld [vmem:[#allocation12 + $0x68] sm:$0xff]
        %v4770 = vld [vmem:[#allocation12 + $0x70] sm:$0xff]
        %v4771 = vld [vmem:[#allocation12 + $0x78] sm:$0xff]
        %v4772 = vld [vmem:[#allocation12 + $0x80] sm:$0xff]
        %v4773 = vld [vmem:[#allocation12 + $0x88] sm:$0xff]
        %v4774 = vld [vmem:[#allocation12 + $0x90] sm:$0xff]
        %v4775 = vld [vmem:[#allocation12 + $0x98] sm:$0xff]
        %v4776 = vld [vmem:[#allocation12 + $0xa0] sm:$0xff]
        %v4777 = vld [vmem:[#allocation12 + $0xa8] sm:$0xff]
        %v4778 = vld [vmem:[#allocation12 + $0xb0] sm:$0xff]
        %v4779 = vld [vmem:[#allocation12 + $0xb8] sm:$0xff]
        %v4780 = vld [vmem:[#allocation12 + $0xc0] sm:$0xff]
        %v4781 = vld [vmem:[#allocation12 + $0xc8] sm:$0xff]
        %v4782 = vld [vmem:[#allocation12 + $0xd0] sm:$0xff]
        %v4783 = vld [vmem:[#allocation12 + $0xd8] sm:$0xff]
        %v4784 = vld [vmem:[#allocation12 + $0xe0] sm:$0xff]
        %v4785 = vld [vmem:[#allocation12 + $0xe8] sm:$0xff]
        %v4786 = vld [vmem:[#allocation12 + $0xf0] sm:$0xff]
        %v4787 = vld [vmem:[#allocation12 + $0xf8] sm:$0xff]
        %v4788 = vld [vmem:[#allocation12 + $0x100] sm:$0xff]
        %v4789 = vld [vmem:[#allocation12 + $0x108] sm:$0xff]
        %v4790 = vld [vmem:[#allocation12 + $0x110] sm:$0xff]
        %v4791 = vld [vmem:[#allocation12 + $0x118] sm:$0xff]
        %v4792 = vld [vmem:[#allocation12 + $0x120] sm:$0xff]
        %v4793 = vld [vmem:[#allocation12 + $0x128] sm:$0xff]
        %v4794 = vld [vmem:[#allocation12 + $0x130] sm:$0xff]
        %v4795 = vld [vmem:[#allocation12 + $0x138] sm:$0xff]
        %v4796 = vld [vmem:[#allocation12 + $0x140] sm:$0xff]
        %v4797 = vld [vmem:[#allocation12 + $0x148] sm:$0xff]
        %v4798 = vld [vmem:[#allocation12 + $0x150] sm:$0xff]
        %v4799 = vld [vmem:[#allocation12 + $0x158] sm:$0xff]
        %v4800 = vld [vmem:[#allocation12 + $0x160] sm:$0xff]
        %v4801 = vld [vmem:[#allocation12 + $0x168] sm:$0xff]
        %v4802 = vld [vmem:[#allocation12 + $0x170] sm:$0xff]
        %v4803 = vld [vmem:[#allocation12 + $0x178] sm:$0xff]
        %v4804 = vld [vmem:[#allocation12 + $0x180] sm:$0xff]
        %v4805 = vld [vmem:[#allocation12 + $0x188] sm:$0xff]
        %v4806 = vld [vmem:[#allocation12 + $0x190] sm:$0xff]
        %v4807 = vld [vmem:[#allocation12 + $0x198] sm:$0xff]
        %v4808 = vld [vmem:[#allocation12 + $0x1a0] sm:$0xff]
        %v4809 = vld [vmem:[#allocation12 + $0x1a8] sm:$0xff]
        %v4810 = vld [vmem:[#allocation12 + $0x1b0] sm:$0xff]
        %v4811 = vld [vmem:[#allocation12 + $0x1b8] sm:$0xff]
        %v4812 = vld [vmem:[#allocation12 + $0x1c0] sm:$0xff]
        %v4813 = vld [vmem:[#allocation12 + $0x1c8] sm:$0xff]
        %v4814 = vld [vmem:[#allocation12 + $0x1d0] sm:$0xff]
        %v4815 = vld [vmem:[#allocation12 + $0x1d8] sm:$0xff]
        %v4816 = vld [vmem:[#allocation12 + $0x1e0] sm:$0xff]
        %v4817 = vld [vmem:[#allocation12 + $0x1e8] sm:$0xff]
        %v4818 = vld [vmem:[#allocation12 + $0x1f0] sm:$0xff]
        %v4819 = vld [vmem:[#allocation12 + $0x1f8] sm:$0xff]
        %v4820 = vld [vmem:[#allocation12 + $0x200] sm:$0xff]
        %v4821 = vld [vmem:[#allocation12 + $0x208] sm:$0xff]
        %v4822 = vld [vmem:[#allocation12 + $0x210] sm:$0xff]
        %v4823 = vld [vmem:[#allocation12 + $0x218] sm:$0xff]
        %v4824 = vld [vmem:[#allocation12 + $0x220] sm:$0xff]
        %v4825 = vld [vmem:[#allocation12 + $0x228] sm:$0xff]
        %v4826 = vld [vmem:[#allocation12 + $0x230] sm:$0xff]
        %v4827 = vld [vmem:[#allocation12 + $0x238] sm:$0xff]
        %v4828 = vld [vmem:[#allocation12 + $0x240] sm:$0xff]
        %v4829 = vld [vmem:[#allocation12 + $0x248] sm:$0xff]
        %v4830 = vld [vmem:[#allocation12 + $0x250] sm:$0xff]
        %v4831 = vld [vmem:[#allocation12 + $0x258] sm:$0xff]
        %v4832 = vld [vmem:[#allocation12 + $0x260] sm:$0xff]
        %v4833 = vld [vmem:[#allocation12 + $0x268] sm:$0xff]
        %v4834 = vld [vmem:[#allocation12 + $0x270] sm:$0xff]
        %v4835 = vld [vmem:[#allocation12 + $0x278] sm:$0xff]
        %v4837 = vsel %vm1472, %v4753, 0
        %v4840 = vsel %vm1472, %v4755, 0
        %4842 = vmatprep.subr.mxu0 %v4757
        %4843 = vmatpush1.msra.mxu0 %v4756
        %4844 = vmatprep.subr.mxu0 %v4761
        %4845 = vmatpush1.msra.mxu0 %v4760
        %4846 = vmatprep.subr.mxu0 %v4765
        %4847 = vmatpush1.msra.mxu0 %v4764
        %4848 = vmatprep.subr.mxu0 %v4769
        %4849 = vmatpush1.msra.mxu0 %v4768
        %4850 = vmatprep.subr.mxu0 %v4773
        %4851 = vmatpush1.msra.mxu0 %v4772
        %4852 = vmatprep.subr.mxu0 %v4777
        %4853 = vmatpush1.msra.mxu0 %v4776
        %4854 = vmatprep.subr.mxu0 %v4781
        %4855 = vmatpush1.msra.mxu0 %v4780
        %4856 = vmatprep.subr.mxu0 %v4785
        %4857 = vmatpush1.msra.mxu0 %v4784
        %4858 = vmatprep.subr.mxu0 %v4789
        %4859 = vmatpush1.msra.mxu0 %v4788
        %4860 = vmatprep.subr.mxu0 %v4793
        %4861 = vmatpush1.msra.mxu0 %v4792
        %4862 = vmatprep.subr.mxu0 %v4797
        %4863 = vmatpush1.msra.mxu0 %v4796
        %4864 = vmatprep.subr.mxu0 %v4801
        %4865 = vmatpush1.msra.mxu0 %v4800
        %4866 = vmatprep.subr.mxu0 %v4805
        %4867 = vmatpush1.msra.mxu0 %v4804
        %4868 = vmatprep.subr.mxu0 %v4809
        %4869 = vmatpush1.msra.mxu0 %v4808
        %4870 = vmatprep.subr.mxu0 %v4813
        %4871 = vmatpush1.msra.mxu0 %v4812
        %4872 = vmatprep.subr.mxu0 %v4817
        %4873 = vmatpush1.msra.mxu0 %v4816
        %4874 = vmatprep.subr.mxu0 %v4821
        %4875 = vmatpush1.msra.mxu0 %v4820
        %4876 = vmatprep.subr.mxu0 %v4825
        %4877 = vmatpush1.msra.mxu0 %v4824
        %4878 = vmatprep.subr.mxu0 %v4829
        %4879 = vmatpush1.msra.mxu0 %v4828
        %4880 = vmatprep.subr.mxu0 %v4833
        %4881 = vmatpush1.msra.mxu0 %v4832
        %4882 = vmatprep.subr.mxu0 0.0
        %4883 = vmatpush1.msra.mxu0 0.0
        %4884 = vmatprep.subr.mxu0 0.0
        %4885 = vmatpush1.msra.mxu0 0.0
        %4886 = vmatprep.subr.mxu0 0.0
        %4887 = vmatpush1.msra.mxu0 0.0
        %4888 = vmatprep.subr.mxu0 0.0
        %4889 = vmatpush1.msra.mxu0 0.0
        %4890 = vmatprep.subr.mxu0 0.0
        %4891 = vmatpush1.msra.mxu0 0.0
        %4892 = vmatprep.subr.mxu0 0.0
        %4893 = vmatpush1.msra.mxu0 0.0
        %4894 = vmatprep.subr.mxu0 0.0
        %4895 = vmatpush1.msra.mxu0 0.0
        %4896 = vmatprep.subr.mxu0 0.0
        %4897 = vmatpush1.msra.mxu0 0.0
        %4898 = vmatprep.subr.mxu0 0.0
        %4899 = vmatpush1.msra.mxu0 0.0
        %4900 = vmatprep.subr.mxu0 0.0
        %4901 = vmatpush1.msra.mxu0 0.0
        %4902 = vmatprep.subr.mxu0 0.0
        %4903 = vmatpush1.msra.mxu0 0.0
        %4904 = vmatprep.subr.mxu0 0.0
        %4905 = vmatpush1.msra.mxu0 0.0
        %4906 = vmatprep.mubr.f32.mxu0 %v4837
        %4907 = vmatmul.mubr.f32.gmra.mrb[0].mxu0 %v4752
        %v4908 = vpop.f32.mrb[0].mxu0
        %v4909 = vadd.f32 0.0, %v4908
        %v4910 = vpop.f32.mrb[0].mxu0
        %v4911 = vadd.f32 0.0, %v4910
        %4912 = vmatprep.mubr.f32.mxu0 %v4840
        %4913 = vmatmul.mubr.f32.gmra.mrb[0].mxu0 %v4754
        %v4914 = vpop.f32.mrb[0].mxu0
        %v4915 = vadd.f32 0.0, %v4914
        %v4916 = vpop.f32.mrb[0].mxu0
        %v4917 = vadd.f32 0.0, %v4916
        %4918 = vdwg.mxu0
        %4919 = vmatprep.subr.mxu0 %v4759
        %4920 = vmatpush1.msra.mxu0 %v4758
        %4921 = vmatprep.subr.mxu0 %v4763
        %4922 = vmatpush1.msra.mxu0 %v4762
        %4923 = vmatprep.subr.mxu0 %v4767
        %4924 = vmatpush1.msra.mxu0 %v4766
        %4925 = vmatprep.subr.mxu0 %v4771
        %4926 = vmatpush1.msra.mxu0 %v4770
        %4927 = vmatprep.subr.mxu0 %v4775
        %4928 = vmatpush1.msra.mxu0 %v4774
        %4929 = vmatprep.subr.mxu0 %v4779
        %4930 = vmatpush1.msra.mxu0 %v4778
        %4931 = vmatprep.subr.mxu0 %v4783
        %4932 = vmatpush1.msra.mxu0 %v4782
        %4933 = vmatprep.subr.mxu0 %v4787
        %4934 = vmatpush1.msra.mxu0 %v4786
        %4935 = vmatprep.subr.mxu0 %v4791
        %4936 = vmatpush1.msra.mxu0 %v4790
        %4937 = vmatprep.subr.mxu0 %v4795
        %4938 = vmatpush1.msra.mxu0 %v4794
        %4939 = vmatprep.subr.mxu0 %v4799
        %4940 = vmatpush1.msra.mxu0 %v4798
        %4941 = vmatprep.subr.mxu0 %v4803
        %4942 = vmatpush1.msra.mxu0 %v4802
        %4943 = vmatprep.subr.mxu0 %v4807
        %4944 = vmatpush1.msra.mxu0 %v4806
        %4945 = vmatprep.subr.mxu0 %v4811
        %4946 = vmatpush1.msra.mxu0 %v4810
        %4947 = vmatprep.subr.mxu0 %v4815
        %4948 = vmatpush1.msra.mxu0 %v4814
        %4949 = vmatprep.subr.mxu0 %v4819
        %4950 = vmatpush1.msra.mxu0 %v4818
        %4951 = vmatprep.subr.mxu0 %v4823
        %4952 = vmatpush1.msra.mxu0 %v4822
        %4953 = vmatprep.subr.mxu0 %v4827
        %4954 = vmatpush1.msra.mxu0 %v4826
        %4955 = vmatprep.subr.mxu0 %v4831
        %4956 = vmatpush1.msra.mxu0 %v4830
        %4957 = vmatprep.subr.mxu0 %v4835
        %4958 = vmatpush1.msra.mxu0 %v4834
        %4959 = vmatprep.subr.mxu0 0.0
        %4960 = vmatpush1.msra.mxu0 0.0
        %4961 = vmatprep.subr.mxu0 0.0
        %4962 = vmatpush1.msra.mxu0 0.0
        %4963 = vmatprep.subr.mxu0 0.0
        %4964 = vmatpush1.msra.mxu0 0.0
        %4965 = vmatprep.subr.mxu0 0.0
        %4966 = vmatpush1.msra.mxu0 0.0
        %4967 = vmatprep.subr.mxu0 0.0
        %4968 = vmatpush1.msra.mxu0 0.0
        %4969 = vmatprep.subr.mxu0 0.0
        %4970 = vmatpush1.msra.mxu0 0.0
        %4971 = vmatprep.subr.mxu0 0.0
        %4972 = vmatpush1.msra.mxu0 0.0
        %4973 = vmatprep.subr.mxu0 0.0
        %4974 = vmatpush1.msra.mxu0 0.0
        %4975 = vmatprep.subr.mxu0 0.0
        %4976 = vmatpush1.msra.mxu0 0.0
        %4977 = vmatprep.subr.mxu0 0.0
        %4978 = vmatpush1.msra.mxu0 0.0
        %4979 = vmatprep.subr.mxu0 0.0
        %4980 = vmatpush1.msra.mxu0 0.0
        %4981 = vmatprep.subr.mxu0 0.0
        %4982 = vmatpush1.msra.mxu0 0.0
        %4983 = vmatprep.mubr.f32.mxu0 %v4837
        %4984 = vmatmul.mubr.f32.gmra.mrb[0].mxu0 %v4752
        %v4985 = vpop.f32.mrb[0].mxu0
        %v4986 = vadd.f32 0.0, %v4985
        %v4987 = vpop.f32.mrb[0].mxu0
        %v4988 = vadd.f32 0.0, %v4987
        %4989 = vmatprep.mubr.f32.mxu0 %v4840
        %4990 = vmatmul.mubr.f32.gmra.mrb[0].mxu0 %v4754
        %v4991 = vpop.f32.mrb[0].mxu0
        %v4992 = vadd.f32 0.0, %v4991
        %v4993 = vpop.f32.mrb[0].mxu0
        %v4994 = vadd.f32 0.0, %v4993
        %4995 = vdwg.mxu0
        %v4996 = vld [vmem:[#allocation14] sm:$0xff]
        %v4997 = vld [vmem:[#allocation14 + $0x8] sm:$0xff]
        %v4998 = vld [vmem:[#allocation14 + $0x10] sm:$0xff]
        %v4999 = vld [vmem:[#allocation14 + $0x18] sm:$0xff]
        %v5000 = vld [vmem:[#allocation14 + $0x20] sm:$0xff]
        %v5001 = vld [vmem:[#allocation14 + $0x28] sm:$0xff]
        %v5002 = vld [vmem:[#allocation14 + $0x30] sm:$0xff]
        %v5003 = vld [vmem:[#allocation14 + $0x38] sm:$0xff]
        %v5004 = vmul.f32 %v4909, %v4996
        %v5005 = vmul.f32 %v4911, %v4997
        %v5006 = vmul.f32 %v4986, %v4998
        %v5007 = vmul.f32 %v4988, %v4999
        %v5008 = vmul.f32 %v4915, %v5000
        %v5009 = vmul.f32 %v4917, %v5001
        %v5010 = vmul.f32 %v4992, %v5002
        %v5011 = vmul.f32 %v4994, %v5003
        %v5012 = vadd.f32 %v5004, %v5008
        %v5013 = vrot.slane %v5012, 4
        %v5014 = vadd.f32 %v5012, %v5013
        %v5015 = vrot.slane %v5014, 2
        %v5016 = vadd.f32 %v5014, %v5015
        %v5017 = vrot.slane %v5016, 1
        %v5018 = vadd.f32 %v5016, %v5017
        %v5019 = vadd.f32 %v5005, %v5009
        %v5020 = vrot.slane %v5019, 4
        %v5021 = vadd.f32 %v5019, %v5020
        %v5022 = vrot.slane %v5021, 2
        %v5023 = vadd.f32 %v5021, %v5022
        %v5024 = vrot.slane %v5023, 1
        %v5025 = vadd.f32 %v5023, %v5024
        %v5026 = vadd.f32 %v5006, %v5010
        %v5027 = vrot.slane %v5026, 4
        %v5028 = vadd.f32 %v5026, %v5027
        %v5029 = vrot.slane %v5028, 2
        %v5030 = vadd.f32 %v5028, %v5029
        %v5031 = vrot.slane %v5030, 1
        %v5032 = vadd.f32 %v5030, %v5031
        %vm5033 = vcmask 130048
        %v5034 = vsel %vm5033, %v5007, 0.0
        %v5035 = vsel %vm5033, %v5011, 0.0
        %v5036 = vadd.f32 %v5034, %v5035
        %v5037 = vrot.slane %v5036, 4
        %v5038 = vadd.f32 %v5036, %v5037
        %v5039 = vrot.slane %v5038, 2
        %v5040 = vadd.f32 %v5038, %v5039
        %v5041 = vrot.slane %v5040, 1
        %v5042 = vadd.f32 %v5040, %v5041
        %v5043 = vld [vmem:[%s7] sm:$0xff]
        %v5044 = vld [vmem:[%s7 + $0x8] sm:$0xff]
        %v5045 = vld [vmem:[%s7 + $0x10] sm:$0xff]
        %v5046 = vld [vmem:[%s7 + $0x18] sm:$0xff]
        %v5047 = vld [vmem:[%s7 + $0x20] sm:$0xff]
        %v5048 = vld [vmem:[%s7 + $0x28] sm:$0xff]
        %v5049 = vld [vmem:[%s7 + $0x30] sm:$0xff]
        %v5050 = vld [vmem:[%s7 + $0x38] sm:$0xff]
        %v5051 = vld [vmem:[%s7 + $0x40] sm:$0xff]
        %v5052 = vld [vmem:[%s7 + $0x48] sm:$0xff]
        %v5053 = vld [vmem:[%s7 + $0x50] sm:$0xff]
        %v5054 = vld [vmem:[%s7 + $0x58] sm:$0xff]
        %v5055 = vld [vmem:[%s7 + $0x60] sm:$0xff]
        %v5056 = vld [vmem:[%s7 + $0x68] sm:$0xff]
        %v5057 = vld [vmem:[%s7 + $0x70] sm:$0xff]
        %v5058 = vld [vmem:[%s7 + $0x78] sm:$0xff]
        %v5059 = vld [vmem:[%s7 + $0x80] sm:$0xff]
        %v5060 = vld [vmem:[%s7 + $0x88] sm:$0xff]
        %v5061 = vld [vmem:[%s7 + $0x90] sm:$0xff]
        %v5062 = vld [vmem:[%s7 + $0x98] sm:$0xff]
        %v5063 = vld [vmem:[%s7 + $0xa0] sm:$0xff]
        %v5064 = vld [vmem:[%s7 + $0xa8] sm:$0xff]
        %v5065 = vld [vmem:[%s7 + $0xb0] sm:$0xff]
        %v5066 = vld [vmem:[%s7 + $0xb8] sm:$0xff]
        %v5067 = vld [vmem:[%s7 + $0xc0] sm:$0xff]
        %v5068 = vld [vmem:[%s7 + $0xc8] sm:$0xff]
        %v5069 = vld [vmem:[%s7 + $0xd0] sm:$0xff]
        %v5070 = vld [vmem:[%s7 + $0xd8] sm:$0xff]
        %v5071 = vld [vmem:[%s7 + $0xe0] sm:$0xff]
        %v5072 = vld [vmem:[%s7 + $0xe8] sm:$0xff]
        %v5073 = vld [vmem:[%s7 + $0xf0] sm:$0xff]
        %v5074 = vld [vmem:[%s7 + $0xf8] sm:$0xff]
        %v5075 = vld [vmem:[%s7 + $0x100] sm:$0xff]
        %v5076 = vld [vmem:[%s7 + $0x108] sm:$0xff]
        %v5077 = vld [vmem:[%s7 + $0x110] sm:$0xff]
        %v5078 = vld [vmem:[%s7 + $0x118] sm:$0xff]
        %v5079 = vld [vmem:[%s7 + $0x120] sm:$0xff]
        %v5080 = vld [vmem:[%s7 + $0x128] sm:$0xff]
        %v5081 = vld [vmem:[%s7 + $0x130] sm:$0xff]
        %v5082 = vld [vmem:[%s7 + $0x138] sm:$0xff]
        %v5083 = vld [vmem:[%s7 + $0x140] sm:$0xff]
        %v5084 = vld [vmem:[%s7 + $0x148] sm:$0xff]
        %v5085 = vld [vmem:[%s7 + $0x150] sm:$0xff]
        %v5086 = vld [vmem:[%s7 + $0x158] sm:$0xff]
        %v5087 = vld [vmem:[%s7 + $0x160] sm:$0xff]
        %v5088 = vld [vmem:[%s7 + $0x168] sm:$0xff]
        %v5089 = vld [vmem:[%s7 + $0x170] sm:$0xff]
        %v5090 = vld [vmem:[%s7 + $0x178] sm:$0xff]
        %v5091 = vld [vmem:[%s7 + $0x180] sm:$0xff]
        %v5092 = vld [vmem:[%s7 + $0x188] sm:$0xff]
        %v5093 = vld [vmem:[#allocation15] sm:$0x1]
        %v5095 = vsel %vm5033, %v5042, 0
        %5097 = vmatprep.subr.mxu0 0.0
        %5098 = vmatpush1.msra.mxu0 %v5043
        %5099 = vmatprep.subr.mxu0 0.0
        %5100 = vmatpush1.msra.mxu0 %v5044
        %5101 = vmatprep.subr.mxu0 0.0
        %5102 = vmatpush1.msra.mxu0 %v5045
        %5103 = vmatprep.subr.mxu0 0.0
        %5104 = vmatpush1.msra.mxu0 %v5046
        %5105 = vmatprep.subr.mxu0 0.0
        %5106 = vmatpush1.msra.mxu0 %v5047
        %5107 = vmatprep.subr.mxu0 0.0
        %5108 = vmatpush1.msra.mxu0 %v5048
        %5109 = vmatprep.subr.mxu0 0.0
        %5110 = vmatpush1.msra.mxu0 %v5049
        %5111 = vmatprep.subr.mxu0 0.0
        %5112 = vmatpush1.msra.mxu0 %v5050
        %5113 = vmatprep.subr.mxu0 0.0
        %5114 = vmatpush1.msra.mxu0 %v5051
        %5115 = vmatprep.subr.mxu0 0.0
        %5116 = vmatpush1.msra.mxu0 %v5052
        %5117 = vmatprep.subr.mxu0 0.0
        %5118 = vmatpush1.msra.mxu0 %v5053
        %5119 = vmatprep.subr.mxu0 0.0
        %5120 = vmatpush1.msra.mxu0 %v5054
        %5121 = vmatprep.subr.mxu0 0.0
        %5122 = vmatpush1.msra.mxu0 %v5055
        %5123 = vmatprep.subr.mxu0 0.0
        %5124 = vmatpush1.msra.mxu0 %v5056
        %5125 = vmatprep.subr.mxu0 0.0
        %5126 = vmatpush1.msra.mxu0 %v5057
        %5127 = vmatprep.subr.mxu0 0.0
        %5128 = vmatpush1.msra.mxu0 %v5058
        %5129 = vmatprep.subr.mxu0 0.0
        %5130 = vmatpush1.msra.mxu0 %v5059
        %5131 = vmatprep.subr.mxu0 0.0
        %5132 = vmatpush1.msra.mxu0 %v5060
        %5133 = vmatprep.subr.mxu0 0.0
        %5134 = vmatpush1.msra.mxu0 %v5061
        %5135 = vmatprep.subr.mxu0 0.0
        %5136 = vmatpush1.msra.mxu0 %v5062
        %5137 = vmatprep.subr.mxu0 0.0
        %5138 = vmatpush1.msra.mxu0 %v5063
        %5139 = vmatprep.subr.mxu0 0.0
        %5140 = vmatpush1.msra.mxu0 %v5064
        %5141 = vmatprep.subr.mxu0 0.0
        %5142 = vmatpush1.msra.mxu0 %v5065
        %5143 = vmatprep.subr.mxu0 0.0
        %5144 = vmatpush1.msra.mxu0 %v5066
        %5145 = vmatprep.subr.mxu0 0.0
        %5146 = vmatpush1.msra.mxu0 %v5067
        %5147 = vmatprep.subr.mxu0 0.0
        %5148 = vmatpush1.msra.mxu0 %v5068
        %5149 = vmatprep.subr.mxu0 0.0
        %5150 = vmatpush1.msra.mxu0 %v5069
        %5151 = vmatprep.subr.mxu0 0.0
        %5152 = vmatpush1.msra.mxu0 %v5070
        %5153 = vmatprep.subr.mxu0 0.0
        %5154 = vmatpush1.msra.mxu0 %v5071
        %5155 = vmatprep.subr.mxu0 0.0
        %5156 = vmatpush1.msra.mxu0 %v5072
        %5157 = vmatprep.subr.mxu0 0.0
        %5158 = vmatpush1.msra.mxu0 %v5073
        %5159 = vmatprep.subr.mxu0 0.0
        %5160 = vmatpush1.msra.mxu0 %v5074
        %5161 = vmatprep.mubr.f32.mxu0 %v5025
        %5162 = vmatmul.mubr.f32.gmra.mrb[0].mxu0 %v5018
        %v5163 = vpop.f32.mrb[0].mxu0
        %v5164 = vadd.f32 %v5093, %v5163
        %v5165 = vpop.f32.mrb[0].mxu0
        %5166 = vdwg.mxu0
        %5167 = vmatprep.subr.mxu0 0.0
        %5168 = vmatpush1.msra.mxu0 %v5075
        %5169 = vmatprep.subr.mxu0 0.0
        %5170 = vmatpush1.msra.mxu0 %v5076
        %5171 = vmatprep.subr.mxu0 0.0
        %5172 = vmatpush1.msra.mxu0 %v5077
        %5173 = vmatprep.subr.mxu0 0.0
        %5174 = vmatpush1.msra.mxu0 %v5078
        %5175 = vmatprep.subr.mxu0 0.0
        %5176 = vmatpush1.msra.mxu0 %v5079
        %5177 = vmatprep.subr.mxu0 0.0
        %5178 = vmatpush1.msra.mxu0 %v5080
        %5179 = vmatprep.subr.mxu0 0.0
        %5180 = vmatpush1.msra.mxu0 %v5081
        %5181 = vmatprep.subr.mxu0 0.0
        %5182 = vmatpush1.msra.mxu0 %v5082
        %5183 = vmatprep.subr.mxu0 0.0
        %5184 = vmatpush1.msra.mxu0 %v5083
        %5185 = vmatprep.subr.mxu0 0.0
        %5186 = vmatpush1.msra.mxu0 %v5084
        %5187 = vmatprep.subr.mxu0 0.0
        %5188 = vmatpush1.msra.mxu0 %v5085
        %5189 = vmatprep.subr.mxu0 0.0
        %5190 = vmatpush1.msra.mxu0 %v5086
        %5191 = vmatprep.subr.mxu0 0.0
        %5192 = vmatpush1.msra.mxu0 %v5087
        %5193 = vmatprep.subr.mxu0 0.0
        %5194 = vmatpush1.msra.mxu0 %v5088
        %5195 = vmatprep.subr.mxu0 0.0
        %5196 = vmatpush1.msra.mxu0 %v5089
        %5197 = vmatprep.subr.mxu0 0.0
        %5198 = vmatpush1.msra.mxu0 %v5090
        %5199 = vmatprep.subr.mxu0 0.0
        %5200 = vmatpush1.msra.mxu0 %v5091
        %5201 = vmatprep.subr.mxu0 0.0
        %5202 = vmatpush1.msra.mxu0 %v5092
        %5203 = vmatprep.subr.mxu0 0.0
        %5204 = vmatpush1.msra.mxu0 0.0
        %5205 = vmatprep.subr.mxu0 0.0
        %5206 = vmatpush1.msra.mxu0 0.0
        %5207 = vmatprep.subr.mxu0 0.0
        %5208 = vmatpush1.msra.mxu0 0.0
        %5209 = vmatprep.subr.mxu0 0.0
        %5210 = vmatpush1.msra.mxu0 0.0
        %5211 = vmatprep.subr.mxu0 0.0
        %5212 = vmatpush1.msra.mxu0 0.0
        %5213 = vmatprep.subr.mxu0 0.0
        %5214 = vmatpush1.msra.mxu0 0.0
        %5215 = vmatprep.subr.mxu0 0.0
        %5216 = vmatpush1.msra.mxu0 0.0
        %5217 = vmatprep.subr.mxu0 0.0
        %5218 = vmatpush1.msra.mxu0 0.0
        %5219 = vmatprep.subr.mxu0 0.0
        %5220 = vmatpush1.msra.mxu0 0.0
        %5221 = vmatprep.subr.mxu0 0.0
        %5222 = vmatpush1.msra.mxu0 0.0
        %5223 = vmatprep.subr.mxu0 0.0
        %5224 = vmatpush1.msra.mxu0 0.0
        %5225 = vmatprep.subr.mxu0 0.0
        %5226 = vmatpush1.msra.mxu0 0.0
        %5227 = vmatprep.subr.mxu0 0.0
        %5228 = vmatpush1.msra.mxu0 0.0
        %5229 = vmatprep.subr.mxu0 0.0
        %5230 = vmatpush1.msra.mxu0 0.0
        %5231 = vmatprep.mubr.f32.mxu0 %v5095
        %5232 = vmatmul.mubr.f32.gmra.mrb[0].mxu0 %v5032
        %v5233 = vpop.f32.mrb[0].mxu0
        %v5234 = vadd.f32 %v5164, %v5233
        %v5235 = vpop.f32.mrb[0].mxu0
        %5236 = vdwg.mxu0
        %v5237 = vmax.f32 %v5234, 0.0
        %v5238 = vld [vmem:[%s9] sm:$0xff]
        %v5239 = vld [vmem:[%s9 + $0x8] sm:$0xff]
        %v5240 = vld [vmem:[%s9 + $0x10] sm:$0xff]
        %v5241 = vld [vmem:[%s9 + $0x18] sm:$0xff]
        %v5242 = vld [vmem:[%s9 + $0x20] sm:$0xff]
        %v5243 = vld [vmem:[%s9 + $0x28] sm:$0xff]
        %v5244 = vld [vmem:[%s9 + $0x30] sm:$0xff]
        %v5245 = vld [vmem:[%s9 + $0x38] sm:$0xff]
        %v5246 = vld [vmem:[%s9 + $0x40] sm:$0xff]
        %v5247 = vld [vmem:[%s9 + $0x48] sm:$0xff]
        %v5248 = vld [vmem:[%s9 + $0x50] sm:$0xff]
        %v5249 = vld [vmem:[%s9 + $0x58] sm:$0xff]
        %v5250 = vld [vmem:[%s9 + $0x60] sm:$0xff]
        %v5251 = vld [vmem:[%s9 + $0x68] sm:$0xff]
        %v5252 = vld [vmem:[%s9 + $0x70] sm:$0xff]
        %v5253 = vld [vmem:[#allocation17] sm:$0x1]
        %v5255 = vsel %vm2899, %v5237, 0
        %5257 = vmatprep.subr.mxu0 0.0
        %5258 = vmatpush1.msra.mxu0 %v5238
        %5259 = vmatprep.subr.mxu0 0.0
        %5260 = vmatpush1.msra.mxu0 %v5239
        %5261 = vmatprep.subr.mxu0 0.0
        %5262 = vmatpush1.msra.mxu0 %v5240
        %5263 = vmatprep.subr.mxu0 0.0
        %5264 = vmatpush1.msra.mxu0 %v5241
        %5265 = vmatprep.subr.mxu0 0.0
        %5266 = vmatpush1.msra.mxu0 %v5242
        %5267 = vmatprep.subr.mxu0 0.0
        %5268 = vmatpush1.msra.mxu0 %v5243
        %5269 = vmatprep.subr.mxu0 0.0
        %5270 = vmatpush1.msra.mxu0 %v5244
        %5271 = vmatprep.subr.mxu0 0.0
        %5272 = vmatpush1.msra.mxu0 %v5245
        %5273 = vmatprep.subr.mxu0 0.0
        %5274 = vmatpush1.msra.mxu0 %v5246
        %5275 = vmatprep.subr.mxu0 0.0
        %5276 = vmatpush1.msra.mxu0 %v5247
        %5277 = vmatprep.subr.mxu0 0.0
        %5278 = vmatpush1.msra.mxu0 %v5248
        %5279 = vmatprep.subr.mxu0 0.0
        %5280 = vmatpush1.msra.mxu0 %v5249
        %5281 = vmatprep.subr.mxu0 0.0
        %5282 = vmatpush1.msra.mxu0 %v5250
        %5283 = vmatprep.subr.mxu0 0.0
        %5284 = vmatpush1.msra.mxu0 %v5251
        %5285 = vmatprep.subr.mxu0 0.0
        %5286 = vmatpush1.msra.mxu0 %v5252
        %5287 = vmatprep.subr.mxu0 0.0
        %5288 = vmatpush1.msra.mxu0 0.0
        %5289 = vmatprep.subr.mxu0 0.0
        %5290 = vmatpush1.msra.mxu0 0.0
        %5291 = vmatprep.subr.mxu0 0.0
        %5292 = vmatpush1.msra.mxu0 0.0
        %5293 = vmatprep.subr.mxu0 0.0
        %5294 = vmatpush1.msra.mxu0 0.0
        %5295 = vmatprep.subr.mxu0 0.0
        %5296 = vmatpush1.msra.mxu0 0.0
        %5297 = vmatprep.subr.mxu0 0.0
        %5298 = vmatpush1.msra.mxu0 0.0
        %5299 = vmatprep.subr.mxu0 0.0
        %5300 = vmatpush1.msra.mxu0 0.0
        %5301 = vmatprep.subr.mxu0 0.0
        %5302 = vmatpush1.msra.mxu0 0.0
        %5303 = vmatprep.subr.mxu0 0.0
        %5304 = vmatpush1.msra.mxu0 0.0
        %5305 = vmatprep.subr.mxu0 0.0
        %5306 = vmatpush1.msra.mxu0 0.0
        %5307 = vmatprep.subr.mxu0 0.0
        %5308 = vmatpush1.msra.mxu0 0.0
        %5309 = vmatprep.subr.mxu0 0.0
        %5310 = vmatpush1.msra.mxu0 0.0
        %5311 = vmatprep.subr.mxu0 0.0
        %5312 = vmatpush1.msra.mxu0 0.0
        %5313 = vmatprep.subr.mxu0 0.0
        %5314 = vmatpush1.msra.mxu0 0.0
        %5315 = vmatprep.subr.mxu0 0.0
        %5316 = vmatpush1.msra.mxu0 0.0
        %5317 = vmatprep.subr.mxu0 0.0
        %5318 = vmatpush1.msra.mxu0 0.0
        %5319 = vmatprep.subr.mxu0 0.0
        %5320 = vmatpush1.msra.mxu0 0.0
        %5321 = vmatprep.mubr.f32.mxu0 0.0
        %5322 = vmatmul.mubr.f32.gmra.mrb[0].mxu0 %v5255
        %v5323 = vpop.f32.mrb[0].mxu0
        %v5324 = vadd.f32 %v5253, %v5323
        %v5325 = vpop.f32.mrb[0].mxu0
        %5326 = vdwg.mxu0
        %v5327 = vmax.f32 %v5324, 0.0
        %v5328 = vld [vmem:[#allocation18] sm:$0xff]
        %v5329 = vld [vmem:[#allocation18 + $0x8] sm:$0xff]
        %v5330 = vld [vmem:[#allocation18 + $0x10] sm:$0xff]
        %v5331 = vld [vmem:[#allocation18 + $0x18] sm:$0xff]
        %v5332 = vld [vmem:[#allocation18 + $0x20] sm:$0xff]
        %v5333 = vld [vmem:[#allocation18 + $0x28] sm:$0xff]
        %v5334 = vld [vmem:[#allocation18 + $0x30] sm:$0xff]
        %v5335 = vld [vmem:[#allocation18 + $0x38] sm:$0xff]
        %v5336 = vld [vmem:[#allocation18 + $0x40] sm:$0xff]
        %v5337 = vld [vmem:[#allocation18 + $0x48] sm:$0xff]
        %v5338 = vld [vmem:[#allocation18 + $0x50] sm:$0xf]
        %v5339 = vld [vmem:[#allocation20] sm:$0x1]
        %vm5340 = vcmask 687104
        %v5342 = vsel %vm5340, %v5327, 0
        %vm5344 = vcmask 1043456
        %v5346 = vsel %vm5344, %v5338, 0
        %5348 = vmatprep.subr.mxu0 0.0
        %5349 = vmatpush1.msra.mxu0 %v5328
        %5350 = vmatprep.subr.mxu0 0.0
        %5351 = vmatpush1.msra.mxu0 %v5329
        %5352 = vmatprep.subr.mxu0 0.0
        %5353 = vmatpush1.msra.mxu0 %v5330
        %5354 = vmatprep.subr.mxu0 0.0
        %5355 = vmatpush1.msra.mxu0 %v5331
        %5356 = vmatprep.subr.mxu0 0.0
        %5357 = vmatpush1.msra.mxu0 %v5332
        %5358 = vmatprep.subr.mxu0 0.0
        %5359 = vmatpush1.msra.mxu0 %v5333
        %5360 = vmatprep.subr.mxu0 0.0
        %5361 = vmatpush1.msra.mxu0 %v5334
        %5362 = vmatprep.subr.mxu0 0.0
        %5363 = vmatpush1.msra.mxu0 %v5335
        %5364 = vmatprep.subr.mxu0 0.0
        %5365 = vmatpush1.msra.mxu0 %v5336
        %5366 = vmatprep.subr.mxu0 0.0
        %5367 = vmatpush1.msra.mxu0 %v5337
        %5368 = vmatprep.subr.mxu0 0.0
        %5369 = vmatpush1.msra.mxu0 %v5346
        %5370 = vmatprep.subr.mxu0 0.0
        %5371 = vmatpush1.msra.mxu0 0.0
        %5372 = vmatprep.subr.mxu0 0.0
        %5373 = vmatpush1.msra.mxu0 0.0
        %5374 = vmatprep.subr.mxu0 0.0
        %5375 = vmatpush1.msra.mxu0 0.0
        %5376 = vmatprep.subr.mxu0 0.0
        %5377 = vmatpush1.msra.mxu0 0.0
        %5378 = vmatprep.subr.mxu0 0.0
        %5379 = vmatpush1.msra.mxu0 0.0
        %5380 = vmatprep.subr.mxu0 0.0
        %5381 = vmatpush1.msra.mxu0 0.0
        %5382 = vmatprep.subr.mxu0 0.0
        %5383 = vmatpush1.msra.mxu0 0.0
        %5384 = vmatprep.subr.mxu0 0.0
        %5385 = vmatpush1.msra.mxu0 0.0
        %5386 = vmatprep.subr.mxu0 0.0
        %5387 = vmatpush1.msra.mxu0 0.0
        %5388 = vmatprep.subr.mxu0 0.0
        %5389 = vmatpush1.msra.mxu0 0.0
        %5390 = vmatprep.subr.mxu0 0.0
        %5391 = vmatpush1.msra.mxu0 0.0
        %5392 = vmatprep.subr.mxu0 0.0
        %5393 = vmatpush1.msra.mxu0 0.0
        %5394 = vmatprep.subr.mxu0 0.0
        %5395 = vmatpush1.msra.mxu0 0.0
        %5396 = vmatprep.subr.mxu0 0.0
        %5397 = vmatpush1.msra.mxu0 0.0
        %5398 = vmatprep.subr.mxu0 0.0
        %5399 = vmatpush1.msra.mxu0 0.0
        %5400 = vmatprep.subr.mxu0 0.0
        %5401 = vmatpush1.msra.mxu0 0.0
        %5402 = vmatprep.subr.mxu0 0.0
        %5403 = vmatpush1.msra.mxu0 0.0
        %5404 = vmatprep.subr.mxu0 0.0
        %5405 = vmatpush1.msra.mxu0 0.0
        %5406 = vmatprep.subr.mxu0 0.0
        %5407 = vmatpush1.msra.mxu0 0.0
        %5408 = vmatprep.subr.mxu0 0.0
        %5409 = vmatpush1.msra.mxu0 0.0
        %5410 = vmatprep.subr.mxu0 0.0
        %5411 = vmatpush1.msra.mxu0 0.0
        %5412 = vmatprep.mubr.f32.mxu0 0.0
        %5413 = vmatmul.mubr.f32.gmra.mrb[0].mxu0 %v5342
        %v5414 = vpop.f32.mrb[0].mxu0
        %v5415 = vadd.f32 %v5339, %v5414
        %v5416 = vpop.f32.mrb[0].mxu0
        %5417 = vdwg.mxu0
        %vm5418 = vcmask 1040384
        %v5419 = vsel %vm5418, %v5415, -inf
        %5420 = vmax.xlane.f32.xlu0 %v5419
        %v5421 = vpop.xlane.xlu0 %5420
        %v5422 = vsub.f32 %v5415, %v5421
        %v5423 = vmul.f32 %v5422, 1.442695
        %v5424 = vpow.pop %v5423
        %v5425 = vsel %vm5418, %v5424, 0.0
        %5426 = vadd.xlane.f32.xlu0 %v5425
        %v5427 = vpop.xlane.xlu0 %5426
        %v5428 = vlog2.pop %v5427
        %v5429 = vmul.f32 %v5428, 0.6931472
        %v5430 = vsub.f32 %v5422, %v5429
        %5431 = vst [vmem:[%s526] sm:$0x1] %v5430
        %s5432 = sand.u32 %s317, 1
        %s5433 = scalar_lea.sflag [#allocation11], %s5432
        %s5434 = sand.u32 %s317, 1
        %s5435 = scalar_lea.vmem [#allocation21], %s5434
        // Predicated region
        $region101: #{cnn_cifar_forward.1} parent=71 // pred_check
          %p5436 = pneg %p327
        $region102: #{cnn_cifar_forward.1} parent=71 // pred_check_branch
          %5438 = sbr.rel (%p5436) target = $region104
        $region103: #{cnn_cifar_forward.1} parent=71 // pred_region
          %s5440 = ssub.s32 16, 16
          %5441 = vsyncadd %s5433, %s5440
          %s5442 = smul.addr %s31, 16
          %s5443 = scalar_lea.hbm %s13, %s5442
          %s5445 = sshll.u32 %s5435, 4
          %s5446 = int_to_ptr.vmem [resolvable:$true] %s5445
          %5448 = dma.vmem_to_hbm [thread:$0]  %s5446, 16, %s5443, %s5433
        $region104: #{cnn_cifar_forward.1} parent=71 // pred_fallthru
          _
      $region72: #{cnn_cifar_forward.1} parent=5 // pred_fallthru
        _
      %p5449 = scmp.le.s32.totalorder 2, %s26
      // Predicated region
      $region105: #{cnn_cifar_forward.1} parent=5 // pred_check
        %p5450 = pneg %p5449
      $region106: #{cnn_cifar_forward.1} parent=5 // pred_check_branch
        %5452 = sbr.rel (%p5450) target = $region108
      $region107: #{cnn_cifar_forward.1} parent=5 // pred_region
        %s5453 = ssub.s32 %s26, 2
        // Predicated region
        $region109: #{cnn_cifar_forward.1} parent=107 // pred_check
          %p5454 = pneg %p333
        $region110: #{cnn_cifar_forward.1} parent=107 // pred_check_branch
          %5456 = sbr.rel (%p5454) target = $region112
        $region111: #{cnn_cifar_forward.1} parent=107 // pred_region
          %s5457 = sand.u32 %s318, 1
          %s5458 = scalar_lea.sflag [#allocation11], %s5457
          %s5459 = sand.u32 %s318, 1
          %s5460 = scalar_lea.vmem [#allocation21], %s5459
          %5461 = dma.done %s5458, 16
        $region112: #{cnn_cifar_forward.1} parent=107 // pred_fallthru
          _
      $region108: #{cnn_cifar_forward.1} parent=5 // pred_fallthru
        _
    $region6: #{cnn_cifar_forward.1} parent=1 // loop_footer
      %s30 = sadd.s32 1, %s26
    $region7: #{cnn_cifar_forward.1} parent=1 // loop_footer_branch
      %25 = sbr.rel target = $region3
    $region8: #{cnn_cifar_forward.1} parent=1 // loop_exit
      _
    %5462 = vsyncpa [#allocation10], 1
    %s5463 = scalar_lea.sflag [#allocation10], 1
    %5464 = vsyncpa %s5463, 1
    %5465 = vsyncpa [#allocation13], 1
    %5466 = vsyncpa [#allocation16], 1
    %5467 = vsyncpa [#allocation19], 1
    %5468 = vsyncpa [#allocation11], 1
    %s5469 = scalar_lea.sflag [#allocation11], 1
    %5470 = vsyncpa %s5469, 1

</llo_original>
